<compile_context>
chip_gen: v7x
topology: tpu7x:2x2x1
jax: 0.10.0
libtpu: 0.0.40
codegen_flags: <defaults>
</compile_context>

<pallas_src>
import functools

import jax
import jax.numpy as jnp
from jax.experimental import pallas as pl
from jax.experimental.pallas import tpu as pltpu


# --------------------------------------------------------------------------
# hardware-aware defaults
# --------------------------------------------------------------------------
def _default_vmem_limit():
    # Generation-aware scoped-VMEM budget: ~3/4 of physical VMEM
    # (v5e/v6e: 128 MiB -> 96 MiB, v7x: 64 MiB -> 48 MiB), conservative fallback.
    try:
        cap = getattr(pltpu.get_tpu_info(), "vmem_capacity_bytes", None)
        if cap:
            return int(min(cap * 3 // 4, 96 * 1024 * 1024))
    except Exception:
        pass
    return 48 * 1024 * 1024


_VMEM_LIMIT = _default_vmem_limit()


def _pick_tile(dim, target, granules):
    """Largest tile <= target that divides `dim` and is a multiple of one of the
    preferred granules (tried in order); falls back to the full dim (always legal)."""
    if dim <= target:
        return dim
    for g in granules:
        t = (target // g) * g
        while t >= g:
            if dim % t == 0:
                return t
            t -= g
    return dim


def _gelu(x):
    # Erf-GELU via the Abramowitz & Stegun 7.1.26 polynomial (|err| < 1.5e-7); the
    # single divide uses the EUP approximate reciprocal (error far below the bf16
    # activation noise downstream), so the epilogue stays off the VALU critical path.
    z = x * 0.7071067811865476
    az = jnp.abs(z)
    t = pl.reciprocal(1.0 + 0.3275911 * az, approx=True)
    poly = ((((1.061405429 * t - 1.453152027) * t + 1.421413741) * t
             - 0.284496736) * t + 0.254829592) * t
    erf = 1.0 - poly * jnp.exp(-az * az)
    erf = jnp.where(z < 0.0, -erf, erf)
    return 0.5 * x * (1.0 + erf)


# --------------------------------------------------------------------------
# Fused linear kernels
# --------------------------------------------------------------------------
def _linear_single_k_kernel(has_ln, epilogue, has_res, ln_eps=1e-6):
    def kernel(*refs):
        it = iter(refs)
        x_ref, w_ref, b_ref = next(it), next(it), next(it)
        g_ref = be_ref = r_ref = xc_ref = None
        if has_ln:
            g_ref, be_ref = next(it), next(it)
        if has_res:
            r_ref = next(it)
        o_ref = next(it)

        if has_ln:
            xc_ref = next(it)

            @pl.when(pl.program_id(1) == 0)
            def _():
                # LayerNorm over the full K row, computed once per M tile and cached
                # in VMEM (bf16) so it is NOT recomputed for every output-N tile.
                x = x_ref[...].astype(jnp.float32)
                mu = jnp.mean(x, axis=-1, keepdims=True)
                xm = x - mu
                var = jnp.mean(xm * xm, axis=-1, keepdims=True)
                xn = xm * jax.lax.rsqrt(var + ln_eps) * g_ref[...] + be_ref[...]
                xc_ref[...] = xn.astype(jnp.bfloat16)

            xb = xc_ref[...]
        else:
            xb = x_ref[...].astype(jnp.bfloat16)   # identity when x is already bf16

        y = jnp.dot(xb, w_ref[...], preferred_element_type=jnp.float32) + b_ref[...]
        if epilogue == "gelu":
            y = _gelu(y)
        elif epilogue == "relu":
            y = jnp.maximum(y, 0.0)
        if has_res:
            y = y + r_ref[...].astype(jnp.float32)
        o_ref[...] = y.astype(o_ref.dtype)

    return kernel


def _linear_multi_k_kernel(epilogue, has_res):
    def kernel(*refs):
        it = iter(refs)
        x_ref, w_ref, b_ref = next(it), next(it), next(it)
        r_ref = next(it) if has_res else None
        o_ref = next(it)
        acc_ref = next(it)
        k = pl.program_id(2)

        @pl.when(k == 0)
        def _():
            acc_ref[...] = jnp.zeros_like(acc_ref)

        acc_ref[...] += jnp.dot(x_ref[...].astype(jnp.bfloat16), w_ref[...],
                                preferred_element_type=jnp.float32)

        @pl.when(k == pl.num_programs(2) - 1)
        def _():
            y = acc_ref[...] + b_ref[...]
            if epilogue == "gelu":
                y = _gelu(y)
            elif epilogue == "relu":
                y = jnp.maximum(y, 0.0)
            if has_res:
                y = y + r_ref[...].astype(jnp.float32)
            o_ref[...] = y.astype(o_ref.dtype)

    return kernel


def fused_linear(x, w, b, *, ln=None, epilogue=None, residual=None,
                 out_dtype=jnp.float32,
                 tm_target=512, tn_target=512, tk_target=1024):
    """out = epilogue(LN(x) @ w + b) [+ residual]

    x:(M,K) f32/bf16, w:(K,N) bf16 (pre-cast at parameter build time), b:(N,) f32.
    ln=(gamma, beta) fuses a LayerNorm over K as the matmul prologue (forces a single
    K step; the normalized bf16 tile is cached in VMEM and reused across output tiles).
    epilogue: None | 'gelu' | 'relu'.   residual:(M,N) f32 added last.
    """
    M, K = x.shape
    K2, N = w.shape
    assert K == K2
    if w.dtype != jnp.bfloat16:          # safety net; params are pre-cast outside jit
        w = w.astype(jnp.bfloat16)
    b2 = b.reshape(1, N).astype(jnp.float32)

    has_ln = ln is not None
    tm = M if M <= 1024 else _pick_tile(M, tm_target, (256, 128, 16, 8))
    tn = _pick_tile(N, tn_target, (256, 128))
    tk = K if has_ln else _pick_tile(K, tk_target, (256, 128))
    nk = K // tk

    args = [x, w, b2]
    if nk == 1:
        # Single K step: no f32 accumulator, write the output tile directly.
        grid = (M // tm, N // tn)
        in_specs = [pl.BlockSpec((tm, K), lambda i, j: (i, 0)),
                    pl.BlockSpec((K, tn), lambda i, j: (0, j)),
                    pl.BlockSpec((1, tn), lambda i, j: (0, j))]
        scratch = []
        if has_ln:
            in_specs += [pl.BlockSpec((1, K), lambda i, j: (0, 0)),
                         pl.BlockSpec((1, K), lambda i, j: (0, 0))]
            args += [ln[0].reshape(1, K).astype(jnp.float32),
                     ln[1].reshape(1, K).astype(jnp.float32)]
            scratch = [pltpu.VMEM((tm, K), jnp.bfloat16)]   # cached LN(x) tile
        if residual is not None:
            in_specs.append(pl.BlockSpec((tm, tn), lambda i, j: (i, j)))
            args.append(residual)
        out_specs = pl.BlockSpec((tm, tn), lambda i, j: (i, j))
        kernel = _linear_single_k_kernel(has_ln, epilogue, residual is not None)
        # j must stay sequential when the LN result is cached across output-N tiles.
        dims = ("parallel", "arbitrary") if has_ln else ("parallel", "parallel")
    else:
        grid = (M // tm, N // tn, nk)
        in_specs = [pl.BlockSpec((tm, tk), lambda i, j, k: (i, k)),
                    pl.BlockSpec((tk, tn), lambda i, j, k: (k, j)),
                    pl.BlockSpec((1, tn), lambda i, j, k: (0, j))]
        if residual is not None:
            in_specs.append(pl.BlockSpec((tm, tn), lambda i, j, k: (i, j)))
            args.append(residual)
        out_specs = pl.BlockSpec((tm, tn), lambda i, j, k: (i, j))
        scratch = [pltpu.VMEM((tm, tn), jnp.float32)]
        kernel = _linear_multi_k_kernel(epilogue, residual is not None)
        dims = ("parallel", "parallel", "arbitrary")
        # TODO(synk): add pipeline_mode=pl.Buffered(3) on the w spec if profiles show
        # exposed DMA on the weight stream for long-K matmuls.

    return pl.pallas_call(
        kernel,
        out_shape=jax.ShapeDtypeStruct((M, N), out_dtype),
        grid=grid,
        in_specs=in_specs,
        out_specs=out_specs,
        scratch_shapes=scratch,
        compiler_params=pltpu.CompilerParams(
            dimension_semantics=dims, vmem_limit_bytes=_VMEM_LIMIT),
    )(*args)


# --------------------------------------------------------------------------
# Attention kernel
# --------------------------------------------------------------------------
def _attn_heads(q, k, v, n_heads, dh, out_dtype):
    outs = []
    for h in range(n_heads):                       # static unroll over heads
        sl = slice(h * dh, (h + 1) * dh)
        qh, kh, vh = q[:, sl], k[:, sl], v[:, sl]
        # softmax scale is pre-folded into the q columns of qkv_w / qkv_b
        s = jax.lax.dot_general(qh, kh, (((1,), (1,)), ((), ())),
                                preferred_element_type=jnp.float32)
        s = s - jnp.max(s, axis=-1, keepdims=True)
        p = jnp.exp(s)
        l = jnp.sum(p, axis=-1, keepdims=True)
        o = jnp.dot(p.astype(vh.dtype), vh, preferred_element_type=jnp.float32)
        outs.append(o / l)                         # exact normalization (Np x dh divides)
    out = outs[0] if len(outs) == 1 else jnp.concatenate(outs, axis=-1)
    return out.astype(out_dtype)


def _attn_kernel_grouped(q_ref, k_ref, v_ref, o_ref, *, hp, dh):
    o_ref[...] = _attn_heads(q_ref[...], k_ref[...], v_ref[...], hp, dh, o_ref.dtype)


def _attn_kernel_slab(qkv_ref, o_ref, *, nH, dh):
    D = nH * dh
    qkv = qkv_ref[...]
    o_ref[...] = _attn_heads(qkv[:, :D], qkv[:, D:2 * D], qkv[:, 2 * D:],
                             nH, dh, o_ref.dtype)


def _heads_per_block(nH, dh):
    for hp in range(1, nH + 1):
        if nH % hp == 0 and (hp * dh) % 128 == 0:
            return hp
    return nH


def attention_pallas(qkv, *, B, Np, nH, dh, out_dtype=jnp.bfloat16):
    """qkv:(B*Np, 3D) -> (B*Np, D), heads concatenated in the PyTorch channel order.
    Heads are processed in lane-aligned groups (hp*dh a multiple of 128) on a
    (batch, head-group) parallel grid so megacore chips shard the work across both
    TensorCores and every load/store is 128-lane dense.  Tiny configs fall back to
    one whole-slab program per batch."""
    D = nH * dh
    hp = _heads_per_block(nH, dh)
    hw = hp * dh
    if (hw % 128 == 0) and (Np % 8 == 0):
        ng = nH // hp
        return pl.pallas_call(
            functools.partial(_attn_kernel_grouped, hp=hp, dh=dh),
            out_shape=jax.ShapeDtypeStruct((B * Np, D), out_dtype),
            grid=(B, ng),
            in_specs=[pl.BlockSpec((Np, hw), lambda b, g: (b, g)),
                      pl.BlockSpec((Np, hw), lambda b, g: (b, ng + g)),
                      pl.BlockSpec((Np, hw), lambda b, g: (b, 2 * ng + g))],
            out_specs=pl.BlockSpec((Np, hw), lambda b, g: (b, g)),
            compiler_params=pltpu.CompilerParams(
                dimension_semantics=("parallel", "parallel"),
                vmem_limit_bytes=_VMEM_LIMIT),
        )(qkv, qkv, qkv)
    # TODO(synk): for very long sequences switch to a flash-style (q-tile, kv-tile) grid.
    return pl.pallas_call(
        functools.partial(_attn_kernel_slab, nH=nH, dh=dh),
        out_shape=jax.ShapeDtypeStruct((B * Np, D), out_dtype),
        grid=(B,),
        in_specs=[pl.BlockSpec((Np, 3 * D), lambda b: (b, 0))],
        out_specs=pl.BlockSpec((Np, D), lambda b: (b, 0)),
        compiler_params=pltpu.CompilerParams(
            dimension_semantics=("parallel",), vmem_limit_bytes=_VMEM_LIMIT),
    )(qkv)


# --------------------------------------------------------------------------
# ConvTranspose2d(k=4, s=2, p=1) phase-combine kernel (+ folded BN + ReLU)
# --------------------------------------------------------------------------
def _deconv_phase_kernel(cols_ref, sc_ref, bi_ref, o_ref, *, Cout):
    # Output phase (py, px) at coarse pixel (m, n):
    #   py==0: kernel row 1 @ in[m]   + kernel row 3 @ in[m-1]
    #   py==1: kernel row 0 @ in[m+1] + kernel row 2 @ in[m]
    # (analogously for px along the width axis); OOB inputs contribute zero.
    taps = {0: ((1, 0), (3, -1)), 1: ((0, 1), (2, 0))}
    sc = sc_ref[...]
    bi = bi_ref[...]

    def tap(ky, kx):
        c0 = (ky * 4 + kx) * Cout
        return cols_ref[0, :, :, c0:c0 + Cout].astype(jnp.float32)

    def shift(t, axis, d):                        # shifted[i] = t[i + d], zero OOB
        if d == 0:
            return t
        zshape = list(t.shape)
        zshape[axis] = abs(d)
        z = jnp.zeros(zshape, t.dtype)
        idx = [slice(None)] * t.ndim
        if d > 0:
            idx[axis] = slice(d, None)
            return jnp.concatenate([t[tuple(idx)], z], axis=axis)
        idx[axis] = slice(None, d)
        return jnp.concatenate([z, t[tuple(idx)]], axis=axis)

    rows = []
    for py in (0, 1):
        cols_px = []
        for px in (0, 1):
            acc = None
            for ky, dy in taps[py]:
                for kx, dx in taps[px]:
                    v = shift(shift(tap(ky, kx), 0, dy), 1, dx)
                    acc = v if acc is None else acc + v
            y = jnp.maximum(acc * sc + bi, 0.0)          # folded eval-BN + ReLU
            cols_px.append(y.astype(o_ref.dtype))
        rows.append(jnp.concatenate(cols_px, axis=-1))   # (Hc, Wc, 2*Cout)
    o_ref[...] = jnp.stack(rows, axis=1)                 # (Hc, 2, Wc, 2*Cout), one dense store


def deconv_phase_combine(cols, bn_scale, bn_bias, B, Hc, Wc, out_dtype=jnp.bfloat16):
    """cols:(B*Hc*Wc, 16*Cout) with columns ordered (ky, kx, cout) -> upsampled
    channels-last rows (B*2Hc*2Wc, Cout) with folded BN + ReLU applied.  The output
    array layout (B*Hc, 2, Wc, 2*Cout) collapses contiguously to row-major
    (b, y, x, c), so the trailing reshape is free."""
    Cout = cols.shape[1] // 16
    cols4 = cols.reshape(B, Hc, Wc, 16 * Cout)
    # TODO(synk): for very large feature maps, tile Hc with a 1-row halo instead of
    # keeping the whole (Hc, Wc, 16*Cout) column block resident per batch.
    out = pl.pallas_call(
        functools.partial(_deconv_phase_kernel, Cout=Cout),
        out_shape=jax.ShapeDtypeStruct((B * Hc, 2, Wc, 2 * Cout), out_dtype),
        grid=(B,),
        in_specs=[pl.BlockSpec((1, Hc, Wc, 16 * Cout), lambda b: (b, 0, 0, 0)),
                  pl.BlockSpec((1, Cout), lambda b: (0, 0)),
                  pl.BlockSpec((1, Cout), lambda b: (0, 0))],
        out_specs=pl.BlockSpec((Hc, 2, Wc, 2 * Cout), lambda b: (b, 0, 0, 0)),
        compiler_params=pltpu.CompilerParams(
            dimension_semantics=("parallel",), vmem_limit_bytes=_VMEM_LIMIT),
    )(cols4,
      bn_scale.reshape(1, Cout).astype(jnp.float32),
      bn_bias.reshape(1, Cout).astype(jnp.float32))
    return out.reshape(B * 2 * Hc * 2 * Wc, Cout)


# --------------------------------------------------------------------------
# Parameter construction (deterministic, synthetic) + one-time inference re-layout
# --------------------------------------------------------------------------
def init_params(key, cfg):
    """Synthetic parameters in the PyTorch ViTPose layout (all f32)."""
    bcfg, hcfg = cfg["backbone"], cfg["keypoint_head"]
    C, P, D = bcfg["in_chans"], bcfg["patch_size"], bcfg["embed_dim"]
    depth = bcfg["depth"]
    mlp = int(bcfg["mlp_ratio"] * D)
    H, W = bcfg["img_size"]
    pad = 2  # ViTPose PatchEmbed: padding = 4 + 2*(ratio//2 - 1), ratio=1 -> 2
    Np = ((H + 2 * pad - P) // P + 1) * ((W + 2 * pad - P) // P + 1)

    keys = iter(jax.random.split(key, 32 + 8 * depth))
    nrm = lambda shape, s=0.02: s * jax.random.normal(next(keys), shape, jnp.float32)

    params = {
        "patch_embed": dict(w=nrm((D, C, P, P)), b=nrm((D,))),
        "pos_embed": nrm((1, Np + 1, D)),
        "last_norm_g": jnp.ones((D,), jnp.float32),
        "last_norm_b": jnp.zeros((D,), jnp.float32),
        "blocks": [dict(
            ln1_g=jnp.ones((D,), jnp.float32), ln1_b=jnp.zeros((D,), jnp.float32),
            qkv_w=nrm((D, 3 * D)), qkv_b=nrm((3 * D,)),
            proj_w=nrm((D, D)), proj_b=nrm((D,)),
            ln2_g=jnp.ones((D,), jnp.float32), ln2_b=jnp.zeros((D,), jnp.float32),
            fc1_w=nrm((D, mlp)), fc1_b=nrm((mlp,)),
            fc2_w=nrm((mlp, D)), fc2_b=nrm((D,)),
        ) for _ in range(depth)],
    }
    deconv = []
    cin = hcfg["in_channels"]
    for cout in hcfg["num_deconv_filters"]:
        deconv.append(dict(
            w=nrm((cin, cout, 4, 4)),      # ConvTranspose2d weight (Cin, Cout, 4, 4), bias=False
            bn_g=jnp.ones((cout,), jnp.float32), bn_b=jnp.zeros((cout,), jnp.float32),
            bn_rm=jnp.zeros((cout,), jnp.float32), bn_rv=jnp.ones((cout,), jnp.float32)))
        cin = cout
    params["deconv"] = deconv
    params["final"] = dict(w=nrm((hcfg["out_channels"], cin, 1, 1)),
                           b=nrm((hcfg["out_channels"],)))
    return params


def prepare_params(raw, cfg):
    """One-time inference re-layout: weights pre-cast to bf16 in matmul layout, the
    softmax scale folded into the q columns of qkv, eval-BatchNorms folded to
    scale/bias, deconv weights reshaped to (Cin, 16*Cout) col-matmul form and the final
    1x1 conv padded to a lane-dense 128-multiple output width."""
    bcfg = cfg["backbone"]
    C, P, D, nH = bcfg["in_chans"], bcfg["patch_size"], bcfg["embed_dim"], bcfg["num_heads"]
    dh = D // nH
    bf16, f32 = jnp.bfloat16, jnp.float32
    pe = raw["pos_embed"]
    qs = dh ** -0.5

    prm = dict(
        pe_w=raw["patch_embed"]["w"].reshape(D, C * P * P).T.astype(bf16),
        pe_b=raw["patch_embed"]["b"].astype(f32),
        pos_add=(pe[:, 1:] + pe[:, :1]).astype(f32),   # ViTPose pos-embed add (no cls tok)
        last_norm_g=raw["last_norm_g"].astype(f32),
        last_norm_b=raw["last_norm_b"].astype(f32),
    )
    blocks = []
    for blk in raw["blocks"]:
        qkv_w = blk["qkv_w"].at[:, :D].multiply(qs)    # fold softmax scale into q
        qkv_b = blk["qkv_b"].at[:D].multiply(qs)
        blocks.append(dict(
            ln1_g=blk["ln1_g"].astype(f32), ln1_b=blk["ln1_b"].astype(f32),
            qkv_w=qkv_w.astype(bf16), qkv_b=qkv_b.astype(f32),
            proj_w=blk["proj_w"].astype(bf16), proj_b=blk["proj_b"].astype(f32),
            ln2_g=blk["ln2_g"].astype(f32), ln2_b=blk["ln2_b"].astype(f32),
            fc1_w=blk["fc1_w"].astype(bf16), fc1_b=blk["fc1_b"].astype(f32),
            fc2_w=blk["fc2_w"].astype(bf16), fc2_b=blk["fc2_b"].astype(f32)))
    prm["blocks"] = blocks

    deconv = []
    for d in raw["deconv"]:
        cin, cout = d["w"].shape[0], d["w"].shape[1]
        sc = d["bn_g"] * jax.lax.rsqrt(d["bn_rv"] + 1e-5)
        deconv.append(dict(
            w_col=d["w"].transpose(0, 2, 3, 1).reshape(cin, 16 * cout).astype(bf16),
            b0=jnp.zeros((16 * cout,), f32),           # ConvTranspose2d has bias=False
            bn_scale=sc.astype(f32),
            bn_bias=(d["bn_b"] - d["bn_rm"] * sc).astype(f32)))
    prm["deconv"] = deconv

    fw = raw["final"]["w"]
    Kj, cin = fw.shape[0], fw.shape[1]
    Kpad = -(-Kj // 128) * 128
    prm["final_w"] = jnp.pad(fw.reshape(Kj, cin).T, ((0, 0), (0, Kpad - Kj))).astype(bf16)
    prm["final_b"] = jnp.pad(raw["final"]["b"], (0, Kpad - Kj)).astype(f32)
    return prm


# --------------------------------------------------------------------------
# Forward pass  (ViT backbone -> TopdownHeatmapSimpleHead)
# --------------------------------------------------------------------------
def vit_pose_forward(params, x, cfg):
    bcfg, hcfg = cfg["backbone"], cfg["keypoint_head"]
    B, C, H, W = x.shape
    P, D, nH = bcfg["patch_size"], bcfg["embed_dim"], bcfg["num_heads"]
    dh = D // nH
    pad = 2

    # ---- PatchEmbed: Conv2d(C, D, k=P, s=P, p=2) as space-to-depth + fused matmul
    xp = jnp.pad(x, ((0, 0), (0, 0), (pad, pad), (pad, pad)))
    Hp = (H + 2 * pad - P) // P + 1
    Wp = (W + 2 * pad - P) // P + 1
    Np = Hp * Wp
    xp = xp[:, :, :Hp * P, :Wp * P]
    patches = xp.reshape(B, C, Hp, P, Wp, P).transpose(0, 2, 4, 1, 3, 5)
    patches = patches.reshape(B * Np, C * P * P).astype(jnp.bfloat16)
    tok = fused_linear(patches, params["pe_w"], params["pe_b"])
    # x = x + pos_embed[:, 1:] + pos_embed[:, :1]   (precombined; tiny broadcast add)
    xseq = (tok.reshape(B, Np, D) + params["pos_add"]).reshape(B * Np, D)

    # ---- Transformer blocks: LN fused (and cached) in qkv/fc1, GELU in fc1,
    #      residual add in proj/fc2.  Residual stream f32; qkv / attn / hidden bf16.
    for blk in params["blocks"]:
        qkv = fused_linear(xseq, blk["qkv_w"], blk["qkv_b"],
                           ln=(blk["ln1_g"], blk["ln1_b"]), out_dtype=jnp.bfloat16)
        attn = attention_pallas(qkv, B=B, Np=Np, nH=nH, dh=dh)
        xseq = fused_linear(attn, blk["proj_w"], blk["proj_b"], residual=xseq)
        h = fused_linear(xseq, blk["fc1_w"], blk["fc1_b"],
                         ln=(blk["ln2_g"], blk["ln2_b"]), epilogue="gelu",
                         out_dtype=jnp.bfloat16)
        xseq = fused_linear(h, blk["fc2_w"], blk["fc2_b"], residual=xseq)

    # ---- TopdownHeatmapSimpleHead, channels-last rows end-to-end.
    # Backbone last_norm is fused into the first deconv col-matmul; each deconv's
    # folded eval-BatchNorm + ReLU is fused into its phase-combine kernel.
    y_rows = xseq
    Hc, Wc = Hp, Wp
    ln = (params["last_norm_g"], params["last_norm_b"])
    for dprm in params["deconv"]:
        cols = fused_linear(y_rows, dprm["w_col"], dprm["b0"], ln=ln,
                            out_dtype=jnp.bfloat16)
        y_rows = deconv_phase_combine(cols, dprm["bn_scale"], dprm["bn_bias"],
                                      B, Hc, Wc)
        Hc, Wc = 2 * Hc, 2 * Wc
        ln = None

    # final 1x1 conv (output width pre-padded to a 128 multiple for lane-dense stores)
    Kj = hcfg["out_channels"]
    out = fused_linear(y_rows, params["final_w"], params["final_b"])
    out = out[:, :Kj].reshape(B, Hc, Wc, Kj).transpose(0, 3, 1, 2)
    return out                                  # (B, num_joints, Ho, Wo) NCHW


# --------------------------------------------------------------------------
if __name__ == "__main__":
    cfg = dict(
        backbone=dict(type="ViT", img_size=(32, 32), patch_size=8, in_chans=3,
                      embed_dim=32, depth=2, num_heads=4, ratio=1, mlp_ratio=4,
                      qkv_bias=True),
        keypoint_head=dict(type="TopdownHeatmapSimpleHead", in_channels=32,
                           num_deconv_layers=2, num_deconv_filters=(16, 16),
                           num_deconv_kernels=(4, 4), out_channels=4,
                           extra=dict(final_conv_kernel=1)),
    )
    key = jax.random.PRNGKey(0)
    pkey, xkey = jax.random.split(key)
    params = prepare_params(init_params(pkey, cfg), cfg)       # one-time bf16 re-layout
    x = jax.random.normal(xkey, (2, 3, 32, 32), jnp.float32)   # NCHW, like PyTorch

    fwd = jax.jit(functools.partial(vit_pose_forward, cfg=cfg))
    heatmaps = jax.block_until_ready(fwd(params, x))

    assert heatmaps.shape == (2, 4, 16, 16), heatmaps.shape
    assert bool(jnp.all(jnp.isfinite(heatmaps)))
    print("KERNEL_OK")
</pallas_src>

<mosaic_0001>
module attributes {stable_mosaic.version = 11 : i64} {
  func.func @kernel(%arg0: i32, %arg1: i32, %arg2: memref<32x192xbf16, #tpu.memory_space<vmem>>, %arg3: memref<192x32xbf16, #tpu.memory_space<vmem>>, %arg4: memref<1x32xf32, #tpu.memory_space<vmem>>, %arg5: memref<32x32xf32, #tpu.memory_space<vmem>>) attributes {dimension_semantics = [#tpu.dimension_semantics<parallel>, #tpu.dimension_semantics<parallel>], iteration_bounds = array<i64: 1, 1>, scalar_prefetch = 0 : i64, scratch_operands = 0 : i64, tpu.core_type = #tpu.core_type<tc>, window_params = [{transform_indices = @transform_0, window_bounds = array<i64: 32, 192>}, {transform_indices = @transform_1, window_bounds = array<i64: 192, 32>}, {transform_indices = @transform_2, window_bounds = array<i64: 1, 32>}, {transform_indices = @transform_3, window_bounds = array<i64: 32, 32>}]} {
    %c0 = arith.constant 0 : index
    %c0_0 = arith.constant 0 : index
    %0 = vector.load %arg2[%c0, %c0_0] : memref<32x192xbf16, #tpu.memory_space<vmem>>, vector<32x192xbf16>
    %c0_1 = arith.constant 0 : index
    %c0_2 = arith.constant 0 : index
    %1 = vector.load %arg3[%c0_1, %c0_2] : memref<192x32xbf16, #tpu.memory_space<vmem>>, vector<192x32xbf16>
    %cst = arith.constant dense<0.000000e+00> : vector<32x32xf32>
    %2 = tpu.matmul %0, %1, %cst {dimension_numbers = #tpu.dot_dimension_numbers<[1], [0], [0], [1], [0, 0, 1, 1], [], []>} : vector<32x192xbf16>, vector<192x32xbf16>, vector<32x32xf32> -> vector<32x32xf32>
    %c0_3 = arith.constant 0 : index
    %c0_4 = arith.constant 0 : index
    %3 = vector.load %arg4[%c0_3, %c0_4] : memref<1x32xf32, #tpu.memory_space<vmem>>, vector<1x32xf32>
    %4 = vector.broadcast %3 : vector<1x32xf32> to vector<32x32xf32>
    %5 = arith.addf %2, %4 : vector<32x32xf32>
    %c0_5 = arith.constant 0 : index
    %c0_6 = arith.constant 0 : index
    %6 = vector.load %arg5[%c0_5, %c0_6] : memref<32x32xf32, #tpu.memory_space<vmem>>, vector<32x32xf32>
    tpu.vector_store %arg5[%c0_5, %c0_6], %5 {strides = array<i32>} : memref<32x32xf32, #tpu.memory_space<vmem>>, vector<32x32xf32>,
    return
  }
  func.func @transform_0(%arg0: i32, %arg1: i32) -> (i32, i32) {
    %c0_i32 = arith.constant 0 : i32
    %c0_i32_0 = arith.constant 0 : i32
    return %arg0, %c0_i32 : i32, i32
  }
  func.func @transform_1(%arg0: i32, %arg1: i32) -> (i32, i32) {
    %c0_i32 = arith.constant 0 : i32
    %c0_i32_0 = arith.constant 0 : i32
    return %c0_i32, %arg1 : i32, i32
  }
  func.func @transform_2(%arg0: i32, %arg1: i32) -> (i32, i32) {
    %c0_i32 = arith.constant 0 : i32
    %c0_i32_0 = arith.constant 0 : i32
    return %c0_i32, %arg1 : i32, i32
  }
  func.func @transform_3(%arg0: i32, %arg1: i32) -> (i32, i32) {
    %c0_i32 = arith.constant 0 : i32
    return %arg0, %arg1 : i32, i32
  }
}

module attributes {stable_mosaic.version = 11 : i64} {
  func.func @kernel(%arg0: i32, %arg1: i32, %arg2: memref<32x32xf32, #tpu.memory_space<vmem>>, %arg3: memref<32x96xbf16, #tpu.memory_space<vmem>>, %arg4: memref<1x96xf32, #tpu.memory_space<vmem>>, %arg5: memref<1x32xf32, #tpu.memory_space<vmem>>, %arg6: memref<1x32xf32, #tpu.memory_space<vmem>>, %arg7: memref<32x96xbf16, #tpu.memory_space<vmem>>, %arg8: memref<32x32xbf16, #tpu.memory_space<vmem>>) attributes {dimension_semantics = [#tpu.dimension_semantics<parallel>, #tpu.dimension_semantics<arbitrary>], iteration_bounds = array<i64: 1, 1>, scalar_prefetch = 0 : i64, scratch_operands = 1 : i64, tpu.core_type = #tpu.core_type<tc>, window_params = [{transform_indices = @transform_0, window_bounds = array<i64: 32, 32>}, {transform_indices = @transform_1, window_bounds = array<i64: 32, 96>}, {transform_indices = @transform_2, window_bounds = array<i64: 1, 96>}, {pipeline_mode = #tpu.pipeline_mode<synchronous>, transform_indices = @transform_3, window_bounds = array<i64: 1, 32>}, {pipeline_mode = #tpu.pipeline_mode<synchronous>, transform_indices = @transform_4, window_bounds = array<i64: 1, 32>}, {transform_indices = @transform_5, window_bounds = array<i64: 32, 96>}]} {
    %c0_i32 = arith.constant 0 : i32
    %0 = arith.cmpi eq, %arg1, %c0_i32 : i32
    %1 = arith.extui %0 : i1 to i32
    %c0_i32_0 = arith.constant 0 : i32
    %2 = arith.cmpi ne, %1, %c0_i32_0 : i32
    scf.if %2 {
      %c0_8 = arith.constant 0 : index
      %c0_9 = arith.constant 0 : index
      %11 = vector.load %arg2[%c0_8, %c0_9] : memref<32x32xf32, #tpu.memory_space<vmem>>, vector<32x32xf32>
      %cst_10 = arith.constant dense<0.000000e+00> : vector<32xf32>
      %12 = vector.multi_reduction <add>, %11, %cst_10 [1] : vector<32x32xf32> to vector<32xf32>
      %13 = vector.shape_cast %12 : vector<32xf32> to vector<32x1xf32>
      %cst_11 = arith.constant 3.200000e+01 : f32
      %14 = vector.broadcast %cst_11 : f32 to vector<32x1xf32>
      %15 = arith.divf %13, %14 : vector<32x1xf32>
      %16 = vector.broadcast %15 : vector<32x1xf32> to vector<32x32xf32>
      %17 = arith.subf %11, %16 : vector<32x32xf32>
      %18 = arith.mulf %17, %17 : vector<32x32xf32>
      %cst_12 = arith.constant dense<0.000000e+00> : vector<32xf32>
      %19 = vector.multi_reduction <add>, %18, %cst_12 [1] : vector<32x32xf32> to vector<32xf32>
      %20 = vector.shape_cast %19 : vector<32xf32> to vector<32x1xf32>
      %cst_13 = arith.constant 3.200000e+01 : f32
      %21 = vector.broadcast %cst_13 : f32 to vector<32x1xf32>
      %22 = arith.divf %20, %21 : vector<32x1xf32>
      %cst_14 = arith.constant 9.99999997E-7 : f32
      %23 = vector.broadcast %cst_14 : f32 to vector<32x1xf32>
      %24 = arith.addf %22, %23 : vector<32x1xf32>
      %25 = math.rsqrt %24 : vector<32x1xf32>
      %26 = vector.broadcast %25 : vector<32x1xf32> to vector<32x32xf32>
      %27 = arith.mulf %17, %26 : vector<32x32xf32>
      %c0_15 = arith.constant 0 : index
      %c0_16 = arith.constant 0 : index
      %28 = vector.load %arg5[%c0_15, %c0_16] : memref<1x32xf32, #tpu.memory_space<vmem>>, vector<1x32xf32>
      %29 = vector.broadcast %28 : vector<1x32xf32> to vector<32x32xf32>
      %30 = arith.mulf %27, %29 : vector<32x32xf32>
      %c0_17 = arith.constant 0 : index
      %c0_18 = arith.constant 0 : index
      %31 = vector.load %arg6[%c0_17, %c0_18] : memref<1x32xf32, #tpu.memory_space<vmem>>, vector<1x32xf32>
      %32 = vector.broadcast %31 : vector<1x32xf32> to vector<32x32xf32>
      %33 = arith.addf %30, %32 : vector<32x32xf32>
      %34 = arith.truncf %33 : vector<32x32xf32> to vector<32x32xbf16>
      %c0_19 = arith.constant 0 : index
      %c0_20 = arith.constant 0 : index
      %35 = vector.load %arg8[%c0_19, %c0_20] : memref<32x32xbf16, #tpu.memory_space<vmem>>, vector<32x32xbf16>
      tpu.vector_store %arg8[%c0_19, %c0_20], %34 {strides = array<i32>} : memref<32x32xbf16, #tpu.memory_space<vmem>>, vector<32x32xbf16>,
    } else {
    }
    %c0 = arith.constant 0 : index
    %c0_1 = arith.constant 0 : index
    %3 = vector.load %arg8[%c0, %c0_1] : memref<32x32xbf16, #tpu.memory_space<vmem>>, vector<32x32xbf16>
    %c0_2 = arith.constant 0 : index
    %c0_3 = arith.constant 0 : index
    %4 = vector.load %arg3[%c0_2, %c0_3] : memref<32x96xbf16, #tpu.memory_space<vmem>>, vector<32x96xbf16>
    %cst = arith.constant dense<0.000000e+00> : vector<32x96xf32>
    %5 = tpu.matmul %3, %4, %cst {dimension_numbers = #tpu.dot_dimension_numbers<[1], [0], [0], [1], [0, 0, 1, 1], [], []>} : vector<32x32xbf16>, vector<32x96xbf16>, vector<32x96xf32> -> vector<32x96xf32>
    %c0_4 = arith.constant 0 : index
    %c0_5 = arith.constant 0 : index
    %6 = vector.load %arg4[%c0_4, %c0_5] : memref<1x96xf32, #tpu.memory_space<vmem>>, vector<1x96xf32>
    %7 = vector.broadcast %6 : vector<1x96xf32> to vector<32x96xf32>
    %8 = arith.addf %5, %7 : vector<32x96xf32>
    %9 = arith.truncf %8 : vector<32x96xf32> to vector<32x96xbf16>
    %c0_6 = arith.constant 0 : index
    %c0_7 = arith.constant 0 : index
    %10 = vector.load %arg7[%c0_6, %c0_7] : memref<32x96xbf16, #tpu.memory_space<vmem>>, vector<32x96xbf16>
    tpu.vector_store %arg7[%c0_6, %c0_7], %9 {strides = array<i32>} : memref<32x96xbf16, #tpu.memory_space<vmem>>, vector<32x96xbf16>,
    return
  }
  func.func @transform_0(%arg0: i32, %arg1: i32) -> (i32, i32) {
    %c0_i32 = arith.constant 0 : i32
    %c0_i32_0 = arith.constant 0 : i32
    return %arg0, %c0_i32 : i32, i32
  }
  func.func @transform_1(%arg0: i32, %arg1: i32) -> (i32, i32) {
    %c0_i32 = arith.constant 0 : i32
    %c0_i32_0 = arith.constant 0 : i32
    return %c0_i32, %arg1 : i32, i32
  }
  func.func @transform_2(%arg0: i32, %arg1: i32) -> (i32, i32) {
    %c0_i32 = arith.constant 0 : i32
    %c0_i32_0 = arith.constant 0 : i32
    return %c0_i32, %arg1 : i32, i32
  }
  func.func @transform_3(%arg0: i32, %arg1: i32) -> (i32, i32) {
    %c0_i32 = arith.constant 0 : i32
    %c0_i32_0 = arith.constant 0 : i32
    %c0_i32_1 = arith.constant 0 : i32
    return %c0_i32, %c0_i32_0 : i32, i32
  }
  func.func @transform_4(%arg0: i32, %arg1: i32) -> (i32, i32) {
    %c0_i32 = arith.constant 0 : i32
    %c0_i32_0 = arith.constant 0 : i32
    %c0_i32_1 = arith.constant 0 : i32
    return %c0_i32, %c0_i32_0 : i32, i32
  }
  func.func @transform_5(%arg0: i32, %arg1: i32) -> (i32, i32) {
    %c0_i32 = arith.constant 0 : i32
    return %arg0, %arg1 : i32, i32
  }
}

module attributes {stable_mosaic.version = 11 : i64} {
  func.func @_attn_kernel_slab(%arg0: i32, %arg1: memref<16x96xbf16, #tpu.memory_space<vmem>>, %arg2: memref<16x32xbf16, #tpu.memory_space<vmem>>) attributes {dimension_semantics = [#tpu.dimension_semantics<parallel>], iteration_bounds = array<i64: 2>, scalar_prefetch = 0 : i64, scratch_operands = 0 : i64, tpu.core_type = #tpu.core_type<tc>, window_params = [{transform_indices = @transform_0, window_bounds = array<i64: 16, 96>}, {transform_indices = @transform_1, window_bounds = array<i64: 16, 32>}]} {
    %c0 = arith.constant 0 : index
    %c0_0 = arith.constant 0 : index
    %0 = vector.load %arg1[%c0, %c0_0] : memref<16x96xbf16, #tpu.memory_space<vmem>>, vector<16x96xbf16>
    %1 = vector.extract_strided_slice %0 {offsets = [0, 0], sizes = [16, 32], strides = [1, 1]} : vector<16x96xbf16> to vector<16x32xbf16>
    %2 = vector.extract_strided_slice %0 {offsets = [0, 32], sizes = [16, 32], strides = [1, 1]} : vector<16x96xbf16> to vector<16x32xbf16>
    %3 = vector.extract_strided_slice %0 {offsets = [0, 64], sizes = [16, 32], strides = [1, 1]} : vector<16x96xbf16> to vector<16x32xbf16>
    %4 = vector.extract_strided_slice %1 {offsets = [0, 0], sizes = [16, 8], strides = [1, 1]} : vector<16x32xbf16> to vector<16x8xbf16>
    %5 = vector.extract_strided_slice %2 {offsets = [0, 0], sizes = [16, 8], strides = [1, 1]} : vector<16x32xbf16> to vector<16x8xbf16>
    %6 = vector.extract_strided_slice %3 {offsets = [0, 0], sizes = [16, 8], strides = [1, 1]} : vector<16x32xbf16> to vector<16x8xbf16>
    %cst = arith.constant dense<0.000000e+00> : vector<16x16xf32>
    %7 = tpu.matmul %4, %5, %cst {dimension_numbers = #tpu.dot_dimension_numbers<[1], [1], [0], [0], [0, 0, 1, 0], [], []>} : vector<16x8xbf16>, vector<16x8xbf16>, vector<16x16xf32> -> vector<16x16xf32>
    %cst_1 = arith.constant dense<0xFF800000> : vector<16xf32>
    %8 = vector.multi_reduction <maximumf>, %7, %cst_1 [1] : vector<16x16xf32> to vector<16xf32>
    %9 = vector.shape_cast %8 : vector<16xf32> to vector<16x1xf32>
    %10 = vector.broadcast %9 : vector<16x1xf32> to vector<16x16xf32>
    %11 = arith.subf %7, %10 : vector<16x16xf32>
    %12 = math.exp %11 : vector<16x16xf32>
    %cst_2 = arith.constant dense<0.000000e+00> : vector<16xf32>
    %13 = vector.multi_reduction <add>, %12, %cst_2 [1] : vector<16x16xf32> to vector<16xf32>
    %14 = vector.shape_cast %13 : vector<16xf32> to vector<16x1xf32>
    %15 = arith.truncf %12 : vector<16x16xf32> to vector<16x16xbf16>
    %cst_3 = arith.constant dense<0.000000e+00> : vector<16x8xf32>
    %16 = tpu.matmul %15, %6, %cst_3 {dimension_numbers = #tpu.dot_dimension_numbers<[1], [0], [0], [1], [0, 0, 1, 1], [], []>} : vector<16x16xbf16>, vector<16x8xbf16>, vector<16x8xf32> -> vector<16x8xf32>
    %17 = vector.broadcast %14 : vector<16x1xf32> to vector<16x8xf32>
    %18 = arith.divf %16, %17 : vector<16x8xf32>
    %19 = vector.extract_strided_slice %1 {offsets = [0, 8], sizes = [16, 8], strides = [1, 1]} : vector<16x32xbf16> to vector<16x8xbf16>
    %20 = vector.extract_strided_slice %2 {offsets = [0, 8], sizes = [16, 8], strides = [1, 1]} : vector<16x32xbf16> to vector<16x8xbf16>
    %21 = vector.extract_strided_slice %3 {offsets = [0, 8], sizes = [16, 8], strides = [1, 1]} : vector<16x32xbf16> to vector<16x8xbf16>
    %cst_4 = arith.constant dense<0.000000e+00> : vector<16x16xf32>
    %22 = tpu.matmul %19, %20, %cst_4 {dimension_numbers = #tpu.dot_dimension_numbers<[1], [1], [0], [0], [0, 0, 1, 0], [], []>} : vector<16x8xbf16>, vector<16x8xbf16>, vector<16x16xf32> -> vector<16x16xf32>
    %cst_5 = arith.constant dense<0xFF800000> : vector<16xf32>
    %23 = vector.multi_reduction <maximumf>, %22, %cst_5 [1] : vector<16x16xf32> to vector<16xf32>
    %24 = vector.shape_cast %23 : vector<16xf32> to vector<16x1xf32>
    %25 = vector.broadcast %24 : vector<16x1xf32> to vector<16x16xf32>
    %26 = arith.subf %22, %25 : vector<16x16xf32>
    %27 = math.exp %26 : vector<16x16xf32>
    %cst_6 = arith.constant dense<0.000000e+00> : vector<16xf32>
    %28 = vector.multi_reduction <add>, %27, %cst_6 [1] : vector<16x16xf32> to vector<16xf32>
    %29 = vector.shape_cast %28 : vector<16xf32> to vector<16x1xf32>
    %30 = arith.truncf %27 : vector<16x16xf32> to vector<16x16xbf16>
    %cst_7 = arith.constant dense<0.000000e+00> : vector<16x8xf32>
    %31 = tpu.matmul %30, %21, %cst_7 {dimension_numbers = #tpu.dot_dimension_numbers<[1], [0], [0], [1], [0, 0, 1, 1], [], []>} : vector<16x16xbf16>, vector<16x8xbf16>, vector<16x8xf32> -> vector<16x8xf32>
    %32 = vector.broadcast %29 : vector<16x1xf32> to vector<16x8xf32>
    %33 = arith.divf %31, %32 : vector<16x8xf32>
    %34 = vector.extract_strided_slice %1 {offsets = [0, 16], sizes = [16, 8], strides = [1, 1]} : vector<16x32xbf16> to vector<16x8xbf16>
    %35 = vector.extract_strided_slice %2 {offsets = [0, 16], sizes = [16, 8], strides = [1, 1]} : vector<16x32xbf16> to vector<16x8xbf16>
    %36 = vector.extract_strided_slice %3 {offsets = [0, 16], sizes = [16, 8], strides = [1, 1]} : vector<16x32xbf16> to vector<16x8xbf16>
    %cst_8 = arith.constant dense<0.000000e+00> : vector<16x16xf32>
    %37 = tpu.matmul %34, %35, %cst_8 {dimension_numbers = #tpu.dot_dimension_numbers<[1], [1], [0], [0], [0, 0, 1, 0], [], []>} : vector<16x8xbf16>, vector<16x8xbf16>, vector<16x16xf32> -> vector<16x16xf32>
    %cst_9 = arith.constant dense<0xFF800000> : vector<16xf32>
    %38 = vector.multi_reduction <maximumf>, %37, %cst_9 [1] : vector<16x16xf32> to vector<16xf32>
    %39 = vector.shape_cast %38 : vector<16xf32> to vector<16x1xf32>
    %40 = vector.broadcast %39 : vector<16x1xf32> to vector<16x16xf32>
    %41 = arith.subf %37, %40 : vector<16x16xf32>
    %42 = math.exp %41 : vector<16x16xf32>
    %cst_10 = arith.constant dense<0.000000e+00> : vector<16xf32>
    %43 = vector.multi_reduction <add>, %42, %cst_10 [1] : vector<16x16xf32> to vector<16xf32>
    %44 = vector.shape_cast %43 : vector<16xf32> to vector<16x1xf32>
    %45 = arith.truncf %42 : vector<16x16xf32> to vector<16x16xbf16>
    %cst_11 = arith.constant dense<0.000000e+00> : vector<16x8xf32>
    %46 = tpu.matmul %45, %36, %cst_11 {dimension_numbers = #tpu.dot_dimension_numbers<[1], [0], [0], [1], [0, 0, 1, 1], [], []>} : vector<16x16xbf16>, vector<16x8xbf16>, vector<16x8xf32> -> vector<16x8xf32>
    %47 = vector.broadcast %44 : vector<16x1xf32> to vector<16x8xf32>
    %48 = arith.divf %46, %47 : vector<16x8xf32>
    %49 = vector.extract_strided_slice %1 {offsets = [0, 24], sizes = [16, 8], strides = [1, 1]} : vector<16x32xbf16> to vector<16x8xbf16>
    %50 = vector.extract_strided_slice %2 {offsets = [0, 24], sizes = [16, 8], strides = [1, 1]} : vector<16x32xbf16> to vector<16x8xbf16>
    %51 = vector.extract_strided_slice %3 {offsets = [0, 24], sizes = [16, 8], strides = [1, 1]} : vector<16x32xbf16> to vector<16x8xbf16>
    %cst_12 = arith.constant dense<0.000000e+00> : vector<16x16xf32>
    %52 = tpu.matmul %49, %50, %cst_12 {dimension_numbers = #tpu.dot_dimension_numbers<[1], [1], [0], [0], [0, 0, 1, 0], [], []>} : vector<16x8xbf16>, vector<16x8xbf16>, vector<16x16xf32> -> vector<16x16xf32>
    %cst_13 = arith.constant dense<0xFF800000> : vector<16xf32>
    %53 = vector.multi_reduction <maximumf>, %52, %cst_13 [1] : vector<16x16xf32> to vector<16xf32>
    %54 = vector.shape_cast %53 : vector<16xf32> to vector<16x1xf32>
    %55 = vector.broadcast %54 : vector<16x1xf32> to vector<16x16xf32>
    %56 = arith.subf %52, %55 : vector<16x16xf32>
    %57 = math.exp %56 : vector<16x16xf32>
    %cst_14 = arith.constant dense<0.000000e+00> : vector<16xf32>
    %58 = vector.multi_reduction <add>, %57, %cst_14 [1] : vector<16x16xf32> to vector<16xf32>
    %59 = vector.shape_cast %58 : vector<16xf32> to vector<16x1xf32>
    %60 = arith.truncf %57 : vector<16x16xf32> to vector<16x16xbf16>
    %cst_15 = arith.constant dense<0.000000e+00> : vector<16x8xf32>
    %61 = tpu.matmul %60, %51, %cst_15 {dimension_numbers = #tpu.dot_dimension_numbers<[1], [0], [0], [1], [0, 0, 1, 1], [], []>} : vector<16x16xbf16>, vector<16x8xbf16>, vector<16x8xf32> -> vector<16x8xf32>
    %62 = vector.broadcast %59 : vector<16x1xf32> to vector<16x8xf32>
    %63 = arith.divf %61, %62 : vector<16x8xf32>
    %64 = tpu.concatenate %18, %33, %48, %63 in 1 : vector<16x8xf32>, vector<16x8xf32>, vector<16x8xf32>, vector<16x8xf32> -> vector<16x32xf32>
    %65 = arith.truncf %64 : vector<16x32xf32> to vector<16x32xbf16>
    %c0_16 = arith.constant 0 : index
    %c0_17 = arith.constant 0 : index
    %66 = vector.load %arg2[%c0_16, %c0_17] : memref<16x32xbf16, #tpu.memory_space<vmem>>, vector<16x32xbf16>
    tpu.vector_store %arg2[%c0_16, %c0_17], %65 {strides = array<i32>} : memref<16x32xbf16, #tpu.memory_space<vmem>>, vector<16x32xbf16>,
    return
  }
  func.func @transform_0(%arg0: i32) -> (i32, i32) {
    %c0_i32 = arith.constant 0 : i32
    %c0_i32_0 = arith.constant 0 : i32
    return %arg0, %c0_i32 : i32, i32
  }
  func.func @transform_1(%arg0: i32) -> (i32, i32) {
    %c0_i32 = arith.constant 0 : i32
    %c0_i32_0 = arith.constant 0 : i32
    return %arg0, %c0_i32 : i32, i32
  }
}

module attributes {stable_mosaic.version = 11 : i64} {
  func.func @kernel(%arg0: i32, %arg1: i32, %arg2: memref<32x32xbf16, #tpu.memory_space<vmem>>, %arg3: memref<32x32xbf16, #tpu.memory_space<vmem>>, %arg4: memref<1x32xf32, #tpu.memory_space<vmem>>, %arg5: memref<32x32xf32, #tpu.memory_space<vmem>>, %arg6: memref<32x32xf32, #tpu.memory_space<vmem>>) attributes {dimension_semantics = [#tpu.dimension_semantics<parallel>, #tpu.dimension_semantics<parallel>], iteration_bounds = array<i64: 1, 1>, scalar_prefetch = 0 : i64, scratch_operands = 0 : i64, tpu.core_type = #tpu.core_type<tc>, window_params = [{transform_indices = @transform_0, window_bounds = array<i64: 32, 32>}, {transform_indices = @transform_1, window_bounds = array<i64: 32, 32>}, {transform_indices = @transform_2, window_bounds = array<i64: 1, 32>}, {transform_indices = @transform_3, window_bounds = array<i64: 32, 32>}, {transform_indices = @transform_4, window_bounds = array<i64: 32, 32>}]} {
    %c0 = arith.constant 0 : index
    %c0_0 = arith.constant 0 : index
    %0 = vector.load %arg2[%c0, %c0_0] : memref<32x32xbf16, #tpu.memory_space<vmem>>, vector<32x32xbf16>
    %c0_1 = arith.constant 0 : index
    %c0_2 = arith.constant 0 : index
    %1 = vector.load %arg3[%c0_1, %c0_2] : memref<32x32xbf16, #tpu.memory_space<vmem>>, vector<32x32xbf16>
    %cst = arith.constant dense<0.000000e+00> : vector<32x32xf32>
    %2 = tpu.matmul %0, %1, %cst {dimension_numbers = #tpu.dot_dimension_numbers<[1], [0], [0], [1], [0, 0, 1, 1], [], []>} : vector<32x32xbf16>, vector<32x32xbf16>, vector<32x32xf32> -> vector<32x32xf32>
    %c0_3 = arith.constant 0 : index
    %c0_4 = arith.constant 0 : index
    %3 = vector.load %arg4[%c0_3, %c0_4] : memref<1x32xf32, #tpu.memory_space<vmem>>, vector<1x32xf32>
    %4 = vector.broadcast %3 : vector<1x32xf32> to vector<32x32xf32>
    %5 = arith.addf %2, %4 : vector<32x32xf32>
    %c0_5 = arith.constant 0 : index
    %c0_6 = arith.constant 0 : index
    %6 = vector.load %arg5[%c0_5, %c0_6] : memref<32x32xf32, #tpu.memory_space<vmem>>, vector<32x32xf32>
    %7 = arith.addf %5, %6 : vector<32x32xf32>
    %c0_7 = arith.constant 0 : index
    %c0_8 = arith.constant 0 : index
    %8 = vector.load %arg6[%c0_7, %c0_8] : memref<32x32xf32, #tpu.memory_space<vmem>>, vector<32x32xf32>
    tpu.vector_store %arg6[%c0_7, %c0_8], %7 {strides = array<i32>} : memref<32x32xf32, #tpu.memory_space<vmem>>, vector<32x32xf32>,
    return
  }
  func.func @transform_0(%arg0: i32, %arg1: i32) -> (i32, i32) {
    %c0_i32 = arith.constant 0 : i32
    %c0_i32_0 = arith.constant 0 : i32
    return %arg0, %c0_i32 : i32, i32
  }
  func.func @transform_1(%arg0: i32, %arg1: i32) -> (i32, i32) {
    %c0_i32 = arith.constant 0 : i32
    %c0_i32_0 = arith.constant 0 : i32
    return %c0_i32, %arg1 : i32, i32
  }
  func.func @transform_2(%arg0: i32, %arg1: i32) -> (i32, i32) {
    %c0_i32 = arith.constant 0 : i32
    %c0_i32_0 = arith.constant 0 : i32
    return %c0_i32, %arg1 : i32, i32
  }
  func.func @transform_3(%arg0: i32, %arg1: i32) -> (i32, i32) {
    %c0_i32 = arith.constant 0 : i32
    return %arg0, %arg1 : i32, i32
  }
  func.func @transform_4(%arg0: i32, %arg1: i32) -> (i32, i32) {
    %c0_i32 = arith.constant 0 : i32
    return %arg0, %arg1 : i32, i32
  }
}

module attributes {stable_mosaic.version = 11 : i64} {
  func.func @kernel(%arg0: i32, %arg1: i32, %arg2: memref<32x32xf32, #tpu.memory_space<vmem>>, %arg3: memref<32x128xbf16, #tpu.memory_space<vmem>>, %arg4: memref<1x128xf32, #tpu.memory_space<vmem>>, %arg5: memref<1x32xf32, #tpu.memory_space<vmem>>, %arg6: memref<1x32xf32, #tpu.memory_space<vmem>>, %arg7: memref<32x128xbf16, #tpu.memory_space<vmem>>, %arg8: memref<32x32xbf16, #tpu.memory_space<vmem>>) attributes {dimension_semantics = [#tpu.dimension_semantics<parallel>, #tpu.dimension_semantics<arbitrary>], iteration_bounds = array<i64: 1, 1>, scalar_prefetch = 0 : i64, scratch_operands = 1 : i64, tpu.core_type = #tpu.core_type<tc>, window_params = [{transform_indices = @transform_0, window_bounds = array<i64: 32, 32>}, {transform_indices = @transform_1, window_bounds = array<i64: 32, 128>}, {transform_indices = @transform_2, window_bounds = array<i64: 1, 128>}, {pipeline_mode = #tpu.pipeline_mode<synchronous>, transform_indices = @transform_3, window_bounds = array<i64: 1, 32>}, {pipeline_mode = #tpu.pipeline_mode<synchronous>, transform_indices = @transform_4, window_bounds = array<i64: 1, 32>}, {transform_indices = @transform_5, window_bounds = array<i64: 32, 128>}]} {
    %c0_i32 = arith.constant 0 : i32
    %0 = arith.cmpi eq, %arg1, %c0_i32 : i32
    %1 = arith.extui %0 : i1 to i32
    %c0_i32_0 = arith.constant 0 : i32
    %2 = arith.cmpi ne, %1, %c0_i32_0 : i32
    scf.if %2 {
      %c0_22 = arith.constant 0 : index
      %c0_23 = arith.constant 0 : index
      %50 = vector.load %arg2[%c0_22, %c0_23] : memref<32x32xf32, #tpu.memory_space<vmem>>, vector<32x32xf32>
      %cst_24 = arith.constant dense<0.000000e+00> : vector<32xf32>
      %51 = vector.multi_reduction <add>, %50, %cst_24 [1] : vector<32x32xf32> to vector<32xf32>
      %52 = vector.shape_cast %51 : vector<32xf32> to vector<32x1xf32>
      %cst_25 = arith.constant 3.200000e+01 : f32
      %53 = vector.broadcast %cst_25 : f32 to vector<32x1xf32>
      %54 = arith.divf %52, %53 : vector<32x1xf32>
      %55 = vector.broadcast %54 : vector<32x1xf32> to vector<32x32xf32>
      %56 = arith.subf %50, %55 : vector<32x32xf32>
      %57 = arith.mulf %56, %56 : vector<32x32xf32>
      %cst_26 = arith.constant dense<0.000000e+00> : vector<32xf32>
      %58 = vector.multi_reduction <add>, %57, %cst_26 [1] : vector<32x32xf32> to vector<32xf32>
      %59 = vector.shape_cast %58 : vector<32xf32> to vector<32x1xf32>
      %cst_27 = arith.constant 3.200000e+01 : f32
      %60 = vector.broadcast %cst_27 : f32 to vector<32x1xf32>
      %61 = arith.divf %59, %60 : vector<32x1xf32>
      %cst_28 = arith.constant 9.99999997E-7 : f32
      %62 = vector.broadcast %cst_28 : f32 to vector<32x1xf32>
      %63 = arith.addf %61, %62 : vector<32x1xf32>
      %64 = math.rsqrt %63 : vector<32x1xf32>
      %65 = vector.broadcast %64 : vector<32x1xf32> to vector<32x32xf32>
      %66 = arith.mulf %56, %65 : vector<32x32xf32>
      %c0_29 = arith.constant 0 : index
      %c0_30 = arith.constant 0 : index
      %67 = vector.load %arg5[%c0_29, %c0_30] : memref<1x32xf32, #tpu.memory_space<vmem>>, vector<1x32xf32>
      %68 = vector.broadcast %67 : vector<1x32xf32> to vector<32x32xf32>
      %69 = arith.mulf %66, %68 : vector<32x32xf32>
      %c0_31 = arith.constant 0 : index
      %c0_32 = arith.constant 0 : index
      %70 = vector.load %arg6[%c0_31, %c0_32] : memref<1x32xf32, #tpu.memory_space<vmem>>, vector<1x32xf32>
      %71 = vector.broadcast %70 : vector<1x32xf32> to vector<32x32xf32>
      %72 = arith.addf %69, %71 : vector<32x32xf32>
      %73 = arith.truncf %72 : vector<32x32xf32> to vector<32x32xbf16>
      %c0_33 = arith.constant 0 : index
      %c0_34 = arith.constant 0 : index
      %74 = vector.load %arg8[%c0_33, %c0_34] : memref<32x32xbf16, #tpu.memory_space<vmem>>, vector<32x32xbf16>
      tpu.vector_store %arg8[%c0_33, %c0_34], %73 {strides = array<i32>} : memref<32x32xbf16, #tpu.memory_space<vmem>>, vector<32x32xbf16>,
    } else {
    }
    %c0 = arith.constant 0 : index
    %c0_1 = arith.constant 0 : index
    %3 = vector.load %arg8[%c0, %c0_1] : memref<32x32xbf16, #tpu.memory_space<vmem>>, vector<32x32xbf16>
    %c0_2 = arith.constant 0 : index
    %c0_3 = arith.constant 0 : index
    %4 = vector.load %arg3[%c0_2, %c0_3] : memref<32x128xbf16, #tpu.memory_space<vmem>>, vector<32x128xbf16>
    %cst = arith.constant dense<0.000000e+00> : vector<32x128xf32>
    %5 = tpu.matmul %3, %4, %cst {dimension_numbers = #tpu.dot_dimension_numbers<[1], [0], [0], [1], [0, 0, 1, 1], [], []>} : vector<32x32xbf16>, vector<32x128xbf16>, vector<32x128xf32> -> vector<32x128xf32>
    %c0_4 = arith.constant 0 : index
    %c0_5 = arith.constant 0 : index
    %6 = vector.load %arg4[%c0_4, %c0_5] : memref<1x128xf32, #tpu.memory_space<vmem>>, vector<1x128xf32>
    %7 = vector.broadcast %6 : vector<1x128xf32> to vector<32x128xf32>
    %8 = arith.addf %5, %7 : vector<32x128xf32>
    %cst_6 = arith.constant 0.707106769 : f32
    %9 = vector.broadcast %cst_6 : f32 to vector<32x128xf32>
    %10 = arith.mulf %8, %9 : vector<32x128xf32>
    %11 = math.absf %10 : vector<32x128xf32>
    %cst_7 = arith.constant 0.327591091 : f32
    %12 = vector.broadcast %cst_7 : f32 to vector<32x128xf32>
    %13 = arith.mulf %12, %11 : vector<32x128xf32>
    %cst_8 = arith.constant 1.000000e+00 : f32
    %14 = vector.broadcast %cst_8 : f32 to vector<32x128xf32>
    %15 = arith.addf %14, %13 : vector<32x128xf32>
    %16 = tpu.reciprocal %15 {approx = true} : vector<32x128xf32> -> vector<32x128xf32>
    %cst_9 = arith.constant 1.06140542 : f32
    %17 = vector.broadcast %cst_9 : f32 to vector<32x128xf32>
    %18 = arith.mulf %17, %16 : vector<32x128xf32>
    %cst_10 = arith.constant 1.45315206 : f32
    %19 = vector.broadcast %cst_10 : f32 to vector<32x128xf32>
    %20 = arith.subf %18, %19 : vector<32x128xf32>
    %21 = arith.mulf %20, %16 : vector<32x128xf32>
    %cst_11 = arith.constant 1.42141378 : f32
    %22 = vector.broadcast %cst_11 : f32 to vector<32x128xf32>
    %23 = arith.addf %21, %22 : vector<32x128xf32>
    %24 = arith.mulf %23, %16 : vector<32x128xf32>
    %cst_12 = arith.constant 0.284496725 : f32
    %25 = vector.broadcast %cst_12 : f32 to vector<32x128xf32>
    %26 = arith.subf %24, %25 : vector<32x128xf32>
    %27 = arith.mulf %26, %16 : vector<32x128xf32>
    %cst_13 = arith.constant 0.254829586 : f32
    %28 = vector.broadcast %cst_13 : f32 to vector<32x128xf32>
    %29 = arith.addf %27, %28 : vector<32x128xf32>
    %30 = arith.mulf %29, %16 : vector<32x128xf32>
    %cst_14 = arith.constant 0.000000e+00 : f32
    %31 = vector.broadcast %cst_14 : f32 to vector<32x128xf32>
    %32 = arith.subf %31, %11 : vector<32x128xf32>
    %33 = arith.mulf %32, %11 : vector<32x128xf32>
    %34 = math.exp %33 : vector<32x128xf32>
    %35 = arith.mulf %30, %34 : vector<32x128xf32>
    %cst_15 = arith.constant 1.000000e+00 : f32
    %36 = vector.broadcast %cst_15 : f32 to vector<32x128xf32>
    %37 = arith.subf %36, %35 : vector<32x128xf32>
    %cst_16 = arith.constant 0.000000e+00 : f32
    %38 = vector.broadcast %cst_16 : f32 to vector<32x128xf32>
    %39 = arith.cmpf olt, %10, %38 : vector<32x128xf32>
    %cst_17 = arith.constant 0.000000e+00 : f32
    %40 = vector.broadcast %cst_17 : f32 to vector<32x128xf32>
    %41 = arith.subf %40, %37 : vector<32x128xf32>
    %42 = arith.select %39, %41, %37 : vector<32x128xi1>, vector<32x128xf32>
    %cst_18 = arith.constant 5.000000e-01 : f32
    %43 = vector.broadcast %cst_18 : f32 to vector<32x128xf32>
    %44 = arith.mulf %43, %8 : vector<32x128xf32>
    %cst_19 = arith.constant 1.000000e+00 : f32
    %45 = vector.broadcast %cst_19 : f32 to vector<32x128xf32>
    %46 = arith.addf %45, %42 : vector<32x128xf32>
    %47 = arith.mulf %44, %46 : vector<32x128xf32>
    %48 = arith.truncf %47 : vector<32x128xf32> to vector<32x128xbf16>
    %c0_20 = arith.constant 0 : index
    %c0_21 = arith.constant 0 : index
    %49 = vector.load %arg7[%c0_20, %c0_21] : memref<32x128xbf16, #tpu.memory_space<vmem>>, vector<32x128xbf16>
    tpu.vector_store %arg7[%c0_20, %c0_21], %48 {strides = array<i32>} : memref<32x128xbf16, #tpu.memory_space<vmem>>, vector<32x128xbf16>,
    return
  }
  func.func @transform_0(%arg0: i32, %arg1: i32) -> (i32, i32) {
    %c0_i32 = arith.constant 0 : i32
    %c0_i32_0 = arith.constant 0 : i32
    return %arg0, %c0_i32 : i32, i32
  }
  func.func @transform_1(%arg0: i32, %arg1: i32) -> (i32, i32) {
    %c0_i32 = arith.constant 0 : i32
    %c0_i32_0 = arith.constant 0 : i32
    return %c0_i32, %arg1 : i32, i32
  }
  func.func @transform_2(%arg0: i32, %arg1: i32) -> (i32, i32) {
    %c0_i32 = arith.constant 0 : i32
    %c0_i32_0 = arith.constant 0 : i32
    return %c0_i32, %arg1 : i32, i32
  }
  func.func @transform_3(%arg0: i32, %arg1: i32) -> (i32, i32) {
    %c0_i32 = arith.constant 0 : i32
    %c0_i32_0 = arith.constant 0 : i32
    %c0_i32_1 = arith.constant 0 : i32
    return %c0_i32, %c0_i32_0 : i32, i32
  }
  func.func @transform_4(%arg0: i32, %arg1: i32) -> (i32, i32) {
    %c0_i32 = arith.constant 0 : i32
    %c0_i32_0 = arith.constant 0 : i32
    %c0_i32_1 = arith.constant 0 : i32
    return %c0_i32, %c0_i32_0 : i32, i32
  }
  func.func @transform_5(%arg0: i32, %arg1: i32) -> (i32, i32) {
    %c0_i32 = arith.constant 0 : i32
    return %arg0, %arg1 : i32, i32
  }
}

module attributes {stable_mosaic.version = 11 : i64} {
  func.func @kernel(%arg0: i32, %arg1: i32, %arg2: memref<32x128xbf16, #tpu.memory_space<vmem>>, %arg3: memref<128x32xbf16, #tpu.memory_space<vmem>>, %arg4: memref<1x32xf32, #tpu.memory_space<vmem>>, %arg5: memref<32x32xf32, #tpu.memory_space<vmem>>, %arg6: memref<32x32xf32, #tpu.memory_space<vmem>>) attributes {dimension_semantics = [#tpu.dimension_semantics<parallel>, #tpu.dimension_semantics<parallel>], iteration_bounds = array<i64: 1, 1>, scalar_prefetch = 0 : i64, scratch_operands = 0 : i64, tpu.core_type = #tpu.core_type<tc>, window_params = [{transform_indices = @transform_0, window_bounds = array<i64: 32, 128>}, {transform_indices = @transform_1, window_bounds = array<i64: 128, 32>}, {transform_indices = @transform_2, window_bounds = array<i64: 1, 32>}, {transform_indices = @transform_3, window_bounds = array<i64: 32, 32>}, {transform_indices = @transform_4, window_bounds = array<i64: 32, 32>}]} {
    %c0 = arith.constant 0 : index
    %c0_0 = arith.constant 0 : index
    %0 = vector.load %arg2[%c0, %c0_0] : memref<32x128xbf16, #tpu.memory_space<vmem>>, vector<32x128xbf16>
    %c0_1 = arith.constant 0 : index
    %c0_2 = arith.constant 0 : index
    %1 = vector.load %arg3[%c0_1, %c0_2] : memref<128x32xbf16, #tpu.memory_space<vmem>>, vector<128x32xbf16>
    %cst = arith.constant dense<0.000000e+00> : vector<32x32xf32>
    %2 = tpu.matmul %0, %1, %cst {dimension_numbers = #tpu.dot_dimension_numbers<[1], [0], [0], [1], [0, 0, 1, 1], [], []>} : vector<32x128xbf16>, vector<128x32xbf16>, vector<32x32xf32> -> vector<32x32xf32>
    %c0_3 = arith.constant 0 : index
    %c0_4 = arith.constant 0 : index
    %3 = vector.load %arg4[%c0_3, %c0_4] : memref<1x32xf32, #tpu.memory_space<vmem>>, vector<1x32xf32>
    %4 = vector.broadcast %3 : vector<1x32xf32> to vector<32x32xf32>
    %5 = arith.addf %2, %4 : vector<32x32xf32>
    %c0_5 = arith.constant 0 : index
    %c0_6 = arith.constant 0 : index
    %6 = vector.load %arg5[%c0_5, %c0_6] : memref<32x32xf32, #tpu.memory_space<vmem>>, vector<32x32xf32>
    %7 = arith.addf %5, %6 : vector<32x32xf32>
    %c0_7 = arith.constant 0 : index
    %c0_8 = arith.constant 0 : index
    %8 = vector.load %arg6[%c0_7, %c0_8] : memref<32x32xf32, #tpu.memory_space<vmem>>, vector<32x32xf32>
    tpu.vector_store %arg6[%c0_7, %c0_8], %7 {strides = array<i32>} : memref<32x32xf32, #tpu.memory_space<vmem>>, vector<32x32xf32>,
    return
  }
  func.func @transform_0(%arg0: i32, %arg1: i32) -> (i32, i32) {
    %c0_i32 = arith.constant 0 : i32
    %c0_i32_0 = arith.constant 0 : i32
    return %arg0, %c0_i32 : i32, i32
  }
  func.func @transform_1(%arg0: i32, %arg1: i32) -> (i32, i32) {
    %c0_i32 = arith.constant 0 : i32
    %c0_i32_0 = arith.constant 0 : i32
    return %c0_i32, %arg1 : i32, i32
  }
  func.func @transform_2(%arg0: i32, %arg1: i32) -> (i32, i32) {
    %c0_i32 = arith.constant 0 : i32
    %c0_i32_0 = arith.constant 0 : i32
    return %c0_i32, %arg1 : i32, i32
  }
  func.func @transform_3(%arg0: i32, %arg1: i32) -> (i32, i32) {
    %c0_i32 = arith.constant 0 : i32
    return %arg0, %arg1 : i32, i32
  }
  func.func @transform_4(%arg0: i32, %arg1: i32) -> (i32, i32) {
    %c0_i32 = arith.constant 0 : i32
    return %arg0, %arg1 : i32, i32
  }
}

module attributes {stable_mosaic.version = 11 : i64} {
  func.func @kernel(%arg0: i32, %arg1: i32, %arg2: memref<32x32xf32, #tpu.memory_space<vmem>>, %arg3: memref<32x256xbf16, #tpu.memory_space<vmem>>, %arg4: memref<1x256xf32, #tpu.memory_space<vmem>>, %arg5: memref<1x32xf32, #tpu.memory_space<vmem>>, %arg6: memref<1x32xf32, #tpu.memory_space<vmem>>, %arg7: memref<32x256xbf16, #tpu.memory_space<vmem>>, %arg8: memref<32x32xbf16, #tpu.memory_space<vmem>>) attributes {dimension_semantics = [#tpu.dimension_semantics<parallel>, #tpu.dimension_semantics<arbitrary>], iteration_bounds = array<i64: 1, 1>, scalar_prefetch = 0 : i64, scratch_operands = 1 : i64, tpu.core_type = #tpu.core_type<tc>, window_params = [{transform_indices = @transform_0, window_bounds = array<i64: 32, 32>}, {transform_indices = @transform_1, window_bounds = array<i64: 32, 256>}, {transform_indices = @transform_2, window_bounds = array<i64: 1, 256>}, {pipeline_mode = #tpu.pipeline_mode<synchronous>, transform_indices = @transform_3, window_bounds = array<i64: 1, 32>}, {pipeline_mode = #tpu.pipeline_mode<synchronous>, transform_indices = @transform_4, window_bounds = array<i64: 1, 32>}, {transform_indices = @transform_5, window_bounds = array<i64: 32, 256>}]} {
    %c0_i32 = arith.constant 0 : i32
    %0 = arith.cmpi eq, %arg1, %c0_i32 : i32
    %1 = arith.extui %0 : i1 to i32
    %c0_i32_0 = arith.constant 0 : i32
    %2 = arith.cmpi ne, %1, %c0_i32_0 : i32
    scf.if %2 {
      %c0_8 = arith.constant 0 : index
      %c0_9 = arith.constant 0 : index
      %11 = vector.load %arg2[%c0_8, %c0_9] : memref<32x32xf32, #tpu.memory_space<vmem>>, vector<32x32xf32>
      %cst_10 = arith.constant dense<0.000000e+00> : vector<32xf32>
      %12 = vector.multi_reduction <add>, %11, %cst_10 [1] : vector<32x32xf32> to vector<32xf32>
      %13 = vector.shape_cast %12 : vector<32xf32> to vector<32x1xf32>
      %cst_11 = arith.constant 3.200000e+01 : f32
      %14 = vector.broadcast %cst_11 : f32 to vector<32x1xf32>
      %15 = arith.divf %13, %14 : vector<32x1xf32>
      %16 = vector.broadcast %15 : vector<32x1xf32> to vector<32x32xf32>
      %17 = arith.subf %11, %16 : vector<32x32xf32>
      %18 = arith.mulf %17, %17 : vector<32x32xf32>
      %cst_12 = arith.constant dense<0.000000e+00> : vector<32xf32>
      %19 = vector.multi_reduction <add>, %18, %cst_12 [1] : vector<32x32xf32> to vector<32xf32>
      %20 = vector.shape_cast %19 : vector<32xf32> to vector<32x1xf32>
      %cst_13 = arith.constant 3.200000e+01 : f32
      %21 = vector.broadcast %cst_13 : f32 to vector<32x1xf32>
      %22 = arith.divf %20, %21 : vector<32x1xf32>
      %cst_14 = arith.constant 9.99999997E-7 : f32
      %23 = vector.broadcast %cst_14 : f32 to vector<32x1xf32>
      %24 = arith.addf %22, %23 : vector<32x1xf32>
      %25 = math.rsqrt %24 : vector<32x1xf32>
      %26 = vector.broadcast %25 : vector<32x1xf32> to vector<32x32xf32>
      %27 = arith.mulf %17, %26 : vector<32x32xf32>
      %c0_15 = arith.constant 0 : index
      %c0_16 = arith.constant 0 : index
      %28 = vector.load %arg5[%c0_15, %c0_16] : memref<1x32xf32, #tpu.memory_space<vmem>>, vector<1x32xf32>
      %29 = vector.broadcast %28 : vector<1x32xf32> to vector<32x32xf32>
      %30 = arith.mulf %27, %29 : vector<32x32xf32>
      %c0_17 = arith.constant 0 : index
      %c0_18 = arith.constant 0 : index
      %31 = vector.load %arg6[%c0_17, %c0_18] : memref<1x32xf32, #tpu.memory_space<vmem>>, vector<1x32xf32>
      %32 = vector.broadcast %31 : vector<1x32xf32> to vector<32x32xf32>
      %33 = arith.addf %30, %32 : vector<32x32xf32>
      %34 = arith.truncf %33 : vector<32x32xf32> to vector<32x32xbf16>
      %c0_19 = arith.constant 0 : index
      %c0_20 = arith.constant 0 : index
      %35 = vector.load %arg8[%c0_19, %c0_20] : memref<32x32xbf16, #tpu.memory_space<vmem>>, vector<32x32xbf16>
      tpu.vector_store %arg8[%c0_19, %c0_20], %34 {strides = array<i32>} : memref<32x32xbf16, #tpu.memory_space<vmem>>, vector<32x32xbf16>,
    } else {
    }
    %c0 = arith.constant 0 : index
    %c0_1 = arith.constant 0 : index
    %3 = vector.load %arg8[%c0, %c0_1] : memref<32x32xbf16, #tpu.memory_space<vmem>>, vector<32x32xbf16>
    %c0_2 = arith.constant 0 : index
    %c0_3 = arith.constant 0 : index
    %4 = vector.load %arg3[%c0_2, %c0_3] : memref<32x256xbf16, #tpu.memory_space<vmem>>, vector<32x256xbf16>
    %cst = arith.constant dense<0.000000e+00> : vector<32x256xf32>
    %5 = tpu.matmul %3, %4, %cst {dimension_numbers = #tpu.dot_dimension_numbers<[1], [0], [0], [1], [0, 0, 1, 1], [], []>} : vector<32x32xbf16>, vector<32x256xbf16>, vector<32x256xf32> -> vector<32x256xf32>
    %c0_4 = arith.constant 0 : index
    %c0_5 = arith.constant 0 : index
    %6 = vector.load %arg4[%c0_4, %c0_5] : memref<1x256xf32, #tpu.memory_space<vmem>>, vector<1x256xf32>
    %7 = vector.broadcast %6 : vector<1x256xf32> to vector<32x256xf32>
    %8 = arith.addf %5, %7 : vector<32x256xf32>
    %9 = arith.truncf %8 : vector<32x256xf32> to vector<32x256xbf16>
    %c0_6 = arith.constant 0 : index
    %c0_7 = arith.constant 0 : index
    %10 = vector.load %arg7[%c0_6, %c0_7] : memref<32x256xbf16, #tpu.memory_space<vmem>>, vector<32x256xbf16>
    tpu.vector_store %arg7[%c0_6, %c0_7], %9 {strides = array<i32>} : memref<32x256xbf16, #tpu.memory_space<vmem>>, vector<32x256xbf16>,
    return
  }
  func.func @transform_0(%arg0: i32, %arg1: i32) -> (i32, i32) {
    %c0_i32 = arith.constant 0 : i32
    %c0_i32_0 = arith.constant 0 : i32
    return %arg0, %c0_i32 : i32, i32
  }
  func.func @transform_1(%arg0: i32, %arg1: i32) -> (i32, i32) {
    %c0_i32 = arith.constant 0 : i32
    %c0_i32_0 = arith.constant 0 : i32
    return %c0_i32, %arg1 : i32, i32
  }
  func.func @transform_2(%arg0: i32, %arg1: i32) -> (i32, i32) {
    %c0_i32 = arith.constant 0 : i32
    %c0_i32_0 = arith.constant 0 : i32
    return %c0_i32, %arg1 : i32, i32
  }
  func.func @transform_3(%arg0: i32, %arg1: i32) -> (i32, i32) {
    %c0_i32 = arith.constant 0 : i32
    %c0_i32_0 = arith.constant 0 : i32
    %c0_i32_1 = arith.constant 0 : i32
    return %c0_i32, %c0_i32_0 : i32, i32
  }
  func.func @transform_4(%arg0: i32, %arg1: i32) -> (i32, i32) {
    %c0_i32 = arith.constant 0 : i32
    %c0_i32_0 = arith.constant 0 : i32
    %c0_i32_1 = arith.constant 0 : i32
    return %c0_i32, %c0_i32_0 : i32, i32
  }
  func.func @transform_5(%arg0: i32, %arg1: i32) -> (i32, i32) {
    %c0_i32 = arith.constant 0 : i32
    return %arg0, %arg1 : i32, i32
  }
}

module attributes {stable_mosaic.version = 11 : i64} {
  func.func @_deconv_phase_kernel(%arg0: i32, %arg1: memref<1x4x4x256xbf16, #tpu.memory_space<vmem>>, %arg2: memref<1x16xf32, #tpu.memory_space<vmem>>, %arg3: memref<1x16xf32, #tpu.memory_space<vmem>>, %arg4: memref<4x2x4x32xbf16, #tpu.memory_space<vmem>>) attributes {dimension_semantics = [#tpu.dimension_semantics<parallel>], iteration_bounds = array<i64: 2>, scalar_prefetch = 0 : i64, scratch_operands = 0 : i64, tpu.core_type = #tpu.core_type<tc>, window_params = [{transform_indices = @transform_0, window_bounds = array<i64: 1, 4, 4, 256>}, {pipeline_mode = #tpu.pipeline_mode<synchronous>, transform_indices = @transform_1, window_bounds = array<i64: 1, 16>}, {pipeline_mode = #tpu.pipeline_mode<synchronous>, transform_indices = @transform_2, window_bounds = array<i64: 1, 16>}, {transform_indices = @transform_3, window_bounds = array<i64: 4, 2, 4, 32>}]} {
    %c0 = arith.constant 0 : index
    %c0_0 = arith.constant 0 : index
    %0 = vector.load %arg2[%c0, %c0_0] : memref<1x16xf32, #tpu.memory_space<vmem>>, vector<1x16xf32>
    %c0_1 = arith.constant 0 : index
    %c0_2 = arith.constant 0 : index
    %1 = vector.load %arg3[%c0_1, %c0_2] : memref<1x16xf32, #tpu.memory_space<vmem>>, vector<1x16xf32>
    %c0_3 = arith.constant 0 : index
    %c0_4 = arith.constant 0 : index
    %c0_5 = arith.constant 0 : index
    %c80 = arith.constant 80 : index
    %2 = vector.load %arg1[%c0_3, %c0_4, %c0_5, %c80] : memref<1x4x4x256xbf16, #tpu.memory_space<vmem>>, vector<1x4x4x16xbf16>
    %3 = vector.shape_cast %2 : vector<1x4x4x16xbf16> to vector<4x4x16xbf16>
    %4 = arith.extf %3 : vector<4x4x16xbf16> to vector<4x4x16xf32>
    %c0_6 = arith.constant 0 : index
    %c0_7 = arith.constant 0 : index
    %c0_8 = arith.constant 0 : index
    %c112 = arith.constant 112 : index
    %5 = vector.load %arg1[%c0_6, %c0_7, %c0_8, %c112] : memref<1x4x4x256xbf16, #tpu.memory_space<vmem>>, vector<1x4x4x16xbf16>
    %6 = vector.shape_cast %5 : vector<1x4x4x16xbf16> to vector<4x4x16xbf16>
    %7 = arith.extf %6 : vector<4x4x16xbf16> to vector<4x4x16xf32>
    %cst = arith.constant 0.000000e+00 : f32
    %8 = vector.broadcast %cst : f32 to vector<4x1x16xf32>
    %9 = vector.extract_strided_slice %7 {offsets = [0, 0, 0], sizes = [4, 3, 16], strides = [1, 1, 1]} : vector<4x4x16xf32> to vector<4x3x16xf32>
    %10 = tpu.concatenate %8, %9 in 1 : vector<4x1x16xf32>, vector<4x3x16xf32> -> vector<4x4x16xf32>
    %11 = arith.addf %4, %10 : vector<4x4x16xf32>
    %c0_9 = arith.constant 0 : index
    %c0_10 = arith.constant 0 : index
    %c0_11 = arith.constant 0 : index
    %c208 = arith.constant 208 : index
    %12 = vector.load %arg1[%c0_9, %c0_10, %c0_11, %c208] : memref<1x4x4x256xbf16, #tpu.memory_space<vmem>>, vector<1x4x4x16xbf16>
    %13 = vector.shape_cast %12 : vector<1x4x4x16xbf16> to vector<4x4x16xbf16>
    %14 = arith.extf %13 : vector<4x4x16xbf16> to vector<4x4x16xf32>
    %cst_12 = arith.constant 0.000000e+00 : f32
    %15 = vector.broadcast %cst_12 : f32 to vector<1x4x16xf32>
    %16 = vector.extract_strided_slice %14 {offsets = [0, 0, 0], sizes = [3, 4, 16], strides = [1, 1, 1]} : vector<4x4x16xf32> to vector<3x4x16xf32>
    %17 = tpu.concatenate %15, %16 in 0 : vector<1x4x16xf32>, vector<3x4x16xf32> -> vector<4x4x16xf32>
    %18 = arith.addf %11, %17 : vector<4x4x16xf32>
    %c0_13 = arith.constant 0 : index
    %c0_14 = arith.constant 0 : index
    %c0_15 = arith.constant 0 : index
    %c240 = arith.constant 240 : index
    %19 = vector.load %arg1[%c0_13, %c0_14, %c0_15, %c240] : memref<1x4x4x256xbf16, #tpu.memory_space<vmem>>, vector<1x4x4x16xbf16>
    %20 = vector.shape_cast %19 : vector<1x4x4x16xbf16> to vector<4x4x16xbf16>
    %21 = arith.extf %20 : vector<4x4x16xbf16> to vector<4x4x16xf32>
    %cst_16 = arith.constant 0.000000e+00 : f32
    %22 = vector.broadcast %cst_16 : f32 to vector<1x4x16xf32>
    %23 = vector.extract_strided_slice %21 {offsets = [0, 0, 0], sizes = [3, 4, 16], strides = [1, 1, 1]} : vector<4x4x16xf32> to vector<3x4x16xf32>
    %24 = tpu.concatenate %22, %23 in 0 : vector<1x4x16xf32>, vector<3x4x16xf32> -> vector<4x4x16xf32>
    %cst_17 = arith.constant 0.000000e+00 : f32
    %25 = vector.broadcast %cst_17 : f32 to vector<4x1x16xf32>
    %26 = vector.extract_strided_slice %24 {offsets = [0, 0, 0], sizes = [4, 3, 16], strides = [1, 1, 1]} : vector<4x4x16xf32> to vector<4x3x16xf32>
    %27 = tpu.concatenate %25, %26 in 1 : vector<4x1x16xf32>, vector<4x3x16xf32> -> vector<4x4x16xf32>
    %28 = arith.addf %18, %27 : vector<4x4x16xf32>
    %29 = vector.shape_cast %0 : vector<1x16xf32> to vector<1x1x16xf32>
    %30 = vector.broadcast %29 : vector<1x1x16xf32> to vector<4x4x16xf32>
    %31 = arith.mulf %28, %30 : vector<4x4x16xf32>
    %32 = vector.shape_cast %1 : vector<1x16xf32> to vector<1x1x16xf32>
    %33 = vector.broadcast %32 : vector<1x1x16xf32> to vector<4x4x16xf32>
    %34 = arith.addf %31, %33 : vector<4x4x16xf32>
    %cst_18 = arith.constant 0.000000e+00 : f32
    %35 = vector.broadcast %cst_18 : f32 to vector<4x4x16xf32>
    %36 = arith.maximumf %34, %35 : vector<4x4x16xf32>
    %37 = arith.truncf %36 : vector<4x4x16xf32> to vector<4x4x16xbf16>
    %c0_19 = arith.constant 0 : index
    %c0_20 = arith.constant 0 : index
    %c0_21 = arith.constant 0 : index
    %c64 = arith.constant 64 : index
    %38 = vector.load %arg1[%c0_19, %c0_20, %c0_21, %c64] : memref<1x4x4x256xbf16, #tpu.memory_space<vmem>>, vector<1x4x4x16xbf16>
    %39 = vector.shape_cast %38 : vector<1x4x4x16xbf16> to vector<4x4x16xbf16>
    %40 = arith.extf %39 : vector<4x4x16xbf16> to vector<4x4x16xf32>
    %cst_22 = arith.constant 0.000000e+00 : f32
    %41 = vector.broadcast %cst_22 : f32 to vector<4x1x16xf32>
    %42 = vector.extract_strided_slice %40 {offsets = [0, 1, 0], sizes = [4, 3, 16], strides = [1, 1, 1]} : vector<4x4x16xf32> to vector<4x3x16xf32>
    %43 = tpu.concatenate %42, %41 in 1 : vector<4x3x16xf32>, vector<4x1x16xf32> -> vector<4x4x16xf32>
    %c0_23 = arith.constant 0 : index
    %c0_24 = arith.constant 0 : index
    %c0_25 = arith.constant 0 : index
    %c96 = arith.constant 96 : index
    %44 = vector.load %arg1[%c0_23, %c0_24, %c0_25, %c96] : memref<1x4x4x256xbf16, #tpu.memory_space<vmem>>, vector<1x4x4x16xbf16>
    %45 = vector.shape_cast %44 : vector<1x4x4x16xbf16> to vector<4x4x16xbf16>
    %46 = arith.extf %45 : vector<4x4x16xbf16> to vector<4x4x16xf32>
    %47 = arith.addf %43, %46 : vector<4x4x16xf32>
    %c0_26 = arith.constant 0 : index
    %c0_27 = arith.constant 0 : index
    %c0_28 = arith.constant 0 : index
    %c192 = arith.constant 192 : index
    %48 = vector.load %arg1[%c0_26, %c0_27, %c0_28, %c192] : memref<1x4x4x256xbf16, #tpu.memory_space<vmem>>, vector<1x4x4x16xbf16>
    %49 = vector.shape_cast %48 : vector<1x4x4x16xbf16> to vector<4x4x16xbf16>
    %50 = arith.extf %49 : vector<4x4x16xbf16> to vector<4x4x16xf32>
    %cst_29 = arith.constant 0.000000e+00 : f32
    %51 = vector.broadcast %cst_29 : f32 to vector<1x4x16xf32>
    %52 = vector.extract_strided_slice %50 {offsets = [0, 0, 0], sizes = [3, 4, 16], strides = [1, 1, 1]} : vector<4x4x16xf32> to vector<3x4x16xf32>
    %53 = tpu.concatenate %51, %52 in 0 : vector<1x4x16xf32>, vector<3x4x16xf32> -> vector<4x4x16xf32>
    %cst_30 = arith.constant 0.000000e+00 : f32
    %54 = vector.broadcast %cst_30 : f32 to vector<4x1x16xf32>
    %55 = vector.extract_strided_slice %53 {offsets = [0, 1, 0], sizes = [4, 3, 16], strides = [1, 1, 1]} : vector<4x4x16xf32> to vector<4x3x16xf32>
    %56 = tpu.concatenate %55, %54 in 1 : vector<4x3x16xf32>, vector<4x1x16xf32> -> vector<4x4x16xf32>
    %57 = arith.addf %47, %56 : vector<4x4x16xf32>
    %c0_31 = arith.constant 0 : index
    %c0_32 = arith.constant 0 : index
    %c0_33 = arith.constant 0 : index
    %c224 = arith.constant 224 : index
    %58 = vector.load %arg1[%c0_31, %c0_32, %c0_33, %c224] : memref<1x4x4x256xbf16, #tpu.memory_space<vmem>>, vector<1x4x4x16xbf16>
    %59 = vector.shape_cast %58 : vector<1x4x4x16xbf16> to vector<4x4x16xbf16>
    %60 = arith.extf %59 : vector<4x4x16xbf16> to vector<4x4x16xf32>
    %cst_34 = arith.constant 0.000000e+00 : f32
    %61 = vector.broadcast %cst_34 : f32 to vector<1x4x16xf32>
    %62 = vector.extract_strided_slice %60 {offsets = [0, 0, 0], sizes = [3, 4, 16], strides = [1, 1, 1]} : vector<4x4x16xf32> to vector<3x4x16xf32>
    %63 = tpu.concatenate %61, %62 in 0 : vector<1x4x16xf32>, vector<3x4x16xf32> -> vector<4x4x16xf32>
    %64 = arith.addf %57, %63 : vector<4x4x16xf32>
    %65 = vector.shape_cast %0 : vector<1x16xf32> to vector<1x1x16xf32>
    %66 = vector.broadcast %65 : vector<1x1x16xf32> to vector<4x4x16xf32>
    %67 = arith.mulf %64, %66 : vector<4x4x16xf32>
    %68 = vector.shape_cast %1 : vector<1x16xf32> to vector<1x1x16xf32>
    %69 = vector.broadcast %68 : vector<1x1x16xf32> to vector<4x4x16xf32>
    %70 = arith.addf %67, %69 : vector<4x4x16xf32>
    %cst_35 = arith.constant 0.000000e+00 : f32
    %71 = vector.broadcast %cst_35 : f32 to vector<4x4x16xf32>
    %72 = arith.maximumf %70, %71 : vector<4x4x16xf32>
    %73 = arith.truncf %72 : vector<4x4x16xf32> to vector<4x4x16xbf16>
    %74 = tpu.concatenate %37, %73 in 2 : vector<4x4x16xbf16>, vector<4x4x16xbf16> -> vector<4x4x32xbf16>
    %c0_36 = arith.constant 0 : index
    %c0_37 = arith.constant 0 : index
    %c0_38 = arith.constant 0 : index
    %c16 = arith.constant 16 : index
    %75 = vector.load %arg1[%c0_36, %c0_37, %c0_38, %c16] : memref<1x4x4x256xbf16, #tpu.memory_space<vmem>>, vector<1x4x4x16xbf16>
    %76 = vector.shape_cast %75 : vector<1x4x4x16xbf16> to vector<4x4x16xbf16>
    %77 = arith.extf %76 : vector<4x4x16xbf16> to vector<4x4x16xf32>
    %cst_39 = arith.constant 0.000000e+00 : f32
    %78 = vector.broadcast %cst_39 : f32 to vector<1x4x16xf32>
    %79 = vector.extract_strided_slice %77 {offsets = [1, 0, 0], sizes = [3, 4, 16], strides = [1, 1, 1]} : vector<4x4x16xf32> to vector<3x4x16xf32>
    %80 = tpu.concatenate %79, %78 in 0 : vector<3x4x16xf32>, vector<1x4x16xf32> -> vector<4x4x16xf32>
    %c0_40 = arith.constant 0 : index
    %c0_41 = arith.constant 0 : index
    %c0_42 = arith.constant 0 : index
    %c48 = arith.constant 48 : index
    %81 = vector.load %arg1[%c0_40, %c0_41, %c0_42, %c48] : memref<1x4x4x256xbf16, #tpu.memory_space<vmem>>, vector<1x4x4x16xbf16>
    %82 = vector.shape_cast %81 : vector<1x4x4x16xbf16> to vector<4x4x16xbf16>
    %83 = arith.extf %82 : vector<4x4x16xbf16> to vector<4x4x16xf32>
    %cst_43 = arith.constant 0.000000e+00 : f32
    %84 = vector.broadcast %cst_43 : f32 to vector<1x4x16xf32>
    %85 = vector.extract_strided_slice %83 {offsets = [1, 0, 0], sizes = [3, 4, 16], strides = [1, 1, 1]} : vector<4x4x16xf32> to vector<3x4x16xf32>
    %86 = tpu.concatenate %85, %84 in 0 : vector<3x4x16xf32>, vector<1x4x16xf32> -> vector<4x4x16xf32>
    %cst_44 = arith.constant 0.000000e+00 : f32
    %87 = vector.broadcast %cst_44 : f32 to vector<4x1x16xf32>
    %88 = vector.extract_strided_slice %86 {offsets = [0, 0, 0], sizes = [4, 3, 16], strides = [1, 1, 1]} : vector<4x4x16xf32> to vector<4x3x16xf32>
    %89 = tpu.concatenate %87, %88 in 1 : vector<4x1x16xf32>, vector<4x3x16xf32> -> vector<4x4x16xf32>
    %90 = arith.addf %80, %89 : vector<4x4x16xf32>
    %c0_45 = arith.constant 0 : index
    %c0_46 = arith.constant 0 : index
    %c0_47 = arith.constant 0 : index
    %c144 = arith.constant 144 : index
    %91 = vector.load %arg1[%c0_45, %c0_46, %c0_47, %c144] : memref<1x4x4x256xbf16, #tpu.memory_space<vmem>>, vector<1x4x4x16xbf16>
    %92 = vector.shape_cast %91 : vector<1x4x4x16xbf16> to vector<4x4x16xbf16>
    %93 = arith.extf %92 : vector<4x4x16xbf16> to vector<4x4x16xf32>
    %94 = arith.addf %90, %93 : vector<4x4x16xf32>
    %c0_48 = arith.constant 0 : index
    %c0_49 = arith.constant 0 : index
    %c0_50 = arith.constant 0 : index
    %c176 = arith.constant 176 : index
    %95 = vector.load %arg1[%c0_48, %c0_49, %c0_50, %c176] : memref<1x4x4x256xbf16, #tpu.memory_space<vmem>>, vector<1x4x4x16xbf16>
    %96 = vector.shape_cast %95 : vector<1x4x4x16xbf16> to vector<4x4x16xbf16>
    %97 = arith.extf %96 : vector<4x4x16xbf16> to vector<4x4x16xf32>
    %cst_51 = arith.constant 0.000000e+00 : f32
    %98 = vector.broadcast %cst_51 : f32 to vector<4x1x16xf32>
    %99 = vector.extract_strided_slice %97 {offsets = [0, 0, 0], sizes = [4, 3, 16], strides = [1, 1, 1]} : vector<4x4x16xf32> to vector<4x3x16xf32>
    %100 = tpu.concatenate %98, %99 in 1 : vector<4x1x16xf32>, vector<4x3x16xf32> -> vector<4x4x16xf32>
    %101 = arith.addf %94, %100 : vector<4x4x16xf32>
    %102 = vector.shape_cast %0 : vector<1x16xf32> to vector<1x1x16xf32>
    %103 = vector.broadcast %102 : vector<1x1x16xf32> to vector<4x4x16xf32>
    %104 = arith.mulf %101, %103 : vector<4x4x16xf32>
    %105 = vector.shape_cast %1 : vector<1x16xf32> to vector<1x1x16xf32>
    %106 = vector.broadcast %105 : vector<1x1x16xf32> to vector<4x4x16xf32>
    %107 = arith.addf %104, %106 : vector<4x4x16xf32>
    %cst_52 = arith.constant 0.000000e+00 : f32
    %108 = vector.broadcast %cst_52 : f32 to vector<4x4x16xf32>
    %109 = arith.maximumf %107, %108 : vector<4x4x16xf32>
    %110 = arith.truncf %109 : vector<4x4x16xf32> to vector<4x4x16xbf16>
    %c0_53 = arith.constant 0 : index
    %c0_54 = arith.constant 0 : index
    %c0_55 = arith.constant 0 : index
    %c0_56 = arith.constant 0 : index
    %111 = vector.load %arg1[%c0_53, %c0_54, %c0_55, %c0_56] : memref<1x4x4x256xbf16, #tpu.memory_space<vmem>>, vector<1x4x4x16xbf16>
    %112 = vector.shape_cast %111 : vector<1x4x4x16xbf16> to vector<4x4x16xbf16>
    %113 = arith.extf %112 : vector<4x4x16xbf16> to vector<4x4x16xf32>
    %cst_57 = arith.constant 0.000000e+00 : f32
    %114 = vector.broadcast %cst_57 : f32 to vector<1x4x16xf32>
    %115 = vector.extract_strided_slice %113 {offsets = [1, 0, 0], sizes = [3, 4, 16], strides = [1, 1, 1]} : vector<4x4x16xf32> to vector<3x4x16xf32>
    %116 = tpu.concatenate %115, %114 in 0 : vector<3x4x16xf32>, vector<1x4x16xf32> -> vector<4x4x16xf32>
    %cst_58 = arith.constant 0.000000e+00 : f32
    %117 = vector.broadcast %cst_58 : f32 to vector<4x1x16xf32>
    %118 = vector.extract_strided_slice %116 {offsets = [0, 1, 0], sizes = [4, 3, 16], strides = [1, 1, 1]} : vector<4x4x16xf32> to vector<4x3x16xf32>
    %119 = tpu.concatenate %118, %117 in 1 : vector<4x3x16xf32>, vector<4x1x16xf32> -> vector<4x4x16xf32>
    %c0_59 = arith.constant 0 : index
    %c0_60 = arith.constant 0 : index
    %c0_61 = arith.constant 0 : index
    %c32 = arith.constant 32 : index
    %120 = vector.load %arg1[%c0_59, %c0_60, %c0_61, %c32] : memref<1x4x4x256xbf16, #tpu.memory_space<vmem>>, vector<1x4x4x16xbf16>
    %121 = vector.shape_cast %120 : vector<1x4x4x16xbf16> to vector<4x4x16xbf16>
    %122 = arith.extf %121 : vector<4x4x16xbf16> to vector<4x4x16xf32>
    %cst_62 = arith.constant 0.000000e+00 : f32
    %123 = vector.broadcast %cst_62 : f32 to vector<1x4x16xf32>
    %124 = vector.extract_strided_slice %122 {offsets = [1, 0, 0], sizes = [3, 4, 16], strides = [1, 1, 1]} : vector<4x4x16xf32> to vector<3x4x16xf32>
    %125 = tpu.concatenate %124, %123 in 0 : vector<3x4x16xf32>, vector<1x4x16xf32> -> vector<4x4x16xf32>
    %126 = arith.addf %119, %125 : vector<4x4x16xf32>
    %c0_63 = arith.constant 0 : index
    %c0_64 = arith.constant 0 : index
    %c0_65 = arith.constant 0 : index
    %c128 = arith.constant 128 : index
    %127 = vector.load %arg1[%c0_63, %c0_64, %c0_65, %c128] : memref<1x4x4x256xbf16, #tpu.memory_space<vmem>>, vector<1x4x4x16xbf16>
    %128 = vector.shape_cast %127 : vector<1x4x4x16xbf16> to vector<4x4x16xbf16>
    %129 = arith.extf %128 : vector<4x4x16xbf16> to vector<4x4x16xf32>
    %cst_66 = arith.constant 0.000000e+00 : f32
    %130 = vector.broadcast %cst_66 : f32 to vector<4x1x16xf32>
    %131 = vector.extract_strided_slice %129 {offsets = [0, 1, 0], sizes = [4, 3, 16], strides = [1, 1, 1]} : vector<4x4x16xf32> to vector<4x3x16xf32>
    %132 = tpu.concatenate %131, %130 in 1 : vector<4x3x16xf32>, vector<4x1x16xf32> -> vector<4x4x16xf32>
    %133 = arith.addf %126, %132 : vector<4x4x16xf32>
    %c0_67 = arith.constant 0 : index
    %c0_68 = arith.constant 0 : index
    %c0_69 = arith.constant 0 : index
    %c160 = arith.constant 160 : index
    %134 = vector.load %arg1[%c0_67, %c0_68, %c0_69, %c160] : memref<1x4x4x256xbf16, #tpu.memory_space<vmem>>, vector<1x4x4x16xbf16>
    %135 = vector.shape_cast %134 : vector<1x4x4x16xbf16> to vector<4x4x16xbf16>
    %136 = arith.extf %135 : vector<4x4x16xbf16> to vector<4x4x16xf32>
    %137 = arith.addf %133, %136 : vector<4x4x16xf32>
    %138 = vector.shape_cast %0 : vector<1x16xf32> to vector<1x1x16xf32>
    %139 = vector.broadcast %138 : vector<1x1x16xf32> to vector<4x4x16xf32>
    %140 = arith.mulf %137, %139 : vector<4x4x16xf32>
    %141 = vector.shape_cast %1 : vector<1x16xf32> to vector<1x1x16xf32>
    %142 = vector.broadcast %141 : vector<1x1x16xf32> to vector<4x4x16xf32>
    %143 = arith.addf %140, %142 : vector<4x4x16xf32>
    %cst_70 = arith.constant 0.000000e+00 : f32
    %144 = vector.broadcast %cst_70 : f32 to vector<4x4x16xf32>
    %145 = arith.maximumf %143, %144 : vector<4x4x16xf32>
    %146 = arith.truncf %145 : vector<4x4x16xf32> to vector<4x4x16xbf16>
    %147 = tpu.concatenate %110, %146 in 2 : vector<4x4x16xbf16>, vector<4x4x16xbf16> -> vector<4x4x32xbf16>
    %148 = vector.shape_cast %74 : vector<4x4x32xbf16> to vector<4x1x4x32xbf16>
    %149 = vector.shape_cast %147 : vector<4x4x32xbf16> to vector<4x1x4x32xbf16>
    %150 = tpu.concatenate %148, %149 in 1 : vector<4x1x4x32xbf16>, vector<4x1x4x32xbf16> -> vector<4x2x4x32xbf16>
    %c0_71 = arith.constant 0 : index
    %c0_72 = arith.constant 0 : index
    %c0_73 = arith.constant 0 : index
    %c0_74 = arith.constant 0 : index
    %151 = vector.load %arg4[%c0_71, %c0_72, %c0_73, %c0_74] : memref<4x2x4x32xbf16, #tpu.memory_space<vmem>>, vector<4x2x4x32xbf16>
    tpu.vector_store %arg4[%c0_71, %c0_72, %c0_73, %c0_74], %150 {strides = array<i32>} : memref<4x2x4x32xbf16, #tpu.memory_space<vmem>>, vector<4x2x4x32xbf16>,
    return
  }
  func.func @transform_0(%arg0: i32) -> (i32, i32, i32, i32) {
    %c0_i32 = arith.constant 0 : i32
    %c0_i32_0 = arith.constant 0 : i32
    %c0_i32_1 = arith.constant 0 : i32
    %c0_i32_2 = arith.constant 0 : i32
    return %arg0, %c0_i32, %c0_i32_0, %c0_i32_1 : i32, i32, i32, i32
  }
  func.func @transform_1(%arg0: i32) -> (i32, i32) {
    %c0_i32 = arith.constant 0 : i32
    %c0_i32_0 = arith.constant 0 : i32
    %c0_i32_1 = arith.constant 0 : i32
    return %c0_i32, %c0_i32_0 : i32, i32
  }
  func.func @transform_2(%arg0: i32) -> (i32, i32) {
    %c0_i32 = arith.constant 0 : i32
    %c0_i32_0 = arith.constant 0 : i32
    %c0_i32_1 = arith.constant 0 : i32
    return %c0_i32, %c0_i32_0 : i32, i32
  }
  func.func @transform_3(%arg0: i32) -> (i32, i32, i32, i32) {
    %c0_i32 = arith.constant 0 : i32
    %c0_i32_0 = arith.constant 0 : i32
    %c0_i32_1 = arith.constant 0 : i32
    %c0_i32_2 = arith.constant 0 : i32
    return %arg0, %c0_i32, %c0_i32_0, %c0_i32_1 : i32, i32, i32, i32
  }
}

module attributes {stable_mosaic.version = 11 : i64} {
  func.func @kernel(%arg0: i32, %arg1: i32, %arg2: memref<128x16xbf16, #tpu.memory_space<vmem>>, %arg3: memref<16x256xbf16, #tpu.memory_space<vmem>>, %arg4: memref<1x256xf32, #tpu.memory_space<vmem>>, %arg5: memref<128x256xbf16, #tpu.memory_space<vmem>>) attributes {dimension_semantics = [#tpu.dimension_semantics<parallel>, #tpu.dimension_semantics<parallel>], iteration_bounds = array<i64: 1, 1>, scalar_prefetch = 0 : i64, scratch_operands = 0 : i64, tpu.core_type = #tpu.core_type<tc>, window_params = [{transform_indices = @transform_0, window_bounds = array<i64: 128, 16>}, {transform_indices = @transform_1, window_bounds = array<i64: 16, 256>}, {transform_indices = @transform_2, window_bounds = array<i64: 1, 256>}, {transform_indices = @transform_3, window_bounds = array<i64: 128, 256>}]} {
    %c0 = arith.constant 0 : index
    %c0_0 = arith.constant 0 : index
    %0 = vector.load %arg2[%c0, %c0_0] : memref<128x16xbf16, #tpu.memory_space<vmem>>, vector<128x16xbf16>
    %c0_1 = arith.constant 0 : index
    %c0_2 = arith.constant 0 : index
    %1 = vector.load %arg3[%c0_1, %c0_2] : memref<16x256xbf16, #tpu.memory_space<vmem>>, vector<16x256xbf16>
    %cst = arith.constant dense<0.000000e+00> : vector<128x256xf32>
    %2 = tpu.matmul %0, %1, %cst {dimension_numbers = #tpu.dot_dimension_numbers<[1], [0], [0], [1], [0, 0, 1, 1], [], []>} : vector<128x16xbf16>, vector<16x256xbf16>, vector<128x256xf32> -> vector<128x256xf32>
    %c0_3 = arith.constant 0 : index
    %c0_4 = arith.constant 0 : index
    %3 = vector.load %arg4[%c0_3, %c0_4] : memref<1x256xf32, #tpu.memory_space<vmem>>, vector<1x256xf32>
    %4 = vector.broadcast %3 : vector<1x256xf32> to vector<128x256xf32>
    %5 = arith.addf %2, %4 : vector<128x256xf32>
    %6 = arith.truncf %5 : vector<128x256xf32> to vector<128x256xbf16>
    %c0_5 = arith.constant 0 : index
    %c0_6 = arith.constant 0 : index
    %7 = vector.load %arg5[%c0_5, %c0_6] : memref<128x256xbf16, #tpu.memory_space<vmem>>, vector<128x256xbf16>
    tpu.vector_store %arg5[%c0_5, %c0_6], %6 {strides = array<i32>} : memref<128x256xbf16, #tpu.memory_space<vmem>>, vector<128x256xbf16>,
    return
  }
  func.func @transform_0(%arg0: i32, %arg1: i32) -> (i32, i32) {
    %c0_i32 = arith.constant 0 : i32
    %c0_i32_0 = arith.constant 0 : i32
    return %arg0, %c0_i32 : i32, i32
  }
  func.func @transform_1(%arg0: i32, %arg1: i32) -> (i32, i32) {
    %c0_i32 = arith.constant 0 : i32
    %c0_i32_0 = arith.constant 0 : i32
    return %c0_i32, %arg1 : i32, i32
  }
  func.func @transform_2(%arg0: i32, %arg1: i32) -> (i32, i32) {
    %c0_i32 = arith.constant 0 : i32
    %c0_i32_0 = arith.constant 0 : i32
    return %c0_i32, %arg1 : i32, i32
  }
  func.func @transform_3(%arg0: i32, %arg1: i32) -> (i32, i32) {
    %c0_i32 = arith.constant 0 : i32
    return %arg0, %arg1 : i32, i32
  }
}

module attributes {stable_mosaic.version = 11 : i64} {
  func.func @_deconv_phase_kernel(%arg0: i32, %arg1: memref<1x8x8x256xbf16, #tpu.memory_space<vmem>>, %arg2: memref<1x16xf32, #tpu.memory_space<vmem>>, %arg3: memref<1x16xf32, #tpu.memory_space<vmem>>, %arg4: memref<8x2x8x32xbf16, #tpu.memory_space<vmem>>) attributes {dimension_semantics = [#tpu.dimension_semantics<parallel>], iteration_bounds = array<i64: 2>, scalar_prefetch = 0 : i64, scratch_operands = 0 : i64, tpu.core_type = #tpu.core_type<tc>, window_params = [{transform_indices = @transform_0, window_bounds = array<i64: 1, 8, 8, 256>}, {pipeline_mode = #tpu.pipeline_mode<synchronous>, transform_indices = @transform_1, window_bounds = array<i64: 1, 16>}, {pipeline_mode = #tpu.pipeline_mode<synchronous>, transform_indices = @transform_2, window_bounds = array<i64: 1, 16>}, {transform_indices = @transform_3, window_bounds = array<i64: 8, 2, 8, 32>}]} {
    %c0 = arith.constant 0 : index
    %c0_0 = arith.constant 0 : index
    %0 = vector.load %arg2[%c0, %c0_0] : memref<1x16xf32, #tpu.memory_space<vmem>>, vector<1x16xf32>
    %c0_1 = arith.constant 0 : index
    %c0_2 = arith.constant 0 : index
    %1 = vector.load %arg3[%c0_1, %c0_2] : memref<1x16xf32, #tpu.memory_space<vmem>>, vector<1x16xf32>
    %c0_3 = arith.constant 0 : index
    %c0_4 = arith.constant 0 : index
    %c0_5 = arith.constant 0 : index
    %c80 = arith.constant 80 : index
    %2 = vector.load %arg1[%c0_3, %c0_4, %c0_5, %c80] : memref<1x8x8x256xbf16, #tpu.memory_space<vmem>>, vector<1x8x8x16xbf16>
    %3 = vector.shape_cast %2 : vector<1x8x8x16xbf16> to vector<8x8x16xbf16>
    %4 = arith.extf %3 : vector<8x8x16xbf16> to vector<8x8x16xf32>
    %c0_6 = arith.constant 0 : index
    %c0_7 = arith.constant 0 : index
    %c0_8 = arith.constant 0 : index
    %c112 = arith.constant 112 : index
    %5 = vector.load %arg1[%c0_6, %c0_7, %c0_8, %c112] : memref<1x8x8x256xbf16, #tpu.memory_space<vmem>>, vector<1x8x8x16xbf16>
    %6 = vector.shape_cast %5 : vector<1x8x8x16xbf16> to vector<8x8x16xbf16>
    %7 = arith.extf %6 : vector<8x8x16xbf16> to vector<8x8x16xf32>
    %cst = arith.constant 0.000000e+00 : f32
    %8 = vector.broadcast %cst : f32 to vector<8x1x16xf32>
    %9 = vector.extract_strided_slice %7 {offsets = [0, 0, 0], sizes = [8, 7, 16], strides = [1, 1, 1]} : vector<8x8x16xf32> to vector<8x7x16xf32>
    %10 = tpu.concatenate %8, %9 in 1 : vector<8x1x16xf32>, vector<8x7x16xf32> -> vector<8x8x16xf32>
    %11 = arith.addf %4, %10 : vector<8x8x16xf32>
    %c0_9 = arith.constant 0 : index
    %c0_10 = arith.constant 0 : index
    %c0_11 = arith.constant 0 : index
    %c208 = arith.constant 208 : index
    %12 = vector.load %arg1[%c0_9, %c0_10, %c0_11, %c208] : memref<1x8x8x256xbf16, #tpu.memory_space<vmem>>, vector<1x8x8x16xbf16>
    %13 = vector.shape_cast %12 : vector<1x8x8x16xbf16> to vector<8x8x16xbf16>
    %14 = arith.extf %13 : vector<8x8x16xbf16> to vector<8x8x16xf32>
    %cst_12 = arith.constant 0.000000e+00 : f32
    %15 = vector.broadcast %cst_12 : f32 to vector<1x8x16xf32>
    %16 = vector.extract_strided_slice %14 {offsets = [0, 0, 0], sizes = [7, 8, 16], strides = [1, 1, 1]} : vector<8x8x16xf32> to vector<7x8x16xf32>
    %17 = tpu.concatenate %15, %16 in 0 : vector<1x8x16xf32>, vector<7x8x16xf32> -> vector<8x8x16xf32>
    %18 = arith.addf %11, %17 : vector<8x8x16xf32>
    %c0_13 = arith.constant 0 : index
    %c0_14 = arith.constant 0 : index
    %c0_15 = arith.constant 0 : index
    %c240 = arith.constant 240 : index
    %19 = vector.load %arg1[%c0_13, %c0_14, %c0_15, %c240] : memref<1x8x8x256xbf16, #tpu.memory_space<vmem>>, vector<1x8x8x16xbf16>
    %20 = vector.shape_cast %19 : vector<1x8x8x16xbf16> to vector<8x8x16xbf16>
    %21 = arith.extf %20 : vector<8x8x16xbf16> to vector<8x8x16xf32>
    %cst_16 = arith.constant 0.000000e+00 : f32
    %22 = vector.broadcast %cst_16 : f32 to vector<1x8x16xf32>
    %23 = vector.extract_strided_slice %21 {offsets = [0, 0, 0], sizes = [7, 8, 16], strides = [1, 1, 1]} : vector<8x8x16xf32> to vector<7x8x16xf32>
    %24 = tpu.concatenate %22, %23 in 0 : vector<1x8x16xf32>, vector<7x8x16xf32> -> vector<8x8x16xf32>
    %cst_17 = arith.constant 0.000000e+00 : f32
    %25 = vector.broadcast %cst_17 : f32 to vector<8x1x16xf32>
    %26 = vector.extract_strided_slice %24 {offsets = [0, 0, 0], sizes = [8, 7, 16], strides = [1, 1, 1]} : vector<8x8x16xf32> to vector<8x7x16xf32>
    %27 = tpu.concatenate %25, %26 in 1 : vector<8x1x16xf32>, vector<8x7x16xf32> -> vector<8x8x16xf32>
    %28 = arith.addf %18, %27 : vector<8x8x16xf32>
    %29 = vector.shape_cast %0 : vector<1x16xf32> to vector<1x1x16xf32>
    %30 = vector.broadcast %29 : vector<1x1x16xf32> to vector<8x8x16xf32>
    %31 = arith.mulf %28, %30 : vector<8x8x16xf32>
    %32 = vector.shape_cast %1 : vector<1x16xf32> to vector<1x1x16xf32>
    %33 = vector.broadcast %32 : vector<1x1x16xf32> to vector<8x8x16xf32>
    %34 = arith.addf %31, %33 : vector<8x8x16xf32>
    %cst_18 = arith.constant 0.000000e+00 : f32
    %35 = vector.broadcast %cst_18 : f32 to vector<8x8x16xf32>
    %36 = arith.maximumf %34, %35 : vector<8x8x16xf32>
    %37 = arith.truncf %36 : vector<8x8x16xf32> to vector<8x8x16xbf16>
    %c0_19 = arith.constant 0 : index
    %c0_20 = arith.constant 0 : index
    %c0_21 = arith.constant 0 : index
    %c64 = arith.constant 64 : index
    %38 = vector.load %arg1[%c0_19, %c0_20, %c0_21, %c64] : memref<1x8x8x256xbf16, #tpu.memory_space<vmem>>, vector<1x8x8x16xbf16>
    %39 = vector.shape_cast %38 : vector<1x8x8x16xbf16> to vector<8x8x16xbf16>
    %40 = arith.extf %39 : vector<8x8x16xbf16> to vector<8x8x16xf32>
    %cst_22 = arith.constant 0.000000e+00 : f32
    %41 = vector.broadcast %cst_22 : f32 to vector<8x1x16xf32>
    %42 = vector.extract_strided_slice %40 {offsets = [0, 1, 0], sizes = [8, 7, 16], strides = [1, 1, 1]} : vector<8x8x16xf32> to vector<8x7x16xf32>
    %43 = tpu.concatenate %42, %41 in 1 : vector<8x7x16xf32>, vector<8x1x16xf32> -> vector<8x8x16xf32>
    %c0_23 = arith.constant 0 : index
    %c0_24 = arith.constant 0 : index
    %c0_25 = arith.constant 0 : index
    %c96 = arith.constant 96 : index
    %44 = vector.load %arg1[%c0_23, %c0_24, %c0_25, %c96] : memref<1x8x8x256xbf16, #tpu.memory_space<vmem>>, vector<1x8x8x16xbf16>
    %45 = vector.shape_cast %44 : vector<1x8x8x16xbf16> to vector<8x8x16xbf16>
    %46 = arith.extf %45 : vector<8x8x16xbf16> to vector<8x8x16xf32>
    %47 = arith.addf %43, %46 : vector<8x8x16xf32>
    %c0_26 = arith.constant 0 : index
    %c0_27 = arith.constant 0 : index
    %c0_28 = arith.constant 0 : index
    %c192 = arith.constant 192 : index
    %48 = vector.load %arg1[%c0_26, %c0_27, %c0_28, %c192] : memref<1x8x8x256xbf16, #tpu.memory_space<vmem>>, vector<1x8x8x16xbf16>
    %49 = vector.shape_cast %48 : vector<1x8x8x16xbf16> to vector<8x8x16xbf16>
    %50 = arith.extf %49 : vector<8x8x16xbf16> to vector<8x8x16xf32>
    %cst_29 = arith.constant 0.000000e+00 : f32
    %51 = vector.broadcast %cst_29 : f32 to vector<1x8x16xf32>
    %52 = vector.extract_strided_slice %50 {offsets = [0, 0, 0], sizes = [7, 8, 16], strides = [1, 1, 1]} : vector<8x8x16xf32> to vector<7x8x16xf32>
    %53 = tpu.concatenate %51, %52 in 0 : vector<1x8x16xf32>, vector<7x8x16xf32> -> vector<8x8x16xf32>
    %cst_30 = arith.constant 0.000000e+00 : f32
    %54 = vector.broadcast %cst_30 : f32 to vector<8x1x16xf32>
    %55 = vector.extract_strided_slice %53 {offsets = [0, 1, 0], sizes = [8, 7, 16], strides = [1, 1, 1]} : vector<8x8x16xf32> to vector<8x7x16xf32>
    %56 = tpu.concatenate %55, %54 in 1 : vector<8x7x16xf32>, vector<8x1x16xf32> -> vector<8x8x16xf32>
    %57 = arith.addf %47, %56 : vector<8x8x16xf32>
    %c0_31 = arith.constant 0 : index
    %c0_32 = arith.constant 0 : index
    %c0_33 = arith.constant 0 : index
    %c224 = arith.constant 224 : index
    %58 = vector.load %arg1[%c0_31, %c0_32, %c0_33, %c224] : memref<1x8x8x256xbf16, #tpu.memory_space<vmem>>, vector<1x8x8x16xbf16>
    %59 = vector.shape_cast %58 : vector<1x8x8x16xbf16> to vector<8x8x16xbf16>
    %60 = arith.extf %59 : vector<8x8x16xbf16> to vector<8x8x16xf32>
    %cst_34 = arith.constant 0.000000e+00 : f32
    %61 = vector.broadcast %cst_34 : f32 to vector<1x8x16xf32>
    %62 = vector.extract_strided_slice %60 {offsets = [0, 0, 0], sizes = [7, 8, 16], strides = [1, 1, 1]} : vector<8x8x16xf32> to vector<7x8x16xf32>
    %63 = tpu.concatenate %61, %62 in 0 : vector<1x8x16xf32>, vector<7x8x16xf32> -> vector<8x8x16xf32>
    %64 = arith.addf %57, %63 : vector<8x8x16xf32>
    %65 = vector.shape_cast %0 : vector<1x16xf32> to vector<1x1x16xf32>
    %66 = vector.broadcast %65 : vector<1x1x16xf32> to vector<8x8x16xf32>
    %67 = arith.mulf %64, %66 : vector<8x8x16xf32>
    %68 = vector.shape_cast %1 : vector<1x16xf32> to vector<1x1x16xf32>
    %69 = vector.broadcast %68 : vector<1x1x16xf32> to vector<8x8x16xf32>
    %70 = arith.addf %67, %69 : vector<8x8x16xf32>
    %cst_35 = arith.constant 0.000000e+00 : f32
    %71 = vector.broadcast %cst_35 : f32 to vector<8x8x16xf32>
    %72 = arith.maximumf %70, %71 : vector<8x8x16xf32>
    %73 = arith.truncf %72 : vector<8x8x16xf32> to vector<8x8x16xbf16>
    %74 = tpu.concatenate %37, %73 in 2 : vector<8x8x16xbf16>, vector<8x8x16xbf16> -> vector<8x8x32xbf16>
    %c0_36 = arith.constant 0 : index
    %c0_37 = arith.constant 0 : index
    %c0_38 = arith.constant 0 : index
    %c16 = arith.constant 16 : index
    %75 = vector.load %arg1[%c0_36, %c0_37, %c0_38, %c16] : memref<1x8x8x256xbf16, #tpu.memory_space<vmem>>, vector<1x8x8x16xbf16>
    %76 = vector.shape_cast %75 : vector<1x8x8x16xbf16> to vector<8x8x16xbf16>
    %77 = arith.extf %76 : vector<8x8x16xbf16> to vector<8x8x16xf32>
    %cst_39 = arith.constant 0.000000e+00 : f32
    %78 = vector.broadcast %cst_39 : f32 to vector<1x8x16xf32>
    %79 = vector.extract_strided_slice %77 {offsets = [1, 0, 0], sizes = [7, 8, 16], strides = [1, 1, 1]} : vector<8x8x16xf32> to vector<7x8x16xf32>
    %80 = tpu.concatenate %79, %78 in 0 : vector<7x8x16xf32>, vector<1x8x16xf32> -> vector<8x8x16xf32>
    %c0_40 = arith.constant 0 : index
    %c0_41 = arith.constant 0 : index
    %c0_42 = arith.constant 0 : index
    %c48 = arith.constant 48 : index
    %81 = vector.load %arg1[%c0_40, %c0_41, %c0_42, %c48] : memref<1x8x8x256xbf16, #tpu.memory_space<vmem>>, vector<1x8x8x16xbf16>
    %82 = vector.shape_cast %81 : vector<1x8x8x16xbf16> to vector<8x8x16xbf16>
    %83 = arith.extf %82 : vector<8x8x16xbf16> to vector<8x8x16xf32>
    %cst_43 = arith.constant 0.000000e+00 : f32
    %84 = vector.broadcast %cst_43 : f32 to vector<1x8x16xf32>
    %85 = vector.extract_strided_slice %83 {offsets = [1, 0, 0], sizes = [7, 8, 16], strides = [1, 1, 1]} : vector<8x8x16xf32> to vector<7x8x16xf32>
    %86 = tpu.concatenate %85, %84 in 0 : vector<7x8x16xf32>, vector<1x8x16xf32> -> vector<8x8x16xf32>
    %cst_44 = arith.constant 0.000000e+00 : f32
    %87 = vector.broadcast %cst_44 : f32 to vector<8x1x16xf32>
    %88 = vector.extract_strided_slice %86 {offsets = [0, 0, 0], sizes = [8, 7, 16], strides = [1, 1, 1]} : vector<8x8x16xf32> to vector<8x7x16xf32>
    %89 = tpu.concatenate %87, %88 in 1 : vector<8x1x16xf32>, vector<8x7x16xf32> -> vector<8x8x16xf32>
    %90 = arith.addf %80, %89 : vector<8x8x16xf32>
    %c0_45 = arith.constant 0 : index
    %c0_46 = arith.constant 0 : index
    %c0_47 = arith.constant 0 : index
    %c144 = arith.constant 144 : index
    %91 = vector.load %arg1[%c0_45, %c0_46, %c0_47, %c144] : memref<1x8x8x256xbf16, #tpu.memory_space<vmem>>, vector<1x8x8x16xbf16>
    %92 = vector.shape_cast %91 : vector<1x8x8x16xbf16> to vector<8x8x16xbf16>
    %93 = arith.extf %92 : vector<8x8x16xbf16> to vector<8x8x16xf32>
    %94 = arith.addf %90, %93 : vector<8x8x16xf32>
    %c0_48 = arith.constant 0 : index
    %c0_49 = arith.constant 0 : index
    %c0_50 = arith.constant 0 : index
    %c176 = arith.constant 176 : index
    %95 = vector.load %arg1[%c0_48, %c0_49, %c0_50, %c176] : memref<1x8x8x256xbf16, #tpu.memory_space<vmem>>, vector<1x8x8x16xbf16>
    %96 = vector.shape_cast %95 : vector<1x8x8x16xbf16> to vector<8x8x16xbf16>
    %97 = arith.extf %96 : vector<8x8x16xbf16> to vector<8x8x16xf32>
    %cst_51 = arith.constant 0.000000e+00 : f32
    %98 = vector.broadcast %cst_51 : f32 to vector<8x1x16xf32>
    %99 = vector.extract_strided_slice %97 {offsets = [0, 0, 0], sizes = [8, 7, 16], strides = [1, 1, 1]} : vector<8x8x16xf32> to vector<8x7x16xf32>
    %100 = tpu.concatenate %98, %99 in 1 : vector<8x1x16xf32>, vector<8x7x16xf32> -> vector<8x8x16xf32>
    %101 = arith.addf %94, %100 : vector<8x8x16xf32>
    %102 = vector.shape_cast %0 : vector<1x16xf32> to vector<1x1x16xf32>
    %103 = vector.broadcast %102 : vector<1x1x16xf32> to vector<8x8x16xf32>
    %104 = arith.mulf %101, %103 : vector<8x8x16xf32>
    %105 = vector.shape_cast %1 : vector<1x16xf32> to vector<1x1x16xf32>
    %106 = vector.broadcast %105 : vector<1x1x16xf32> to vector<8x8x16xf32>
    %107 = arith.addf %104, %106 : vector<8x8x16xf32>
    %cst_52 = arith.constant 0.000000e+00 : f32
    %108 = vector.broadcast %cst_52 : f32 to vector<8x8x16xf32>
    %109 = arith.maximumf %107, %108 : vector<8x8x16xf32>
    %110 = arith.truncf %109 : vector<8x8x16xf32> to vector<8x8x16xbf16>
    %c0_53 = arith.constant 0 : index
    %c0_54 = arith.constant 0 : index
    %c0_55 = arith.constant 0 : index
    %c0_56 = arith.constant 0 : index
    %111 = vector.load %arg1[%c0_53, %c0_54, %c0_55, %c0_56] : memref<1x8x8x256xbf16, #tpu.memory_space<vmem>>, vector<1x8x8x16xbf16>
    %112 = vector.shape_cast %111 : vector<1x8x8x16xbf16> to vector<8x8x16xbf16>
    %113 = arith.extf %112 : vector<8x8x16xbf16> to vector<8x8x16xf32>
    %cst_57 = arith.constant 0.000000e+00 : f32
    %114 = vector.broadcast %cst_57 : f32 to vector<1x8x16xf32>
    %115 = vector.extract_strided_slice %113 {offsets = [1, 0, 0], sizes = [7, 8, 16], strides = [1, 1, 1]} : vector<8x8x16xf32> to vector<7x8x16xf32>
    %116 = tpu.concatenate %115, %114 in 0 : vector<7x8x16xf32>, vector<1x8x16xf32> -> vector<8x8x16xf32>
    %cst_58 = arith.constant 0.000000e+00 : f32
    %117 = vector.broadcast %cst_58 : f32 to vector<8x1x16xf32>
    %118 = vector.extract_strided_slice %116 {offsets = [0, 1, 0], sizes = [8, 7, 16], strides = [1, 1, 1]} : vector<8x8x16xf32> to vector<8x7x16xf32>
    %119 = tpu.concatenate %118, %117 in 1 : vector<8x7x16xf32>, vector<8x1x16xf32> -> vector<8x8x16xf32>
    %c0_59 = arith.constant 0 : index
    %c0_60 = arith.constant 0 : index
    %c0_61 = arith.constant 0 : index
    %c32 = arith.constant 32 : index
    %120 = vector.load %arg1[%c0_59, %c0_60, %c0_61, %c32] : memref<1x8x8x256xbf16, #tpu.memory_space<vmem>>, vector<1x8x8x16xbf16>
    %121 = vector.shape_cast %120 : vector<1x8x8x16xbf16> to vector<8x8x16xbf16>
    %122 = arith.extf %121 : vector<8x8x16xbf16> to vector<8x8x16xf32>
    %cst_62 = arith.constant 0.000000e+00 : f32
    %123 = vector.broadcast %cst_62 : f32 to vector<1x8x16xf32>
    %124 = vector.extract_strided_slice %122 {offsets = [1, 0, 0], sizes = [7, 8, 16], strides = [1, 1, 1]} : vector<8x8x16xf32> to vector<7x8x16xf32>
    %125 = tpu.concatenate %124, %123 in 0 : vector<7x8x16xf32>, vector<1x8x16xf32> -> vector<8x8x16xf32>
    %126 = arith.addf %119, %125 : vector<8x8x16xf32>
    %c0_63 = arith.constant 0 : index
    %c0_64 = arith.constant 0 : index
    %c0_65 = arith.constant 0 : index
    %c128 = arith.constant 128 : index
    %127 = vector.load %arg1[%c0_63, %c0_64, %c0_65, %c128] : memref<1x8x8x256xbf16, #tpu.memory_space<vmem>>, vector<1x8x8x16xbf16>
    %128 = vector.shape_cast %127 : vector<1x8x8x16xbf16> to vector<8x8x16xbf16>
    %129 = arith.extf %128 : vector<8x8x16xbf16> to vector<8x8x16xf32>
    %cst_66 = arith.constant 0.000000e+00 : f32
    %130 = vector.broadcast %cst_66 : f32 to vector<8x1x16xf32>
    %131 = vector.extract_strided_slice %129 {offsets = [0, 1, 0], sizes = [8, 7, 16], strides = [1, 1, 1]} : vector<8x8x16xf32> to vector<8x7x16xf32>
    %132 = tpu.concatenate %131, %130 in 1 : vector<8x7x16xf32>, vector<8x1x16xf32> -> vector<8x8x16xf32>
    %133 = arith.addf %126, %132 : vector<8x8x16xf32>
    %c0_67 = arith.constant 0 : index
    %c0_68 = arith.constant 0 : index
    %c0_69 = arith.constant 0 : index
    %c160 = arith.constant 160 : index
    %134 = vector.load %arg1[%c0_67, %c0_68, %c0_69, %c160] : memref<1x8x8x256xbf16, #tpu.memory_space<vmem>>, vector<1x8x8x16xbf16>
    %135 = vector.shape_cast %134 : vector<1x8x8x16xbf16> to vector<8x8x16xbf16>
    %136 = arith.extf %135 : vector<8x8x16xbf16> to vector<8x8x16xf32>
    %137 = arith.addf %133, %136 : vector<8x8x16xf32>
    %138 = vector.shape_cast %0 : vector<1x16xf32> to vector<1x1x16xf32>
    %139 = vector.broadcast %138 : vector<1x1x16xf32> to vector<8x8x16xf32>
    %140 = arith.mulf %137, %139 : vector<8x8x16xf32>
    %141 = vector.shape_cast %1 : vector<1x16xf32> to vector<1x1x16xf32>
    %142 = vector.broadcast %141 : vector<1x1x16xf32> to vector<8x8x16xf32>
    %143 = arith.addf %140, %142 : vector<8x8x16xf32>
    %cst_70 = arith.constant 0.000000e+00 : f32
    %144 = vector.broadcast %cst_70 : f32 to vector<8x8x16xf32>
    %145 = arith.maximumf %143, %144 : vector<8x8x16xf32>
    %146 = arith.truncf %145 : vector<8x8x16xf32> to vector<8x8x16xbf16>
    %147 = tpu.concatenate %110, %146 in 2 : vector<8x8x16xbf16>, vector<8x8x16xbf16> -> vector<8x8x32xbf16>
    %148 = vector.shape_cast %74 : vector<8x8x32xbf16> to vector<8x1x8x32xbf16>
    %149 = vector.shape_cast %147 : vector<8x8x32xbf16> to vector<8x1x8x32xbf16>
    %150 = tpu.concatenate %148, %149 in 1 : vector<8x1x8x32xbf16>, vector<8x1x8x32xbf16> -> vector<8x2x8x32xbf16>
    %c0_71 = arith.constant 0 : index
    %c0_72 = arith.constant 0 : index
    %c0_73 = arith.constant 0 : index
    %c0_74 = arith.constant 0 : index
    %151 = vector.load %arg4[%c0_71, %c0_72, %c0_73, %c0_74] : memref<8x2x8x32xbf16, #tpu.memory_space<vmem>>, vector<8x2x8x32xbf16>
    tpu.vector_store %arg4[%c0_71, %c0_72, %c0_73, %c0_74], %150 {strides = array<i32>} : memref<8x2x8x32xbf16, #tpu.memory_space<vmem>>, vector<8x2x8x32xbf16>,
    return
  }
  func.func @transform_0(%arg0: i32) -> (i32, i32, i32, i32) {
    %c0_i32 = arith.constant 0 : i32
    %c0_i32_0 = arith.constant 0 : i32
    %c0_i32_1 = arith.constant 0 : i32
    %c0_i32_2 = arith.constant 0 : i32
    return %arg0, %c0_i32, %c0_i32_0, %c0_i32_1 : i32, i32, i32, i32
  }
  func.func @transform_1(%arg0: i32) -> (i32, i32) {
    %c0_i32 = arith.constant 0 : i32
    %c0_i32_0 = arith.constant 0 : i32
    %c0_i32_1 = arith.constant 0 : i32
    return %c0_i32, %c0_i32_0 : i32, i32
  }
  func.func @transform_2(%arg0: i32) -> (i32, i32) {
    %c0_i32 = arith.constant 0 : i32
    %c0_i32_0 = arith.constant 0 : i32
    %c0_i32_1 = arith.constant 0 : i32
    return %c0_i32, %c0_i32_0 : i32, i32
  }
  func.func @transform_3(%arg0: i32) -> (i32, i32, i32, i32) {
    %c0_i32 = arith.constant 0 : i32
    %c0_i32_0 = arith.constant 0 : i32
    %c0_i32_1 = arith.constant 0 : i32
    %c0_i32_2 = arith.constant 0 : i32
    return %arg0, %c0_i32, %c0_i32_0, %c0_i32_1 : i32, i32, i32, i32
  }
}

module attributes {stable_mosaic.version = 11 : i64} {
  func.func @kernel(%arg0: i32, %arg1: i32, %arg2: memref<512x16xbf16, #tpu.memory_space<vmem>>, %arg3: memref<16x128xbf16, #tpu.memory_space<vmem>>, %arg4: memref<1x128xf32, #tpu.memory_space<vmem>>, %arg5: memref<512x128xf32, #tpu.memory_space<vmem>>) attributes {dimension_semantics = [#tpu.dimension_semantics<parallel>, #tpu.dimension_semantics<parallel>], iteration_bounds = array<i64: 1, 1>, scalar_prefetch = 0 : i64, scratch_operands = 0 : i64, tpu.core_type = #tpu.core_type<tc>, window_params = [{transform_indices = @transform_0, window_bounds = array<i64: 512, 16>}, {transform_indices = @transform_1, window_bounds = array<i64: 16, 128>}, {transform_indices = @transform_2, window_bounds = array<i64: 1, 128>}, {transform_indices = @transform_3, window_bounds = array<i64: 512, 128>}]} {
    %c0 = arith.constant 0 : index
    %c0_0 = arith.constant 0 : index
    %0 = vector.load %arg2[%c0, %c0_0] : memref<512x16xbf16, #tpu.memory_space<vmem>>, vector<512x16xbf16>
    %c0_1 = arith.constant 0 : index
    %c0_2 = arith.constant 0 : index
    %1 = vector.load %arg3[%c0_1, %c0_2] : memref<16x128xbf16, #tpu.memory_space<vmem>>, vector<16x128xbf16>
    %cst = arith.constant dense<0.000000e+00> : vector<512x128xf32>
    %2 = tpu.matmul %0, %1, %cst {dimension_numbers = #tpu.dot_dimension_numbers<[1], [0], [0], [1], [0, 0, 1, 1], [], []>} : vector<512x16xbf16>, vector<16x128xbf16>, vector<512x128xf32> -> vector<512x128xf32>
    %c0_3 = arith.constant 0 : index
    %c0_4 = arith.constant 0 : index
    %3 = vector.load %arg4[%c0_3, %c0_4] : memref<1x128xf32, #tpu.memory_space<vmem>>, vector<1x128xf32>
    %4 = vector.broadcast %3 : vector<1x128xf32> to vector<512x128xf32>
    %5 = arith.addf %2, %4 : vector<512x128xf32>
    %c0_5 = arith.constant 0 : index
    %c0_6 = arith.constant 0 : index
    %6 = vector.load %arg5[%c0_5, %c0_6] : memref<512x128xf32, #tpu.memory_space<vmem>>, vector<512x128xf32>
    tpu.vector_store %arg5[%c0_5, %c0_6], %5 {strides = array<i32>} : memref<512x128xf32, #tpu.memory_space<vmem>>, vector<512x128xf32>,
    return
  }
  func.func @transform_0(%arg0: i32, %arg1: i32) -> (i32, i32) {
    %c0_i32 = arith.constant 0 : i32
    %c0_i32_0 = arith.constant 0 : i32
    return %arg0, %c0_i32 : i32, i32
  }
  func.func @transform_1(%arg0: i32, %arg1: i32) -> (i32, i32) {
    %c0_i32 = arith.constant 0 : i32
    %c0_i32_0 = arith.constant 0 : i32
    return %c0_i32, %arg1 : i32, i32
  }
  func.func @transform_2(%arg0: i32, %arg1: i32) -> (i32, i32) {
    %c0_i32 = arith.constant 0 : i32
    %c0_i32_0 = arith.constant 0 : i32
    return %c0_i32, %arg1 : i32, i32
  }
  func.func @transform_3(%arg0: i32, %arg1: i32) -> (i32, i32) {
    %c0_i32 = arith.constant 0 : i32
    return %arg0, %arg1 : i32, i32
  }
}

</mosaic_0001>

<llo_original>
// kernel: vit_pose_forward.16
$region0: #{vit_pose_forward.16}
  #allocation0 [shape = 'u32[]', space=smem, size = 0x4, offset = 0x4, fixed_abs, tag = 'smem constant byte address 0x4 - core index']
  #allocation1 [shape = 'u32[144,128]{1,0:T(1,128)}', space=vmem, size = 0x12000, scoped, tag = 'internal scratch']
  %s0 = inlined_call_operand.vmem [shape: bf16[32,192], index: 0, kind: input, shape index: {}]
  %s1 = inlined_call_operand.vmem [shape: bf16[192,32], index: 1, kind: input, shape index: {}]
  %s2 = inlined_call_operand.vmem [shape: f32[1,32], index: 2, kind: input, shape index: {}]
  %s3 = inlined_call_operand.vmem [shape: f32[32,32], index: 3, kind: output, shape index: {}]
  %s4 = sld [smem:[#allocation0]]
  $region22: #{vit_pose_forward.16} parent=0
    _
  %s6 = ssub.s32 1, %s4
  %s7 = scalar_select 0, %s6, %s4
  // Predicated region
  $region2: #{vit_pose_forward.16} parent=0 // pred_check
    _
  $region3: #{vit_pose_forward.16} parent=0 // pred_check_branch
    %9 = sbr.rel (0) target = $region5
  $region4: #{vit_pose_forward.16} parent=0 // pred_region
    _
  $region5: #{vit_pose_forward.16} parent=0 // pred_fallthru
    _
  // Predicated region
  $region6: #{vit_pose_forward.16} parent=0 // pred_check
    _
  $region7: #{vit_pose_forward.16} parent=0 // pred_check_branch
    %11 = sbr.rel (0) target = $region9
  $region8: #{vit_pose_forward.16} parent=0 // pred_region
    _
  $region9: #{vit_pose_forward.16} parent=0 // pred_fallthru
    _
  // Predicated region
  $region10: #{vit_pose_forward.16} parent=0 // pred_check
    _
  $region11: #{vit_pose_forward.16} parent=0 // pred_check_branch
    %13 = sbr.rel (0) target = $region13
  $region12: #{vit_pose_forward.16} parent=0 // pred_region
    _
  $region13: #{vit_pose_forward.16} parent=0 // pred_fallthru
    _
  %v15 = vld [vmem:[%s0] sm:$0xff]
  %v16 = vld [vmem:[%s0 + $0x8] sm:$0xff]
  %v17 = vld [vmem:[%s0 + $0x10] sm:$0xff]
  %v18 = vld [vmem:[%s0 + $0x18] sm:$0xff]
  %v19 = vld [vmem:[%s1] sm:$0xf]
  %v20 = vld [vmem:[%s1 + $0x4] sm:$0xf]
  %v21 = vld [vmem:[%s1 + $0x8] sm:$0xf]
  %v22 = vld [vmem:[%s1 + $0xc] sm:$0xf]
  %v23 = vld [vmem:[%s1 + $0x10] sm:$0xf]
  %v24 = vld [vmem:[%s1 + $0x14] sm:$0xf]
  %v25 = vld [vmem:[%s1 + $0x18] sm:$0xf]
  %v26 = vld [vmem:[%s1 + $0x1c] sm:$0xf]
  %v27 = vld [vmem:[%s1 + $0x20] sm:$0xf]
  %v28 = vld [vmem:[%s1 + $0x24] sm:$0xf]
  %v29 = vld [vmem:[%s1 + $0x28] sm:$0xf]
  %v30 = vld [vmem:[%s1 + $0x2c] sm:$0xf]
  %v31 = vld [vmem:[%s1 + $0x30] sm:$0xf]
  %v32 = vld [vmem:[%s1 + $0x34] sm:$0xf]
  %v33 = vld [vmem:[%s1 + $0x38] sm:$0xf]
  %v34 = vld [vmem:[%s1 + $0x3c] sm:$0xf]
  %v35 = vld [vmem:[%s1 + $0x40] sm:$0xf]
  %v36 = vld [vmem:[%s1 + $0x44] sm:$0xf]
  %v37 = vld [vmem:[%s1 + $0x48] sm:$0xf]
  %v38 = vld [vmem:[%s1 + $0x4c] sm:$0xf]
  %v39 = vld [vmem:[%s1 + $0x50] sm:$0xf]
  %v40 = vld [vmem:[%s1 + $0x54] sm:$0xf]
  %v41 = vld [vmem:[%s1 + $0x58] sm:$0xf]
  %v42 = vld [vmem:[%s1 + $0x5c] sm:$0xf]
  %v43 = vld [vmem:[%s2] sm:$0x1]
  %v45 = vlaneseq
  %v46 = vshrl.u32 %v45, 7
  %v47 = vsub.s32 0, %v46
  %v48 = vrot.slane %v43, %v47
  %v54 = vunpack.c.l.b16 %v15
  %v55 = vunpack.c.h.b16 %v15
  %v56 = vunpack.c.l.b16 %v16
  %v57 = vunpack.c.h.b16 %v16
  %v58 = vunpack.c.l.b16 %v17
  %v59 = vunpack.c.h.b16 %v17
  %v60 = vunpack.c.l.b16 %v18
  %v61 = vunpack.c.h.b16 %v18
  %v62 = vpack.c.b16 %v56, %v54
  %v63 = vpack.c.b16 %v57, %v55
  %v64 = vpack.c.b16 %v60, %v58
  %v65 = vpack.c.b16 %v61, %v59
  %v92 = vunpack.c.l.b16 %v19
  %v93 = vunpack.c.l.b16 %v20
  %v94 = vunpack.c.l.b16 %v21
  %v95 = vunpack.c.l.b16 %v22
  %v96 = vunpack.c.l.b16 %v23
  %v97 = vunpack.c.l.b16 %v24
  %v98 = vunpack.c.l.b16 %v25
  %v99 = vunpack.c.l.b16 %v26
  %v100 = vunpack.c.l.b16 %v27
  %v101 = vunpack.c.l.b16 %v28
  %v102 = vunpack.c.l.b16 %v29
  %v103 = vunpack.c.l.b16 %v30
  %v104 = vunpack.c.l.b16 %v31
  %v105 = vunpack.c.l.b16 %v32
  %v106 = vunpack.c.l.b16 %v33
  %v107 = vunpack.c.l.b16 %v34
  %v108 = vunpack.c.l.b16 %v35
  %v109 = vunpack.c.l.b16 %v36
  %v110 = vunpack.c.l.b16 %v37
  %v111 = vunpack.c.l.b16 %v38
  %v112 = vunpack.c.l.b16 %v39
  %v113 = vunpack.c.l.b16 %v40
  %v114 = vunpack.c.l.b16 %v41
  %v115 = vunpack.c.l.b16 %v42
  %v116 = vpack.c.b16 %v93, %v92
  %v117 = vpack.c.b16 %v95, %v94
  %v118 = vpack.c.b16 %v97, %v96
  %v119 = vpack.c.b16 %v99, %v98
  %v120 = vpack.c.b16 %v101, %v100
  %v121 = vpack.c.b16 %v103, %v102
  %v122 = vpack.c.b16 %v105, %v104
  %v123 = vpack.c.b16 %v107, %v106
  %v124 = vpack.c.b16 %v109, %v108
  %v125 = vpack.c.b16 %v111, %v110
  %v126 = vpack.c.b16 %v113, %v112
  %v127 = vpack.c.b16 %v115, %v114
  %vm140 = vcmask 523264
  %v142 = vsel %vm140, %v63, 0
  %v145 = vsel %vm140, %v65, 0
  %147 = vmatprep.subr.bf16.mxu0 0
  %148 = vmatpush1.bf16.msra.mxu0 %v116
  %149 = vmatprep.subr.bf16.mxu0 0
  %150 = vmatpush1.bf16.msra.mxu0 %v117
  %151 = vmatprep.subr.bf16.mxu0 0
  %152 = vmatpush1.bf16.msra.mxu0 %v118
  %153 = vmatprep.subr.bf16.mxu0 0
  %154 = vmatpush1.bf16.msra.mxu0 %v119
  %155 = vmatprep.subr.bf16.mxu0 0
  %156 = vmatpush1.bf16.msra.mxu0 %v120
  %157 = vmatprep.subr.bf16.mxu0 0
  %158 = vmatpush1.bf16.msra.mxu0 %v121
  %159 = vmatprep.subr.bf16.mxu0 0
  %160 = vmatpush1.bf16.msra.mxu0 %v122
  %161 = vmatprep.subr.bf16.mxu0 0
  %162 = vmatpush1.bf16.msra.mxu0 %v123
  %163 = vmatprep.subr.bf16.mxu0 0
  %164 = vmatpush1.bf16.msra.mxu0 %v124
  %165 = vmatprep.subr.bf16.mxu0 0
  %166 = vmatpush1.bf16.msra.mxu0 %v125
  %167 = vmatprep.subr.bf16.mxu0 0
  %168 = vmatpush1.bf16.msra.mxu0 %v126
  %169 = vmatprep.subr.bf16.mxu0 0
  %170 = vmatpush1.bf16.msra.mxu0 %v127
  %171 = vmatprep.subr.bf16.mxu0 0
  %172 = vmatpush1.bf16.msra.mxu0 0
  %173 = vmatprep.subr.bf16.mxu0 0
  %174 = vmatpush1.bf16.msra.mxu0 0
  %175 = vmatprep.subr.bf16.mxu0 0
  %176 = vmatpush1.bf16.msra.mxu0 0
  %177 = vmatprep.subr.bf16.mxu0 0
  %178 = vmatpush1.bf16.msra.mxu0 0
  %179 = vmatprep.mubr.bf16.mxu0 %v142
  %180 = vmatmul.mubr.bf16.gmra.mrb[0].mxu0 %v62
  %v181 = vpop.f32.mrb[0].mxu0
  %v182 = vadd.f32 %v48, %v181
  %v183 = vpop.f32.mrb[0].mxu0
  %v184 = vpop.f32.mrb[0].mxu0
  %v185 = vadd.f32 %v48, %v184
  %v186 = vpop.f32.mrb[0].mxu0
  %187 = vmatprep.mubr.bf16.mxu0 %v145
  %188 = vmatmul.mubr.bf16.gmra.mrb[0].mxu0 %v64
  %v189 = vpop.f32.mrb[0].mxu0
  %v190 = vadd.f32 %v48, %v189
  %v191 = vpop.f32.mrb[0].mxu0
  %v192 = vpop.f32.mrb[0].mxu0
  %v193 = vadd.f32 %v48, %v192
  %v194 = vpop.f32.mrb[0].mxu0
  %195 = vdwg.mxu0
  %vm196 = vcmask 261120
  %197 = vst.msk [vmem:[%s3] sm:$0xff] %vm196, %v182
  %198 = vst.msk [vmem:[%s3 + $0x8] sm:$0xff] %vm196, %v185
  %199 = vst.msk [vmem:[%s3 + $0x10] sm:$0xff] %vm196, %v190
  %200 = vst.msk [vmem:[%s3 + $0x18] sm:$0xff] %vm196, %v193
  // Predicated region
  $region14: #{vit_pose_forward.16} parent=0 // pred_check
    _
  $region15: #{vit_pose_forward.16} parent=0 // pred_check_branch
    %202 = sbr.rel (0) target = $region17
  $region16: #{vit_pose_forward.16} parent=0 // pred_region
    _
  $region17: #{vit_pose_forward.16} parent=0 // pred_fallthru
    _
  // Predicated region
  $region18: #{vit_pose_forward.16} parent=0 // pred_check
    _
  $region19: #{vit_pose_forward.16} parent=0 // pred_check_branch
    %204 = sbr.rel (0) target = $region21
  $region20: #{vit_pose_forward.16} parent=0 // pred_region
    _
  $region21: #{vit_pose_forward.16} parent=0 // pred_fallthru
    _

// kernel: vit_pose_forward.17
$region0: #{vit_pose_forward.17}
  #allocation0 [shape = 'u32[]', space=smem, size = 0x4, offset = 0x4, fixed_abs, tag = 'smem constant byte address 0x4 - core index']
  #allocation1 [shape = 'u32[144,128]{1,0:T(1,128)}', space=vmem, size = 0x12000, scoped, tag = 'internal scratch']
  #allocation2 [shape = 'bf16[32,32]{1,0:T(16,128)(2,1)}', space=vmem, size = 0x2000, scoped, tag = 'scratch operand']
  %s0 = inlined_call_operand.vmem [shape: f32[32,32], index: 0, kind: input, shape index: {}]
  %s1 = inlined_call_operand.vmem [shape: bf16[32,96], index: 1, kind: input, shape index: {}]
  %s2 = inlined_call_operand.vmem [shape: f32[1,96], index: 2, kind: input, shape index: {}]
  %s3 = inlined_call_operand.vmem [shape: f32[1,32], index: 3, kind: input, shape index: {}]
  %s4 = inlined_call_operand.vmem [shape: f32[1,32], index: 4, kind: input, shape index: {}]
  %s5 = inlined_call_operand.vmem [shape: bf16[32,96], index: 5, kind: output, shape index: {}]
  %s6 = sld [smem:[#allocation0]]
  $region34: #{vit_pose_forward.17} parent=0
    _
  %s8 = ssub.s32 1, %s6
  %s9 = scalar_select 0, %s8, %s6
  // Predicated region
  $region2: #{vit_pose_forward.17} parent=0 // pred_check
    _
  $region3: #{vit_pose_forward.17} parent=0 // pred_check_branch
    %11 = sbr.rel (0) target = $region5
  $region4: #{vit_pose_forward.17} parent=0 // pred_region
    _
  $region5: #{vit_pose_forward.17} parent=0 // pred_fallthru
    _
  // Predicated region
  $region6: #{vit_pose_forward.17} parent=0 // pred_check
    _
  $region7: #{vit_pose_forward.17} parent=0 // pred_check_branch
    %13 = sbr.rel (0) target = $region9
  $region8: #{vit_pose_forward.17} parent=0 // pred_region
    _
  $region9: #{vit_pose_forward.17} parent=0 // pred_fallthru
    _
  // Predicated region
  $region10: #{vit_pose_forward.17} parent=0 // pred_check
    _
  $region11: #{vit_pose_forward.17} parent=0 // pred_check_branch
    %15 = sbr.rel (0) target = $region13
  $region12: #{vit_pose_forward.17} parent=0 // pred_region
    _
  $region13: #{vit_pose_forward.17} parent=0 // pred_fallthru
    _
  // Predicated region
  $region14: #{vit_pose_forward.17} parent=0 // pred_check
    _
  $region15: #{vit_pose_forward.17} parent=0 // pred_check_branch
    %17 = sbr.rel (0) target = $region17
  $region16: #{vit_pose_forward.17} parent=0 // pred_region
    _
  $region17: #{vit_pose_forward.17} parent=0 // pred_fallthru
    _
  // Predicated region
  $region18: #{vit_pose_forward.17} parent=0 // pred_check
    _
  $region19: #{vit_pose_forward.17} parent=0 // pred_check_branch
    %19 = sbr.rel (0) target = $region21
  $region20: #{vit_pose_forward.17} parent=0 // pred_region
    _
  $region21: #{vit_pose_forward.17} parent=0 // pred_fallthru
    _
  %p21 = scmp.eq.s32.totalorder 0, 0
  // Predicated region
  $region22: #{vit_pose_forward.17} parent=0 // pred_check
    %p22 = pneg %p21
  $region23: #{vit_pose_forward.17} parent=0 // pred_check_branch
    %24 = sbr.rel (%p22) target = $region25
  $region24: #{vit_pose_forward.17} parent=0 // pred_region
    %v25 = vld [vmem:[%s0] sm:$0xff]
    %v26 = vld [vmem:[%s0 + $0x8] sm:$0xff]
    %v27 = vld [vmem:[%s0 + $0x10] sm:$0xff]
    %v28 = vld [vmem:[%s0 + $0x18] sm:$0xff]
    %vm29 = vcmask 261120
    %v30 = vsel %vm29, %v25, 0.0
    %31 = vadd.xlane.f32.xlu0 %v30
    %v32 = vpop.xlane.xlu0 %31
    %v33 = vsel %vm29, %v26, 0.0
    %34 = vadd.xlane.f32.xlu0 %v33
    %v35 = vpop.xlane.xlu0 %34
    %v36 = vsel %vm29, %v27, 0.0
    %37 = vadd.xlane.f32.xlu0 %v36
    %v38 = vpop.xlane.xlu0 %37
    %v39 = vsel %vm29, %v28, 0.0
    %40 = vadd.xlane.f32.xlu0 %v39
    %v41 = vpop.xlane.xlu0 %40
    %v42 = vrcp.pop 32.0
    %v43 = vmul.f32 %v32, %v42
    %v44 = vmul.f32 %v35, %v42
    %v45 = vmul.f32 %v38, %v42
    %v46 = vmul.f32 %v41, %v42
    %v47 = vsub.f32 %v25, %v43
    %v48 = vsub.f32 %v26, %v44
    %v49 = vsub.f32 %v27, %v45
    %v50 = vsub.f32 %v28, %v46
    %v51 = vmul.f32 %v47, %v47
    %v52 = vmul.f32 %v48, %v48
    %v53 = vmul.f32 %v49, %v49
    %v54 = vmul.f32 %v50, %v50
    %v55 = vsel %vm29, %v51, 0.0
    %56 = vadd.xlane.f32.xlu0 %v55
    %v57 = vpop.xlane.xlu0 %56
    %v58 = vsel %vm29, %v52, 0.0
    %59 = vadd.xlane.f32.xlu0 %v58
    %v60 = vpop.xlane.xlu0 %59
    %v61 = vsel %vm29, %v53, 0.0
    %62 = vadd.xlane.f32.xlu0 %v61
    %v63 = vpop.xlane.xlu0 %62
    %v64 = vsel %vm29, %v54, 0.0
    %65 = vadd.xlane.f32.xlu0 %v64
    %v66 = vpop.xlane.xlu0 %65
    %v67 = vmul.f32 %v57, %v42
    %v68 = vmul.f32 %v60, %v42
    %v69 = vmul.f32 %v63, %v42
    %v70 = vmul.f32 %v66, %v42
    %v71 = vadd.f32 %v67, 1e-06
    %v72 = vadd.f32 %v68, 1e-06
    %v73 = vadd.f32 %v69, 1e-06
    %v74 = vadd.f32 %v70, 1e-06
    %v75 = vrsqrt.pop %v71
    %v76 = vrsqrt.pop %v72
    %v77 = vrsqrt.pop %v73
    %v78 = vrsqrt.pop %v74
    %v79 = vmul.f32 %v47, %v75
    %v80 = vmul.f32 %v48, %v76
    %v81 = vmul.f32 %v49, %v77
    %v82 = vmul.f32 %v50, %v78
    %v83 = vld [vmem:[%s3] sm:$0x1]
    %v85 = vlaneseq
    %v86 = vshrl.u32 %v85, 7
    %v87 = vsub.s32 0, %v86
    %v88 = vrot.slane %v83, %v87
    %v90 = vmul.f32 %v79, %v88
    %v91 = vmul.f32 %v80, %v88
    %v92 = vmul.f32 %v81, %v88
    %v93 = vmul.f32 %v82, %v88
    %v94 = vld [vmem:[%s4] sm:$0x1]
    %v96 = vlaneseq
    %v97 = vshrl.u32 %v96, 7
    %v98 = vsub.s32 0, %v97
    %v99 = vrot.slane %v94, %v98
    %v101 = vadd.f32 %v90, %v99
    %v102 = vadd.f32 %v91, %v99
    %v103 = vadd.f32 %v92, %v99
    %v104 = vadd.f32 %v93, %v99
    %v105 = vpack.c.bf16 %v102, %v101
    %v106 = vpack.c.bf16 %v104, %v103
    %107 = vst.msk [vmem:[#allocation2] sm:$0xff] %vm29, %v105
    %108 = vst.msk [vmem:[#allocation2 + $0x8] sm:$0xff] %vm29, %v106
  $region25: #{vit_pose_forward.17} parent=0 // pred_fallthru
    _
  %v109 = vld [vmem:[#allocation2] sm:$0xff]
  %v110 = vld [vmem:[#allocation2 + $0x8] sm:$0xff]
  %v111 = vld [vmem:[%s1] sm:$0xf]
  %v112 = vld [vmem:[%s1 + $0x4] sm:$0xf]
  %v113 = vld [vmem:[%s1 + $0x8] sm:$0xf]
  %v114 = vld [vmem:[%s1 + $0xc] sm:$0xf]
  %v115 = vld [vmem:[%s2] sm:$0x1]
  %v117 = vlaneseq
  %v118 = vshrl.u32 %v117, 7
  %v119 = vsub.s32 0, %v118
  %v120 = vrot.slane %v115, %v119
  %v126 = vunpack.c.l.b16 %v111
  %v127 = vunpack.c.l.b16 %v112
  %v128 = vunpack.c.l.b16 %v113
  %v129 = vunpack.c.l.b16 %v114
  %v130 = vpack.c.b16 %v127, %v126
  %v131 = vpack.c.b16 %v129, %v128
  %vm134 = vcmask 261120
  %v136 = vsel %vm134, %v109, 0
  %v139 = vsel %vm134, %v110, 0
  %141 = vmatprep.subr.bf16.mxu0 0
  %142 = vmatpush1.bf16.msra.mxu0 %v130
  %143 = vmatprep.subr.bf16.mxu0 0
  %144 = vmatpush1.bf16.msra.mxu0 %v131
  %145 = vmatprep.subr.bf16.mxu0 0
  %146 = vmatpush1.bf16.msra.mxu0 0
  %147 = vmatprep.subr.bf16.mxu0 0
  %148 = vmatpush1.bf16.msra.mxu0 0
  %149 = vmatprep.subr.bf16.mxu0 0
  %150 = vmatpush1.bf16.msra.mxu0 0
  %151 = vmatprep.subr.bf16.mxu0 0
  %152 = vmatpush1.bf16.msra.mxu0 0
  %153 = vmatprep.subr.bf16.mxu0 0
  %154 = vmatpush1.bf16.msra.mxu0 0
  %155 = vmatprep.subr.bf16.mxu0 0
  %156 = vmatpush1.bf16.msra.mxu0 0
  %157 = vmatprep.subr.bf16.mxu0 0
  %158 = vmatpush1.bf16.msra.mxu0 0
  %159 = vmatprep.subr.bf16.mxu0 0
  %160 = vmatpush1.bf16.msra.mxu0 0
  %161 = vmatprep.subr.bf16.mxu0 0
  %162 = vmatpush1.bf16.msra.mxu0 0
  %163 = vmatprep.subr.bf16.mxu0 0
  %164 = vmatpush1.bf16.msra.mxu0 0
  %165 = vmatprep.subr.bf16.mxu0 0
  %166 = vmatpush1.bf16.msra.mxu0 0
  %167 = vmatprep.subr.bf16.mxu0 0
  %168 = vmatpush1.bf16.msra.mxu0 0
  %169 = vmatprep.subr.bf16.mxu0 0
  %170 = vmatpush1.bf16.msra.mxu0 0
  %171 = vmatprep.subr.bf16.mxu0 0
  %172 = vmatpush1.bf16.msra.mxu0 0
  %173 = vmatprep.mubr.bf16.mxu0 0
  %174 = vmatmul.mubr.bf16.gmra.mrb[0].mxu0 %v136
  %v175 = vpop.f32.mrb[0].mxu0
  %v176 = vadd.f32 %v120, %v175
  %v177 = vpop.f32.mrb[0].mxu0
  %v178 = vpop.f32.mrb[0].mxu0
  %v179 = vadd.f32 %v120, %v178
  %v180 = vpop.f32.mrb[0].mxu0
  %181 = vmatprep.mubr.bf16.mxu0 0
  %182 = vmatmul.mubr.bf16.gmra.mrb[0].mxu0 %v139
  %v183 = vpop.f32.mrb[0].mxu0
  %v184 = vadd.f32 %v120, %v183
  %v185 = vpop.f32.mrb[0].mxu0
  %v186 = vpop.f32.mrb[0].mxu0
  %v187 = vadd.f32 %v120, %v186
  %v188 = vpop.f32.mrb[0].mxu0
  %189 = vdwg.mxu0
  %v190 = vpack.c.bf16 %v179, %v176
  %v191 = vpack.c.bf16 %v187, %v184
  %v194 = vunpack.c.l.b16 %v190
  %v195 = vunpack.c.h.b16 %v190
  %v196 = vunpack.c.l.b16 %v191
  %v197 = vunpack.c.h.b16 %v191
  %v198 = vpack.c.b16 %v194, %v194
  %v199 = vpack.c.b16 %v195, %v195
  %v200 = vpack.c.b16 %v196, %v196
  %v201 = vpack.c.b16 %v197, %v197
  %vm206 = vcmask 781312
  %207 = vst.msk [vmem:[%s5] sm:$0xf] %vm206, %v198
  %208 = vst.msk [vmem:[%s5 + $0x4] sm:$0xf] %vm206, %v199
  %209 = vst.msk [vmem:[%s5 + $0x8] sm:$0xf] %vm206, %v200
  %210 = vst.msk [vmem:[%s5 + $0xc] sm:$0xf] %vm206, %v201
  // Predicated region
  $region26: #{vit_pose_forward.17} parent=0 // pred_check
    _
  $region27: #{vit_pose_forward.17} parent=0 // pred_check_branch
    %212 = sbr.rel (0) target = $region29
  $region28: #{vit_pose_forward.17} parent=0 // pred_region
    _
  $region29: #{vit_pose_forward.17} parent=0 // pred_fallthru
    _
  // Predicated region
  $region30: #{vit_pose_forward.17} parent=0 // pred_check
    _
  $region31: #{vit_pose_forward.17} parent=0 // pred_check_branch
    %214 = sbr.rel (0) target = $region33
  $region32: #{vit_pose_forward.17} parent=0 // pred_region
    _
  $region33: #{vit_pose_forward.17} parent=0 // pred_fallthru
    _

// kernel: vit_pose_forward.18
$region0: #{vit_pose_forward.18}
  #allocation0 [shape = 'u32[]', space=smem, size = 0x4, offset = 0x4, fixed_abs, tag = 'smem constant byte address 0x4 - core index']
  #allocation1 [shape = 'u32[144,128]{1,0:T(1,128)}', space=vmem, size = 0x12000, scoped, tag = 'internal scratch']
  %s0 = inlined_call_operand.vmem [shape: bf16[32,96], index: 0, kind: input, shape index: {}]
  %s1 = inlined_call_operand.vmem [shape: bf16[32,32], index: 1, kind: output, shape index: {}]
  %s2 = sld [smem:[#allocation0]]
  $region37: #{vit_pose_forward.18} parent=0
    _
  %s4 = ssub.s32 1, %s2
  %s5 = scalar_select 0, %s4, %s2
  loop: start=0, step=1, limit=4
  $region2: #{vit_pose_forward.18} parent=0 // loop_pre_header
    _
  $region3: #{vit_pose_forward.18} parent=0 // loop_header
    %s7 = sphi 0, %s11
    %p8 = scmp.ge.s32.totalorder %s7, 4
    %s17 = sphi 0, %s19
    %s20 = sphi 0, %s17
    %s21 = sphi 0, %s20
    %s37 = sphi 0, %s21
    %s43 = sphi 0, %s45
    %s46 = sphi 0, %s43
    %s47 = sphi 0, %s46
    %s63 = sphi 0, %s47
  $region4: #{vit_pose_forward.18} parent=0 // loop_header_branch
    %10 = sbr.rel (%p8) target = $region8
  $region5: #{vit_pose_forward.18} parent=0 // loop_body
    %s12 = ssub.s32 %s7, 1
    %s13 = ssub.s32 %s7, 2
    %s14 = sadd.s32 %s7, 1
    %s15 = ssub.s32 %s7, %s14
    %p16 = scmp.eq.s32.totalorder %s15, 0
    %s18 = sadd.s32 %s17, 1
    %s19 = scalar_select %p16, %s17, %s18
    %p22 = pneg %p16
    %p23 = scmp.eq.s32.totalorder %s7, 1
    %p24 = por %p22, %p23
    %p25 = scmp.ne.s32.totalorder %s17, %s20
    %p26 = scmp.eq.s32.totalorder %s7, 0
    %p27 = por %p25, %p26
    %p28 = scmp.ne.s32.totalorder %s17, %s20
    %p29 = scmp.eq.s32.totalorder %s12, 1
    %p30 = por %p28, %p29
    %p31 = scmp.ne.s32.totalorder %s20, %s21
    %p32 = scmp.eq.s32.totalorder %s12, 0
    %p33 = por %p31, %p32
    %p34 = scmp.ne.s32.totalorder %s20, %s21
    %p35 = scmp.eq.s32.totalorder %s13, 1
    %p36 = por %p34, %p35
    %p38 = scmp.ne.s32.totalorder %s21, %s37
    %p39 = scmp.eq.s32.totalorder %s13, 0
    %p40 = por %p38, %p39
    %s41 = ssub.s32 %s7, %s14
    %p42 = scmp.eq.s32.totalorder %s41, 0
    %s44 = sadd.s32 %s43, 1
    %s45 = scalar_select %p42, %s43, %s44
    %p48 = pneg %p42
    %p49 = scmp.eq.s32.totalorder %s7, 1
    %p50 = por %p48, %p49
    %p51 = scmp.ne.s32.totalorder %s43, %s46
    %p52 = scmp.eq.s32.totalorder %s7, 0
    %p53 = por %p51, %p52
    %p54 = scmp.ne.s32.totalorder %s43, %s46
    %p55 = scmp.eq.s32.totalorder %s12, 1
    %p56 = por %p54, %p55
    %p57 = scmp.ne.s32.totalorder %s46, %s47
    %p58 = scmp.eq.s32.totalorder %s12, 0
    %p59 = por %p57, %p58
    %p60 = scmp.ne.s32.totalorder %s46, %s47
    %p61 = scmp.eq.s32.totalorder %s13, 1
    %p62 = por %p60, %p61
    %p64 = scmp.ne.s32.totalorder %s47, %s63
    %p65 = scmp.eq.s32.totalorder %s13, 0
    %p66 = por %p64, %p65
    %p67 = scmp.le.s32.totalorder 1, %s7
    %p68 = scmp.lt.s32.totalorder %s7, 3
    %p69 = pnand %p67, %p68
    %p70 = pneg %p69
    // Predicated region
    $region9: #{vit_pose_forward.18} parent=5 // pred_check
      _
    $region10: #{vit_pose_forward.18} parent=5 // pred_check_branch
      %72 = sbr.rel (%p69) target = $region12
    $region11: #{vit_pose_forward.18} parent=5 // pred_region
      %s73 = ssub.s32 %s7, 1
    $region12: #{vit_pose_forward.18} parent=5 // pred_fallthru
      _
    %p74 = scmp.lt.s32.totalorder %s7, 2
    // Predicated region
    $region13: #{vit_pose_forward.18} parent=5 // pred_check
      %p75 = pneg %p74
    $region14: #{vit_pose_forward.18} parent=5 // pred_check_branch
      %77 = sbr.rel (%p75) target = $region16
    $region15: #{vit_pose_forward.18} parent=5 // pred_region
      // Predicated region
      $region17: #{vit_pose_forward.18} parent=15 // pred_check
        %p78 = pneg %p27
      $region18: #{vit_pose_forward.18} parent=15 // pred_check_branch
        %80 = sbr.rel (%p78) target = $region20
      $region19: #{vit_pose_forward.18} parent=15 // pred_region
        %s81 = smul.u32 2, %s7
        %p82 = scmp.lt.s32.totalorder %s81, 3
        %s83 = scalar_select %p82, %s81, 3
        %s84 = smul.addr %s83, 4
        %s85 = scalar_lea.vmem %s0, %s84
        %s86 = smul.u32 2, %s7
      $region20: #{vit_pose_forward.18} parent=15 // pred_fallthru
        _
    $region16: #{vit_pose_forward.18} parent=5 // pred_fallthru
      _
    %p87 = scmp.le.s32.totalorder 1, %s7
    %p88 = scmp.lt.s32.totalorder %s7, 3
    %p89 = pnand %p87, %p88
    %p90 = pneg %p89
    // Predicated region
    $region21: #{vit_pose_forward.18} parent=5 // pred_check
      _
    $region22: #{vit_pose_forward.18} parent=5 // pred_check_branch
      %92 = sbr.rel (%p89) target = $region24
    $region23: #{vit_pose_forward.18} parent=5 // pred_region
      %s93 = ssub.s32 %s7, 1
      %s94 = smul.u32 2, %s12
      %p95 = scmp.lt.s32.totalorder %s94, 3
      %s96 = scalar_select %p95, %s94, 3
      %s97 = smul.addr %s96, 4
      %s98 = scalar_lea.vmem %s0, %s97
      %p99 = pneg %p33
      %p100 = pneg %p30
      %p101 = pneg %p59
      %p102 = pneg %p56
      %s103 = smul.u32 2, %s12
      %p104 = scmp.lt.s32.totalorder %s103, 3
      %s105 = scalar_select %p104, %s103, 3
      %s106 = smul.addr %s105, 4
      %s107 = scalar_lea.vmem %s1, %s106
      %s108 = smul.u32 2, %s12
      %p109 = scmp.lt.s32.totalorder %s108, 3
      %s110 = scalar_select %p109, %s108, 3
      %s111 = smul.addr %s110, 4
      %s112 = scalar_lea.vmem %s0, %s111
      %s113 = smul.u32 2, %s12
      %s114 = smul.u32 2, %s12
      %p115 = scmp.lt.s32.totalorder %s114, 3
      %s116 = scalar_select %p115, %s114, 3
      %s117 = smul.addr %s116, 4
      %s118 = scalar_lea.vmem %s1, %s117
      %s119 = smul.u32 2, %s12
      %v121 = vld [vmem:[%s112] sm:$0xf]
      %v122 = vld [vmem:[%s112 + $0x4] sm:$0xf]
      %v125 = vunpack.c.l.b16 %v121
      %v126 = vunpack.c.l.b16 %v122
      %v127 = vpack.c.b16 %v126, %v125
      %128 = vrot.lane.b32.xlu0 %v127, 96
      %v129 = vpop.permute.xlu0 %128
      %vm130 = vcmask 64512
      %v132 = vsel %vm130, %v127, 0
      %v135 = vsel %vm130, %v129, 0
      %137 = vmatprep.subr.bf16.mxu0 0
      %138 = vmatpush1.bf16.xpose.msra.mxu0 %v135
      %139 = vmatprep.subr.bf16.mxu0 0
      %140 = vmatpush1.bf16.xpose.msra.mxu0 0
      %141 = vmatprep.subr.bf16.mxu0 0
      %142 = vmatpush1.bf16.xpose.msra.mxu0 0
      %143 = vmatprep.subr.bf16.mxu0 0
      %144 = vmatpush1.bf16.xpose.msra.mxu0 0
      %145 = vmatprep.subr.bf16.mxu0 0
      %146 = vmatpush1.bf16.xpose.msra.mxu0 0
      %147 = vmatprep.subr.bf16.mxu0 0
      %148 = vmatpush1.bf16.xpose.msra.mxu0 0
      %149 = vmatprep.subr.bf16.mxu0 0
      %150 = vmatpush1.bf16.xpose.msra.mxu0 0
      %151 = vmatprep.subr.bf16.mxu0 0
      %152 = vmatpush1.bf16.xpose.msra.mxu0 0
      %153 = vmatprep.subr.bf16.mxu0 0
      %154 = vmatpush1.bf16.xpose.msra.mxu0 0
      %155 = vmatprep.subr.bf16.mxu0 0
      %156 = vmatpush1.bf16.xpose.msra.mxu0 0
      %157 = vmatprep.subr.bf16.mxu0 0
      %158 = vmatpush1.bf16.xpose.msra.mxu0 0
      %159 = vmatprep.subr.bf16.mxu0 0
      %160 = vmatpush1.bf16.xpose.msra.mxu0 0
      %161 = vmatprep.subr.bf16.mxu0 0
      %162 = vmatpush1.bf16.xpose.msra.mxu0 0
      %163 = vmatprep.subr.bf16.mxu0 0
      %164 = vmatpush1.bf16.xpose.msra.mxu0 0
      %165 = vmatprep.subr.bf16.mxu0 0
      %166 = vmatpush1.bf16.xpose.msra.mxu0 0
      %167 = vmatprep.subr.bf16.mxu0 0
      %168 = vmatpush1.bf16.xpose.msra.mxu0 0
      %169 = vmatprep.mubr.bf16.mxu0 0
      %170 = vmatmul.mubr.bf16.gmra.mrb[0].mxu0 %v132
      %v171 = vpop.f32.mrb[0].mxu0
      %v172 = vadd.f32 0.0, %v171
      %v173 = vpop.f32.mrb[0].mxu0
      %v174 = vpop.f32.mrb[0].mxu0
      %v175 = vadd.f32 0.0, %v174
      %v176 = vpop.f32.mrb[0].mxu0
      %177 = vdwg.mxu0
      %vm178 = vcmask 130048
      %v179 = vsel %vm178, %v172, -inf
      %180 = vmax.xlane.f32.xlu0 %v179
      %v181 = vpop.xlane.xlu0 %180
      %v182 = vsel %vm178, %v175, -inf
      %183 = vmax.xlane.f32.xlu0 %v182
      %v184 = vpop.xlane.xlu0 %183
      %v185 = vsub.f32 %v172, %v181
      %v186 = vsub.f32 %v175, %v184
      %v187 = vmul.f32 %v185, 1.442695
      %v188 = vpow.pop %v187
      %v189 = vmul.f32 %v186, 1.442695
      %v190 = vpow.pop %v189
      %v191 = vsel %vm178, %v188, 0.0
      %192 = vadd.xlane.f32.xlu0 %v191
      %v193 = vpop.xlane.xlu0 %192
      %v194 = vsel %vm178, %v190, 0.0
      %195 = vadd.xlane.f32.xlu0 %v194
      %v196 = vpop.xlane.xlu0 %195
      %v197 = vpack.c.bf16 %v190, %v188
      %198 = vrot.lane.b32.xlu0 %v127, 64
      %v199 = vpop.permute.xlu0 %198
      %v202 = vsel %vm178, %v197, 0
      %204 = vmatprep.subr.bf16.mxu0 0
      %205 = vmatpush1.bf16.msra.mxu0 %v199
      %206 = vmatprep.subr.bf16.mxu0 0
      %207 = vmatpush1.bf16.msra.mxu0 0
      %208 = vmatprep.subr.bf16.mxu0 0
      %209 = vmatpush1.bf16.msra.mxu0 0
      %210 = vmatprep.subr.bf16.mxu0 0
      %211 = vmatpush1.bf16.msra.mxu0 0
      %212 = vmatprep.subr.bf16.mxu0 0
      %213 = vmatpush1.bf16.msra.mxu0 0
      %214 = vmatprep.subr.bf16.mxu0 0
      %215 = vmatpush1.bf16.msra.mxu0 0
      %216 = vmatprep.subr.bf16.mxu0 0
      %217 = vmatpush1.bf16.msra.mxu0 0
      %218 = vmatprep.subr.bf16.mxu0 0
      %219 = vmatpush1.bf16.msra.mxu0 0
      %220 = vmatprep.subr.bf16.mxu0 0
      %221 = vmatpush1.bf16.msra.mxu0 0
      %222 = vmatprep.subr.bf16.mxu0 0
      %223 = vmatpush1.bf16.msra.mxu0 0
      %224 = vmatprep.subr.bf16.mxu0 0
      %225 = vmatpush1.bf16.msra.mxu0 0
      %226 = vmatprep.subr.bf16.mxu0 0
      %227 = vmatpush1.bf16.msra.mxu0 0
      %228 = vmatprep.subr.bf16.mxu0 0
      %229 = vmatpush1.bf16.msra.mxu0 0
      %230 = vmatprep.subr.bf16.mxu0 0
      %231 = vmatpush1.bf16.msra.mxu0 0
      %232 = vmatprep.subr.bf16.mxu0 0
      %233 = vmatpush1.bf16.msra.mxu0 0
      %234 = vmatprep.subr.bf16.mxu0 0
      %235 = vmatpush1.bf16.msra.mxu0 0
      %236 = vmatprep.mubr.bf16.mxu0 0
      %237 = vmatmul.mubr.bf16.gmra.mrb[0].mxu0 %v202
      %v238 = vpop.f32.mrb[0].mxu0
      %v239 = vadd.f32 0.0, %v238
      %v240 = vpop.f32.mrb[0].mxu0
      %v241 = vpop.f32.mrb[0].mxu0
      %v242 = vadd.f32 0.0, %v241
      %v243 = vpop.f32.mrb[0].mxu0
      %244 = vdwg.mxu0
      %v245 = vrcp.pop %v193
      %v246 = vmul.f32 %v239, %v245
      %v247 = vrcp.pop %v196
      %v248 = vmul.f32 %v242, %v247
      %249 = vrot.lane.b32.xlu0 %v127, 120
      %v250 = vpop.permute.xlu0 %249
      %251 = vrot.lane.b32.xlu0 %v127, 88
      %v252 = vpop.permute.xlu0 %251
      %v254 = vsel %vm130, %v250, 0
      %v257 = vsel %vm130, %v252, 0
      %259 = vmatprep.subr.bf16.mxu0 0
      %260 = vmatpush1.bf16.xpose.msra.mxu0 %v257
      %261 = vmatprep.subr.bf16.mxu0 0
      %262 = vmatpush1.bf16.xpose.msra.mxu0 0
      %263 = vmatprep.subr.bf16.mxu0 0
      %264 = vmatpush1.bf16.xpose.msra.mxu0 0
      %265 = vmatprep.subr.bf16.mxu0 0
      %266 = vmatpush1.bf16.xpose.msra.mxu0 0
      %267 = vmatprep.subr.bf16.mxu0 0
      %268 = vmatpush1.bf16.xpose.msra.mxu0 0
      %269 = vmatprep.subr.bf16.mxu0 0
      %270 = vmatpush1.bf16.xpose.msra.mxu0 0
      %271 = vmatprep.subr.bf16.mxu0 0
      %272 = vmatpush1.bf16.xpose.msra.mxu0 0
      %273 = vmatprep.subr.bf16.mxu0 0
      %274 = vmatpush1.bf16.xpose.msra.mxu0 0
      %275 = vmatprep.subr.bf16.mxu0 0
      %276 = vmatpush1.bf16.xpose.msra.mxu0 0
      %277 = vmatprep.subr.bf16.mxu0 0
      %278 = vmatpush1.bf16.xpose.msra.mxu0 0
      %279 = vmatprep.subr.bf16.mxu0 0
      %280 = vmatpush1.bf16.xpose.msra.mxu0 0
      %281 = vmatprep.subr.bf16.mxu0 0
      %282 = vmatpush1.bf16.xpose.msra.mxu0 0
      %283 = vmatprep.subr.bf16.mxu0 0
      %284 = vmatpush1.bf16.xpose.msra.mxu0 0
      %285 = vmatprep.subr.bf16.mxu0 0
      %286 = vmatpush1.bf16.xpose.msra.mxu0 0
      %287 = vmatprep.subr.bf16.mxu0 0
      %288 = vmatpush1.bf16.xpose.msra.mxu0 0
      %289 = vmatprep.subr.bf16.mxu0 0
      %290 = vmatpush1.bf16.xpose.msra.mxu0 0
      %291 = vmatprep.mubr.bf16.mxu0 0
      %292 = vmatmul.mubr.bf16.gmra.mrb[0].mxu0 %v254
      %v293 = vpop.f32.mrb[0].mxu0
      %v294 = vadd.f32 0.0, %v293
      %v295 = vpop.f32.mrb[0].mxu0
      %v296 = vpop.f32.mrb[0].mxu0
      %v297 = vadd.f32 0.0, %v296
      %v298 = vpop.f32.mrb[0].mxu0
      %299 = vdwg.mxu0
      %v300 = vsel %vm178, %v294, -inf
      %301 = vmax.xlane.f32.xlu0 %v300
      %v302 = vpop.xlane.xlu0 %301
      %v303 = vsel %vm178, %v297, -inf
      %304 = vmax.xlane.f32.xlu0 %v303
      %v305 = vpop.xlane.xlu0 %304
      %v306 = vsub.f32 %v294, %v302
      %v307 = vsub.f32 %v297, %v305
      %v308 = vmul.f32 %v306, 1.442695
      %v309 = vpow.pop %v308
      %v310 = vmul.f32 %v307, 1.442695
      %v311 = vpow.pop %v310
      %v312 = vsel %vm178, %v309, 0.0
      %313 = vadd.xlane.f32.xlu0 %v312
      %v314 = vpop.xlane.xlu0 %313
      %v315 = vsel %vm178, %v311, 0.0
      %316 = vadd.xlane.f32.xlu0 %v315
      %v317 = vpop.xlane.xlu0 %316
      %v318 = vpack.c.bf16 %v311, %v309
      %319 = vrot.lane.b32.xlu0 %v127, 56
      %v320 = vpop.permute.xlu0 %319
      %v323 = vsel %vm178, %v318, 0
      %325 = vmatprep.subr.bf16.mxu0 0
      %326 = vmatpush1.bf16.msra.mxu0 %v320
      %327 = vmatprep.subr.bf16.mxu0 0
      %328 = vmatpush1.bf16.msra.mxu0 0
      %329 = vmatprep.subr.bf16.mxu0 0
      %330 = vmatpush1.bf16.msra.mxu0 0
      %331 = vmatprep.subr.bf16.mxu0 0
      %332 = vmatpush1.bf16.msra.mxu0 0
      %333 = vmatprep.subr.bf16.mxu0 0
      %334 = vmatpush1.bf16.msra.mxu0 0
      %335 = vmatprep.subr.bf16.mxu0 0
      %336 = vmatpush1.bf16.msra.mxu0 0
      %337 = vmatprep.subr.bf16.mxu0 0
      %338 = vmatpush1.bf16.msra.mxu0 0
      %339 = vmatprep.subr.bf16.mxu0 0
      %340 = vmatpush1.bf16.msra.mxu0 0
      %341 = vmatprep.subr.bf16.mxu0 0
      %342 = vmatpush1.bf16.msra.mxu0 0
      %343 = vmatprep.subr.bf16.mxu0 0
      %344 = vmatpush1.bf16.msra.mxu0 0
      %345 = vmatprep.subr.bf16.mxu0 0
      %346 = vmatpush1.bf16.msra.mxu0 0
      %347 = vmatprep.subr.bf16.mxu0 0
      %348 = vmatpush1.bf16.msra.mxu0 0
      %349 = vmatprep.subr.bf16.mxu0 0
      %350 = vmatpush1.bf16.msra.mxu0 0
      %351 = vmatprep.subr.bf16.mxu0 0
      %352 = vmatpush1.bf16.msra.mxu0 0
      %353 = vmatprep.subr.bf16.mxu0 0
      %354 = vmatpush1.bf16.msra.mxu0 0
      %355 = vmatprep.subr.bf16.mxu0 0
      %356 = vmatpush1.bf16.msra.mxu0 0
      %357 = vmatprep.mubr.bf16.mxu0 0
      %358 = vmatmul.mubr.bf16.gmra.mrb[0].mxu0 %v323
      %v359 = vpop.f32.mrb[0].mxu0
      %v360 = vadd.f32 0.0, %v359
      %v361 = vpop.f32.mrb[0].mxu0
      %v362 = vpop.f32.mrb[0].mxu0
      %v363 = vadd.f32 0.0, %v362
      %v364 = vpop.f32.mrb[0].mxu0
      %365 = vdwg.mxu0
      %v366 = vrcp.pop %v314
      %v367 = vmul.f32 %v360, %v366
      %v368 = vrcp.pop %v317
      %v369 = vmul.f32 %v363, %v368
      %370 = vrot.lane.b32.xlu0 %v127, 112
      %v371 = vpop.permute.xlu0 %370
      %372 = vrot.lane.b32.xlu0 %v127, 80
      %v373 = vpop.permute.xlu0 %372
      %v375 = vsel %vm130, %v371, 0
      %v378 = vsel %vm130, %v373, 0
      %380 = vmatprep.subr.bf16.mxu0 0
      %381 = vmatpush1.bf16.xpose.msra.mxu0 %v378
      %382 = vmatprep.subr.bf16.mxu0 0
      %383 = vmatpush1.bf16.xpose.msra.mxu0 0
      %384 = vmatprep.subr.bf16.mxu0 0
      %385 = vmatpush1.bf16.xpose.msra.mxu0 0
      %386 = vmatprep.subr.bf16.mxu0 0
      %387 = vmatpush1.bf16.xpose.msra.mxu0 0
      %388 = vmatprep.subr.bf16.mxu0 0
      %389 = vmatpush1.bf16.xpose.msra.mxu0 0
      %390 = vmatprep.subr.bf16.mxu0 0
      %391 = vmatpush1.bf16.xpose.msra.mxu0 0
      %392 = vmatprep.subr.bf16.mxu0 0
      %393 = vmatpush1.bf16.xpose.msra.mxu0 0
      %394 = vmatprep.subr.bf16.mxu0 0
      %395 = vmatpush1.bf16.xpose.msra.mxu0 0
      %396 = vmatprep.subr.bf16.mxu0 0
      %397 = vmatpush1.bf16.xpose.msra.mxu0 0
      %398 = vmatprep.subr.bf16.mxu0 0
      %399 = vmatpush1.bf16.xpose.msra.mxu0 0
      %400 = vmatprep.subr.bf16.mxu0 0
      %401 = vmatpush1.bf16.xpose.msra.mxu0 0
      %402 = vmatprep.subr.bf16.mxu0 0
      %403 = vmatpush1.bf16.xpose.msra.mxu0 0
      %404 = vmatprep.subr.bf16.mxu0 0
      %405 = vmatpush1.bf16.xpose.msra.mxu0 0
      %406 = vmatprep.subr.bf16.mxu0 0
      %407 = vmatpush1.bf16.xpose.msra.mxu0 0
      %408 = vmatprep.subr.bf16.mxu0 0
      %409 = vmatpush1.bf16.xpose.msra.mxu0 0
      %410 = vmatprep.subr.bf16.mxu0 0
      %411 = vmatpush1.bf16.xpose.msra.mxu0 0
      %412 = vmatprep.mubr.bf16.mxu0 0
      %413 = vmatmul.mubr.bf16.gmra.mrb[0].mxu0 %v375
      %v414 = vpop.f32.mrb[0].mxu0
      %v415 = vadd.f32 0.0, %v414
      %v416 = vpop.f32.mrb[0].mxu0
      %v417 = vpop.f32.mrb[0].mxu0
      %v418 = vadd.f32 0.0, %v417
      %v419 = vpop.f32.mrb[0].mxu0
      %420 = vdwg.mxu0
      %v421 = vsel %vm178, %v415, -inf
      %422 = vmax.xlane.f32.xlu0 %v421
      %v423 = vpop.xlane.xlu0 %422
      %v424 = vsel %vm178, %v418, -inf
      %425 = vmax.xlane.f32.xlu0 %v424
      %v426 = vpop.xlane.xlu0 %425
      %v427 = vsub.f32 %v415, %v423
      %v428 = vsub.f32 %v418, %v426
      %v429 = vmul.f32 %v427, 1.442695
      %v430 = vpow.pop %v429
      %v431 = vmul.f32 %v428, 1.442695
      %v432 = vpow.pop %v431
      %v433 = vsel %vm178, %v430, 0.0
      %434 = vadd.xlane.f32.xlu0 %v433
      %v435 = vpop.xlane.xlu0 %434
      %v436 = vsel %vm178, %v432, 0.0
      %437 = vadd.xlane.f32.xlu0 %v436
      %v438 = vpop.xlane.xlu0 %437
      %v439 = vpack.c.bf16 %v432, %v430
      %440 = vrot.lane.b32.xlu0 %v127, 48
      %v441 = vpop.permute.xlu0 %440
      %v444 = vsel %vm178, %v439, 0
      %446 = vmatprep.subr.bf16.mxu0 0
      %447 = vmatpush1.bf16.msra.mxu0 %v441
      %448 = vmatprep.subr.bf16.mxu0 0
      %449 = vmatpush1.bf16.msra.mxu0 0
      %450 = vmatprep.subr.bf16.mxu0 0
      %451 = vmatpush1.bf16.msra.mxu0 0
      %452 = vmatprep.subr.bf16.mxu0 0
      %453 = vmatpush1.bf16.msra.mxu0 0
      %454 = vmatprep.subr.bf16.mxu0 0
      %455 = vmatpush1.bf16.msra.mxu0 0
      %456 = vmatprep.subr.bf16.mxu0 0
      %457 = vmatpush1.bf16.msra.mxu0 0
      %458 = vmatprep.subr.bf16.mxu0 0
      %459 = vmatpush1.bf16.msra.mxu0 0
      %460 = vmatprep.subr.bf16.mxu0 0
      %461 = vmatpush1.bf16.msra.mxu0 0
      %462 = vmatprep.subr.bf16.mxu0 0
      %463 = vmatpush1.bf16.msra.mxu0 0
      %464 = vmatprep.subr.bf16.mxu0 0
      %465 = vmatpush1.bf16.msra.mxu0 0
      %466 = vmatprep.subr.bf16.mxu0 0
      %467 = vmatpush1.bf16.msra.mxu0 0
      %468 = vmatprep.subr.bf16.mxu0 0
      %469 = vmatpush1.bf16.msra.mxu0 0
      %470 = vmatprep.subr.bf16.mxu0 0
      %471 = vmatpush1.bf16.msra.mxu0 0
      %472 = vmatprep.subr.bf16.mxu0 0
      %473 = vmatpush1.bf16.msra.mxu0 0
      %474 = vmatprep.subr.bf16.mxu0 0
      %475 = vmatpush1.bf16.msra.mxu0 0
      %476 = vmatprep.subr.bf16.mxu0 0
      %477 = vmatpush1.bf16.msra.mxu0 0
      %478 = vmatprep.mubr.bf16.mxu0 0
      %479 = vmatmul.mubr.bf16.gmra.mrb[0].mxu0 %v444
      %v480 = vpop.f32.mrb[0].mxu0
      %v481 = vadd.f32 0.0, %v480
      %v482 = vpop.f32.mrb[0].mxu0
      %v483 = vpop.f32.mrb[0].mxu0
      %v484 = vadd.f32 0.0, %v483
      %v485 = vpop.f32.mrb[0].mxu0
      %486 = vdwg.mxu0
      %v487 = vrcp.pop %v435
      %v488 = vmul.f32 %v481, %v487
      %v489 = vrcp.pop %v438
      %v490 = vmul.f32 %v484, %v489
      %491 = vrot.lane.b32.xlu0 %v127, 104
      %v492 = vpop.permute.xlu0 %491
      %493 = vrot.lane.b32.xlu0 %v127, 72
      %v494 = vpop.permute.xlu0 %493
      %v496 = vsel %vm130, %v492, 0
      %v499 = vsel %vm130, %v494, 0
      %501 = vmatprep.subr.bf16.mxu0 0
      %502 = vmatpush1.bf16.xpose.msra.mxu0 %v499
      %503 = vmatprep.subr.bf16.mxu0 0
      %504 = vmatpush1.bf16.xpose.msra.mxu0 0
      %505 = vmatprep.subr.bf16.mxu0 0
      %506 = vmatpush1.bf16.xpose.msra.mxu0 0
      %507 = vmatprep.subr.bf16.mxu0 0
      %508 = vmatpush1.bf16.xpose.msra.mxu0 0
      %509 = vmatprep.subr.bf16.mxu0 0
      %510 = vmatpush1.bf16.xpose.msra.mxu0 0
      %511 = vmatprep.subr.bf16.mxu0 0
      %512 = vmatpush1.bf16.xpose.msra.mxu0 0
      %513 = vmatprep.subr.bf16.mxu0 0
      %514 = vmatpush1.bf16.xpose.msra.mxu0 0
      %515 = vmatprep.subr.bf16.mxu0 0
      %516 = vmatpush1.bf16.xpose.msra.mxu0 0
      %517 = vmatprep.subr.bf16.mxu0 0
      %518 = vmatpush1.bf16.xpose.msra.mxu0 0
      %519 = vmatprep.subr.bf16.mxu0 0
      %520 = vmatpush1.bf16.xpose.msra.mxu0 0
      %521 = vmatprep.subr.bf16.mxu0 0
      %522 = vmatpush1.bf16.xpose.msra.mxu0 0
      %523 = vmatprep.subr.bf16.mxu0 0
      %524 = vmatpush1.bf16.xpose.msra.mxu0 0
      %525 = vmatprep.subr.bf16.mxu0 0
      %526 = vmatpush1.bf16.xpose.msra.mxu0 0
      %527 = vmatprep.subr.bf16.mxu0 0
      %528 = vmatpush1.bf16.xpose.msra.mxu0 0
      %529 = vmatprep.subr.bf16.mxu0 0
      %530 = vmatpush1.bf16.xpose.msra.mxu0 0
      %531 = vmatprep.subr.bf16.mxu0 0
      %532 = vmatpush1.bf16.xpose.msra.mxu0 0
      %533 = vmatprep.mubr.bf16.mxu0 0
      %534 = vmatmul.mubr.bf16.gmra.mrb[0].mxu0 %v496
      %v535 = vpop.f32.mrb[0].mxu0
      %v536 = vadd.f32 0.0, %v535
      %v537 = vpop.f32.mrb[0].mxu0
      %v538 = vpop.f32.mrb[0].mxu0
      %v539 = vadd.f32 0.0, %v538
      %v540 = vpop.f32.mrb[0].mxu0
      %541 = vdwg.mxu0
      %v542 = vsel %vm178, %v536, -inf
      %543 = vmax.xlane.f32.xlu0 %v542
      %v544 = vpop.xlane.xlu0 %543
      %v545 = vsel %vm178, %v539, -inf
      %546 = vmax.xlane.f32.xlu0 %v545
      %v547 = vpop.xlane.xlu0 %546
      %v548 = vsub.f32 %v536, %v544
      %v549 = vsub.f32 %v539, %v547
      %v550 = vmul.f32 %v548, 1.442695
      %v551 = vpow.pop %v550
      %v552 = vmul.f32 %v549, 1.442695
      %v553 = vpow.pop %v552
      %v554 = vsel %vm178, %v551, 0.0
      %555 = vadd.xlane.f32.xlu0 %v554
      %v556 = vpop.xlane.xlu0 %555
      %v557 = vsel %vm178, %v553, 0.0
      %558 = vadd.xlane.f32.xlu0 %v557
      %v559 = vpop.xlane.xlu0 %558
      %v560 = vpack.c.bf16 %v553, %v551
      %561 = vrot.lane.b32.xlu0 %v127, 40
      %v562 = vpop.permute.xlu0 %561
      %v565 = vsel %vm178, %v560, 0
      %567 = vmatprep.subr.bf16.mxu0 0
      %568 = vmatpush1.bf16.msra.mxu0 %v562
      %569 = vmatprep.subr.bf16.mxu0 0
      %570 = vmatpush1.bf16.msra.mxu0 0
      %571 = vmatprep.subr.bf16.mxu0 0
      %572 = vmatpush1.bf16.msra.mxu0 0
      %573 = vmatprep.subr.bf16.mxu0 0
      %574 = vmatpush1.bf16.msra.mxu0 0
      %575 = vmatprep.subr.bf16.mxu0 0
      %576 = vmatpush1.bf16.msra.mxu0 0
      %577 = vmatprep.subr.bf16.mxu0 0
      %578 = vmatpush1.bf16.msra.mxu0 0
      %579 = vmatprep.subr.bf16.mxu0 0
      %580 = vmatpush1.bf16.msra.mxu0 0
      %581 = vmatprep.subr.bf16.mxu0 0
      %582 = vmatpush1.bf16.msra.mxu0 0
      %583 = vmatprep.subr.bf16.mxu0 0
      %584 = vmatpush1.bf16.msra.mxu0 0
      %585 = vmatprep.subr.bf16.mxu0 0
      %586 = vmatpush1.bf16.msra.mxu0 0
      %587 = vmatprep.subr.bf16.mxu0 0
      %588 = vmatpush1.bf16.msra.mxu0 0
      %589 = vmatprep.subr.bf16.mxu0 0
      %590 = vmatpush1.bf16.msra.mxu0 0
      %591 = vmatprep.subr.bf16.mxu0 0
      %592 = vmatpush1.bf16.msra.mxu0 0
      %593 = vmatprep.subr.bf16.mxu0 0
      %594 = vmatpush1.bf16.msra.mxu0 0
      %595 = vmatprep.subr.bf16.mxu0 0
      %596 = vmatpush1.bf16.msra.mxu0 0
      %597 = vmatprep.subr.bf16.mxu0 0
      %598 = vmatpush1.bf16.msra.mxu0 0
      %599 = vmatprep.mubr.bf16.mxu0 0
      %600 = vmatmul.mubr.bf16.gmra.mrb[0].mxu0 %v565
      %v601 = vpop.f32.mrb[0].mxu0
      %v602 = vadd.f32 0.0, %v601
      %v603 = vpop.f32.mrb[0].mxu0
      %v604 = vpop.f32.mrb[0].mxu0
      %v605 = vadd.f32 0.0, %v604
      %v606 = vpop.f32.mrb[0].mxu0
      %607 = vdwg.mxu0
      %v608 = vrcp.pop %v556
      %v609 = vmul.f32 %v602, %v608
      %v610 = vrcp.pop %v559
      %v611 = vmul.f32 %v605, %v610
      %614 = vrot.lane.b32.xlu0 %v367, 8
      %v615 = vpop.permute.xlu0 %614
      %616 = vrot.lane.b32.xlu0 %v369, 8
      %v617 = vpop.permute.xlu0 %616
      %622 = vrot.lane.b32.xlu0 %v488, 16
      %v623 = vpop.permute.xlu0 %622
      %624 = vrot.lane.b32.xlu0 %v490, 16
      %v625 = vpop.permute.xlu0 %624
      %630 = vrot.lane.b32.xlu0 %v609, 24
      %v631 = vpop.permute.xlu0 %630
      %632 = vrot.lane.b32.xlu0 %v611, 24
      %v633 = vpop.permute.xlu0 %632
      %v636 = vsel %vm130, %v246, %v615
      %v637 = vsel %vm130, %v248, %v617
      %v638 = vsel %vm178, %v636, %v623
      %v639 = vsel %vm178, %v637, %v625
      %vm640 = vcmask 195584
      %v641 = vsel %vm640, %v638, %v631
      %v642 = vsel %vm640, %v639, %v633
      %v643 = vpack.c.bf16 %v642, %v641
      %v645 = vunpack.c.l.b16 %v643
      %v646 = vunpack.c.h.b16 %v643
      %v647 = vpack.c.b16 %v645, %v645
      %v648 = vpack.c.b16 %v646, %v646
      %vm651 = vcmask 257024
      %652 = vst.msk [vmem:[%s118] sm:$0xf] %vm651, %v647
      %653 = vst.msk [vmem:[%s118 + $0x4] sm:$0xf] %vm651, %v648
      %s654 = smul.u32 2, %s12
      %p655 = scmp.lt.s32.totalorder %s654, 3
      %s656 = scalar_select %p655, %s654, 3
      %s657 = smul.addr %s656, 4
      %s658 = scalar_lea.vmem %s1, %s657
      // Predicated region
      $region25: #{vit_pose_forward.18} parent=23 // pred_check
        %p659 = pneg %p56
      $region26: #{vit_pose_forward.18} parent=23 // pred_check_branch
        %661 = sbr.rel (%p659) target = $region28
      $region27: #{vit_pose_forward.18} parent=23 // pred_region
        %s662 = smul.u32 2, %s12
      $region28: #{vit_pose_forward.18} parent=23 // pred_fallthru
        _
    $region24: #{vit_pose_forward.18} parent=5 // pred_fallthru
      _
    %p663 = scmp.le.s32.totalorder 2, %s7
    // Predicated region
    $region29: #{vit_pose_forward.18} parent=5 // pred_check
      %p664 = pneg %p663
    $region30: #{vit_pose_forward.18} parent=5 // pred_check_branch
      %666 = sbr.rel (%p664) target = $region32
    $region31: #{vit_pose_forward.18} parent=5 // pred_region
      %s667 = ssub.s32 %s7, 2
      // Predicated region
      $region33: #{vit_pose_forward.18} parent=31 // pred_check
        %p668 = pneg %p62
      $region34: #{vit_pose_forward.18} parent=31 // pred_check_branch
        %670 = sbr.rel (%p668) target = $region36
      $region35: #{vit_pose_forward.18} parent=31 // pred_region
        %s671 = smul.u32 2, %s13
        %p672 = scmp.lt.s32.totalorder %s671, 3
        %s673 = scalar_select %p672, %s671, 3
        %s674 = smul.addr %s673, 4
        %s675 = scalar_lea.vmem %s1, %s674
      $region36: #{vit_pose_forward.18} parent=31 // pred_fallthru
        _
    $region32: #{vit_pose_forward.18} parent=5 // pred_fallthru
      _
  $region6: #{vit_pose_forward.18} parent=0 // loop_footer
    %s11 = sadd.s32 1, %s7
  $region7: #{vit_pose_forward.18} parent=0 // loop_footer_branch
    %6 = sbr.rel target = $region3
  $region8: #{vit_pose_forward.18} parent=0 // loop_exit
    _

// kernel: vit_pose_forward.19
$region0: #{vit_pose_forward.19}
  #allocation0 [shape = 'u32[]', space=smem, size = 0x4, offset = 0x4, fixed_abs, tag = 'smem constant byte address 0x4 - core index']
  #allocation1 [shape = 'u32[144,128]{1,0:T(1,128)}', space=vmem, size = 0x12000, scoped, tag = 'internal scratch']
  %s0 = inlined_call_operand.vmem [shape: bf16[32,32], index: 0, kind: input, shape index: {}]
  %s1 = inlined_call_operand.vmem [shape: bf16[32,32], index: 1, kind: input, shape index: {}]
  %s2 = inlined_call_operand.vmem [shape: f32[1,32], index: 2, kind: input, shape index: {}]
  %s3 = inlined_call_operand.vmem [shape: f32[32,32], index: 3, kind: input, shape index: {}]
  %s4 = inlined_call_operand.vmem [shape: f32[32,32], index: 4, kind: output, shape index: {}]
  %s5 = sld [smem:[#allocation0]]
  $region26: #{vit_pose_forward.19} parent=0
    _
  %s7 = ssub.s32 1, %s5
  %s8 = scalar_select 0, %s7, %s5
  // Predicated region
  $region2: #{vit_pose_forward.19} parent=0 // pred_check
    _
  $region3: #{vit_pose_forward.19} parent=0 // pred_check_branch
    %10 = sbr.rel (0) target = $region5
  $region4: #{vit_pose_forward.19} parent=0 // pred_region
    _
  $region5: #{vit_pose_forward.19} parent=0 // pred_fallthru
    _
  // Predicated region
  $region6: #{vit_pose_forward.19} parent=0 // pred_check
    _
  $region7: #{vit_pose_forward.19} parent=0 // pred_check_branch
    %12 = sbr.rel (0) target = $region9
  $region8: #{vit_pose_forward.19} parent=0 // pred_region
    _
  $region9: #{vit_pose_forward.19} parent=0 // pred_fallthru
    _
  // Predicated region
  $region10: #{vit_pose_forward.19} parent=0 // pred_check
    _
  $region11: #{vit_pose_forward.19} parent=0 // pred_check_branch
    %14 = sbr.rel (0) target = $region13
  $region12: #{vit_pose_forward.19} parent=0 // pred_region
    _
  $region13: #{vit_pose_forward.19} parent=0 // pred_fallthru
    _
  // Predicated region
  $region14: #{vit_pose_forward.19} parent=0 // pred_check
    _
  $region15: #{vit_pose_forward.19} parent=0 // pred_check_branch
    %16 = sbr.rel (0) target = $region17
  $region16: #{vit_pose_forward.19} parent=0 // pred_region
    _
  $region17: #{vit_pose_forward.19} parent=0 // pred_fallthru
    _
  %v18 = vld [vmem:[%s0] sm:$0xf]
  %v19 = vld [vmem:[%s0 + $0x4] sm:$0xf]
  %v20 = vld [vmem:[%s0 + $0x8] sm:$0xf]
  %v21 = vld [vmem:[%s0 + $0xc] sm:$0xf]
  %v22 = vld [vmem:[%s1] sm:$0xf]
  %v23 = vld [vmem:[%s1 + $0x4] sm:$0xf]
  %v24 = vld [vmem:[%s1 + $0x8] sm:$0xf]
  %v25 = vld [vmem:[%s1 + $0xc] sm:$0xf]
  %v26 = vld [vmem:[%s2] sm:$0x1]
  %v28 = vlaneseq
  %v29 = vshrl.u32 %v28, 7
  %v30 = vsub.s32 0, %v29
  %v31 = vrot.slane %v26, %v30
  %v37 = vunpack.c.l.b16 %v18
  %v38 = vunpack.c.l.b16 %v19
  %v39 = vunpack.c.l.b16 %v20
  %v40 = vunpack.c.l.b16 %v21
  %v41 = vpack.c.b16 %v38, %v37
  %v42 = vpack.c.b16 %v40, %v39
  %v47 = vunpack.c.l.b16 %v22
  %v48 = vunpack.c.l.b16 %v23
  %v49 = vunpack.c.l.b16 %v24
  %v50 = vunpack.c.l.b16 %v25
  %v51 = vpack.c.b16 %v48, %v47
  %v52 = vpack.c.b16 %v50, %v49
  %vm55 = vcmask 261120
  %v57 = vsel %vm55, %v41, 0
  %v60 = vsel %vm55, %v42, 0
  %62 = vmatprep.subr.bf16.mxu0 0
  %63 = vmatpush1.bf16.msra.mxu0 %v51
  %64 = vmatprep.subr.bf16.mxu0 0
  %65 = vmatpush1.bf16.msra.mxu0 %v52
  %66 = vmatprep.subr.bf16.mxu0 0
  %67 = vmatpush1.bf16.msra.mxu0 0
  %68 = vmatprep.subr.bf16.mxu0 0
  %69 = vmatpush1.bf16.msra.mxu0 0
  %70 = vmatprep.subr.bf16.mxu0 0
  %71 = vmatpush1.bf16.msra.mxu0 0
  %72 = vmatprep.subr.bf16.mxu0 0
  %73 = vmatpush1.bf16.msra.mxu0 0
  %74 = vmatprep.subr.bf16.mxu0 0
  %75 = vmatpush1.bf16.msra.mxu0 0
  %76 = vmatprep.subr.bf16.mxu0 0
  %77 = vmatpush1.bf16.msra.mxu0 0
  %78 = vmatprep.subr.bf16.mxu0 0
  %79 = vmatpush1.bf16.msra.mxu0 0
  %80 = vmatprep.subr.bf16.mxu0 0
  %81 = vmatpush1.bf16.msra.mxu0 0
  %82 = vmatprep.subr.bf16.mxu0 0
  %83 = vmatpush1.bf16.msra.mxu0 0
  %84 = vmatprep.subr.bf16.mxu0 0
  %85 = vmatpush1.bf16.msra.mxu0 0
  %86 = vmatprep.subr.bf16.mxu0 0
  %87 = vmatpush1.bf16.msra.mxu0 0
  %88 = vmatprep.subr.bf16.mxu0 0
  %89 = vmatpush1.bf16.msra.mxu0 0
  %90 = vmatprep.subr.bf16.mxu0 0
  %91 = vmatpush1.bf16.msra.mxu0 0
  %92 = vmatprep.subr.bf16.mxu0 0
  %93 = vmatpush1.bf16.msra.mxu0 0
  %94 = vmatprep.mubr.bf16.mxu0 0
  %95 = vmatmul.mubr.bf16.gmra.mrb[0].mxu0 %v57
  %v96 = vpop.f32.mrb[0].mxu0
  %v97 = vadd.f32 %v31, %v96
  %v98 = vpop.f32.mrb[0].mxu0
  %v99 = vpop.f32.mrb[0].mxu0
  %v100 = vadd.f32 %v31, %v99
  %v101 = vpop.f32.mrb[0].mxu0
  %102 = vmatprep.mubr.bf16.mxu0 0
  %103 = vmatmul.mubr.bf16.gmra.mrb[0].mxu0 %v60
  %v104 = vpop.f32.mrb[0].mxu0
  %v105 = vadd.f32 %v31, %v104
  %v106 = vpop.f32.mrb[0].mxu0
  %v107 = vpop.f32.mrb[0].mxu0
  %v108 = vadd.f32 %v31, %v107
  %v109 = vpop.f32.mrb[0].mxu0
  %110 = vdwg.mxu0
  %v111 = vld [vmem:[%s3] sm:$0xff]
  %v112 = vld [vmem:[%s3 + $0x8] sm:$0xff]
  %v113 = vld [vmem:[%s3 + $0x10] sm:$0xff]
  %v114 = vld [vmem:[%s3 + $0x18] sm:$0xff]
  %v115 = vadd.f32 %v97, %v111
  %v116 = vadd.f32 %v100, %v112
  %v117 = vadd.f32 %v105, %v113
  %v118 = vadd.f32 %v108, %v114
  %119 = vst.msk [vmem:[%s4] sm:$0xff] %vm55, %v115
  %120 = vst.msk [vmem:[%s4 + $0x8] sm:$0xff] %vm55, %v116
  %121 = vst.msk [vmem:[%s4 + $0x10] sm:$0xff] %vm55, %v117
  %122 = vst.msk [vmem:[%s4 + $0x18] sm:$0xff] %vm55, %v118
  // Predicated region
  $region18: #{vit_pose_forward.19} parent=0 // pred_check
    _
  $region19: #{vit_pose_forward.19} parent=0 // pred_check_branch
    %124 = sbr.rel (0) target = $region21
  $region20: #{vit_pose_forward.19} parent=0 // pred_region
    _
  $region21: #{vit_pose_forward.19} parent=0 // pred_fallthru
    _
  // Predicated region
  $region22: #{vit_pose_forward.19} parent=0 // pred_check
    _
  $region23: #{vit_pose_forward.19} parent=0 // pred_check_branch
    %126 = sbr.rel (0) target = $region25
  $region24: #{vit_pose_forward.19} parent=0 // pred_region
    _
  $region25: #{vit_pose_forward.19} parent=0 // pred_fallthru
    _

// kernel: vit_pose_forward.20
$region0: #{vit_pose_forward.20}
  #allocation0 [shape = 'u32[]', space=smem, size = 0x4, offset = 0x4, fixed_abs, tag = 'smem constant byte address 0x4 - core index']
  #allocation1 [shape = 'u32[144,128]{1,0:T(1,128)}', space=vmem, size = 0x12000, scoped, tag = 'internal scratch']
  #allocation2 [shape = 'bf16[32,32]{1,0:T(16,128)(2,1)}', space=vmem, size = 0x2000, scoped, tag = 'scratch operand']
  %s0 = inlined_call_operand.vmem [shape: f32[32,32], index: 0, kind: input, shape index: {}]
  %s1 = inlined_call_operand.vmem [shape: bf16[32,128], index: 1, kind: input, shape index: {}]
  %s2 = inlined_call_operand.vmem [shape: f32[1,128], index: 2, kind: input, shape index: {}]
  %s3 = inlined_call_operand.vmem [shape: f32[1,32], index: 3, kind: input, shape index: {}]
  %s4 = inlined_call_operand.vmem [shape: f32[1,32], index: 4, kind: input, shape index: {}]
  %s5 = inlined_call_operand.vmem [shape: bf16[32,128], index: 5, kind: output, shape index: {}]
  %s6 = sld [smem:[#allocation0]]
  $region34: #{vit_pose_forward.20} parent=0
    _
  %s8 = ssub.s32 1, %s6
  %s9 = scalar_select 0, %s8, %s6
  // Predicated region
  $region2: #{vit_pose_forward.20} parent=0 // pred_check
    _
  $region3: #{vit_pose_forward.20} parent=0 // pred_check_branch
    %11 = sbr.rel (0) target = $region5
  $region4: #{vit_pose_forward.20} parent=0 // pred_region
    _
  $region5: #{vit_pose_forward.20} parent=0 // pred_fallthru
    _
  // Predicated region
  $region6: #{vit_pose_forward.20} parent=0 // pred_check
    _
  $region7: #{vit_pose_forward.20} parent=0 // pred_check_branch
    %13 = sbr.rel (0) target = $region9
  $region8: #{vit_pose_forward.20} parent=0 // pred_region
    _
  $region9: #{vit_pose_forward.20} parent=0 // pred_fallthru
    _
  // Predicated region
  $region10: #{vit_pose_forward.20} parent=0 // pred_check
    _
  $region11: #{vit_pose_forward.20} parent=0 // pred_check_branch
    %15 = sbr.rel (0) target = $region13
  $region12: #{vit_pose_forward.20} parent=0 // pred_region
    _
  $region13: #{vit_pose_forward.20} parent=0 // pred_fallthru
    _
  // Predicated region
  $region14: #{vit_pose_forward.20} parent=0 // pred_check
    _
  $region15: #{vit_pose_forward.20} parent=0 // pred_check_branch
    %17 = sbr.rel (0) target = $region17
  $region16: #{vit_pose_forward.20} parent=0 // pred_region
    _
  $region17: #{vit_pose_forward.20} parent=0 // pred_fallthru
    _
  // Predicated region
  $region18: #{vit_pose_forward.20} parent=0 // pred_check
    _
  $region19: #{vit_pose_forward.20} parent=0 // pred_check_branch
    %19 = sbr.rel (0) target = $region21
  $region20: #{vit_pose_forward.20} parent=0 // pred_region
    _
  $region21: #{vit_pose_forward.20} parent=0 // pred_fallthru
    _
  %p21 = scmp.eq.s32.totalorder 0, 0
  // Predicated region
  $region22: #{vit_pose_forward.20} parent=0 // pred_check
    %p22 = pneg %p21
  $region23: #{vit_pose_forward.20} parent=0 // pred_check_branch
    %24 = sbr.rel (%p22) target = $region25
  $region24: #{vit_pose_forward.20} parent=0 // pred_region
    %v25 = vld [vmem:[%s0] sm:$0xff]
    %v26 = vld [vmem:[%s0 + $0x8] sm:$0xff]
    %v27 = vld [vmem:[%s0 + $0x10] sm:$0xff]
    %v28 = vld [vmem:[%s0 + $0x18] sm:$0xff]
    %vm29 = vcmask 261120
    %v30 = vsel %vm29, %v25, 0.0
    %31 = vadd.xlane.f32.xlu0 %v30
    %v32 = vpop.xlane.xlu0 %31
    %v33 = vsel %vm29, %v26, 0.0
    %34 = vadd.xlane.f32.xlu0 %v33
    %v35 = vpop.xlane.xlu0 %34
    %v36 = vsel %vm29, %v27, 0.0
    %37 = vadd.xlane.f32.xlu0 %v36
    %v38 = vpop.xlane.xlu0 %37
    %v39 = vsel %vm29, %v28, 0.0
    %40 = vadd.xlane.f32.xlu0 %v39
    %v41 = vpop.xlane.xlu0 %40
    %v42 = vrcp.pop 32.0
    %v43 = vmul.f32 %v32, %v42
    %v44 = vmul.f32 %v35, %v42
    %v45 = vmul.f32 %v38, %v42
    %v46 = vmul.f32 %v41, %v42
    %v47 = vsub.f32 %v25, %v43
    %v48 = vsub.f32 %v26, %v44
    %v49 = vsub.f32 %v27, %v45
    %v50 = vsub.f32 %v28, %v46
    %v51 = vmul.f32 %v47, %v47
    %v52 = vmul.f32 %v48, %v48
    %v53 = vmul.f32 %v49, %v49
    %v54 = vmul.f32 %v50, %v50
    %v55 = vsel %vm29, %v51, 0.0
    %56 = vadd.xlane.f32.xlu0 %v55
    %v57 = vpop.xlane.xlu0 %56
    %v58 = vsel %vm29, %v52, 0.0
    %59 = vadd.xlane.f32.xlu0 %v58
    %v60 = vpop.xlane.xlu0 %59
    %v61 = vsel %vm29, %v53, 0.0
    %62 = vadd.xlane.f32.xlu0 %v61
    %v63 = vpop.xlane.xlu0 %62
    %v64 = vsel %vm29, %v54, 0.0
    %65 = vadd.xlane.f32.xlu0 %v64
    %v66 = vpop.xlane.xlu0 %65
    %v67 = vmul.f32 %v57, %v42
    %v68 = vmul.f32 %v60, %v42
    %v69 = vmul.f32 %v63, %v42
    %v70 = vmul.f32 %v66, %v42
    %v71 = vadd.f32 %v67, 1e-06
    %v72 = vadd.f32 %v68, 1e-06
    %v73 = vadd.f32 %v69, 1e-06
    %v74 = vadd.f32 %v70, 1e-06
    %v75 = vrsqrt.pop %v71
    %v76 = vrsqrt.pop %v72
    %v77 = vrsqrt.pop %v73
    %v78 = vrsqrt.pop %v74
    %v79 = vmul.f32 %v47, %v75
    %v80 = vmul.f32 %v48, %v76
    %v81 = vmul.f32 %v49, %v77
    %v82 = vmul.f32 %v50, %v78
    %v83 = vld [vmem:[%s3] sm:$0x1]
    %v85 = vlaneseq
    %v86 = vshrl.u32 %v85, 7
    %v87 = vsub.s32 0, %v86
    %v88 = vrot.slane %v83, %v87
    %v90 = vmul.f32 %v79, %v88
    %v91 = vmul.f32 %v80, %v88
    %v92 = vmul.f32 %v81, %v88
    %v93 = vmul.f32 %v82, %v88
    %v94 = vld [vmem:[%s4] sm:$0x1]
    %v96 = vlaneseq
    %v97 = vshrl.u32 %v96, 7
    %v98 = vsub.s32 0, %v97
    %v99 = vrot.slane %v94, %v98
    %v101 = vadd.f32 %v90, %v99
    %v102 = vadd.f32 %v91, %v99
    %v103 = vadd.f32 %v92, %v99
    %v104 = vadd.f32 %v93, %v99
    %v105 = vpack.c.bf16 %v102, %v101
    %v106 = vpack.c.bf16 %v104, %v103
    %107 = vst.msk [vmem:[#allocation2] sm:$0xff] %vm29, %v105
    %108 = vst.msk [vmem:[#allocation2 + $0x8] sm:$0xff] %vm29, %v106
  $region25: #{vit_pose_forward.20} parent=0 // pred_fallthru
    _
  %v109 = vld [vmem:[#allocation2] sm:$0xff]
  %v110 = vld [vmem:[#allocation2 + $0x8] sm:$0xff]
  %v111 = vld [vmem:[%s1] sm:$0xf]
  %v112 = vld [vmem:[%s1 + $0x4] sm:$0xf]
  %v113 = vld [vmem:[%s1 + $0x8] sm:$0xf]
  %v114 = vld [vmem:[%s1 + $0xc] sm:$0xf]
  %v115 = vld [vmem:[%s2] sm:$0x1]
  %v117 = vlaneseq
  %v118 = vshrl.u32 %v117, 7
  %v119 = vsub.s32 0, %v118
  %v120 = vrot.slane %v115, %v119
  %v126 = vunpack.c.l.b16 %v111
  %v127 = vunpack.c.l.b16 %v112
  %v128 = vunpack.c.l.b16 %v113
  %v129 = vunpack.c.l.b16 %v114
  %v130 = vpack.c.b16 %v127, %v126
  %v131 = vpack.c.b16 %v129, %v128
  %vm134 = vcmask 261120
  %v136 = vsel %vm134, %v109, 0
  %v139 = vsel %vm134, %v110, 0
  %141 = vmatprep.subr.bf16.mxu0 0
  %142 = vmatpush1.bf16.msra.mxu0 %v130
  %143 = vmatprep.subr.bf16.mxu0 0
  %144 = vmatpush1.bf16.msra.mxu0 %v131
  %145 = vmatprep.subr.bf16.mxu0 0
  %146 = vmatpush1.bf16.msra.mxu0 0
  %147 = vmatprep.subr.bf16.mxu0 0
  %148 = vmatpush1.bf16.msra.mxu0 0
  %149 = vmatprep.subr.bf16.mxu0 0
  %150 = vmatpush1.bf16.msra.mxu0 0
  %151 = vmatprep.subr.bf16.mxu0 0
  %152 = vmatpush1.bf16.msra.mxu0 0
  %153 = vmatprep.subr.bf16.mxu0 0
  %154 = vmatpush1.bf16.msra.mxu0 0
  %155 = vmatprep.subr.bf16.mxu0 0
  %156 = vmatpush1.bf16.msra.mxu0 0
  %157 = vmatprep.subr.bf16.mxu0 0
  %158 = vmatpush1.bf16.msra.mxu0 0
  %159 = vmatprep.subr.bf16.mxu0 0
  %160 = vmatpush1.bf16.msra.mxu0 0
  %161 = vmatprep.subr.bf16.mxu0 0
  %162 = vmatpush1.bf16.msra.mxu0 0
  %163 = vmatprep.subr.bf16.mxu0 0
  %164 = vmatpush1.bf16.msra.mxu0 0
  %165 = vmatprep.subr.bf16.mxu0 0
  %166 = vmatpush1.bf16.msra.mxu0 0
  %167 = vmatprep.subr.bf16.mxu0 0
  %168 = vmatpush1.bf16.msra.mxu0 0
  %169 = vmatprep.subr.bf16.mxu0 0
  %170 = vmatpush1.bf16.msra.mxu0 0
  %171 = vmatprep.subr.bf16.mxu0 0
  %172 = vmatpush1.bf16.msra.mxu0 0
  %173 = vmatprep.mubr.bf16.mxu0 0
  %174 = vmatmul.mubr.bf16.gmra.mrb[0].mxu0 %v136
  %v175 = vpop.f32.mrb[0].mxu0
  %v176 = vadd.f32 %v120, %v175
  %v177 = vpop.f32.mrb[0].mxu0
  %v178 = vpop.f32.mrb[0].mxu0
  %v179 = vadd.f32 %v120, %v178
  %v180 = vpop.f32.mrb[0].mxu0
  %181 = vmatprep.mubr.bf16.mxu0 0
  %182 = vmatmul.mubr.bf16.gmra.mrb[0].mxu0 %v139
  %v183 = vpop.f32.mrb[0].mxu0
  %v184 = vadd.f32 %v120, %v183
  %v185 = vpop.f32.mrb[0].mxu0
  %v186 = vpop.f32.mrb[0].mxu0
  %v187 = vadd.f32 %v120, %v186
  %v188 = vpop.f32.mrb[0].mxu0
  %189 = vdwg.mxu0
  %v190 = vmul.f32 %v176, 0.70710677
  %v191 = vmul.f32 %v179, 0.70710677
  %v192 = vmul.f32 %v184, 0.70710677
  %v193 = vmul.f32 %v187, 0.70710677
  %v194 = vand.u32 2147483647, %v190
  %v195 = vand.u32 2147483647, %v191
  %v196 = vand.u32 2147483647, %v192
  %v197 = vand.u32 2147483647, %v193
  %v198 = vmul.f32 %v194, 0.3275911
  %v199 = vmul.f32 %v195, 0.3275911
  %v200 = vmul.f32 %v196, 0.3275911
  %v201 = vmul.f32 %v197, 0.3275911
  %v202 = vadd.f32 %v198, 1.0
  %v203 = vadd.f32 %v199, 1.0
  %v204 = vadd.f32 %v200, 1.0
  %v205 = vadd.f32 %v201, 1.0
  %v206 = vrcp.pop %v202
  %v207 = vrcp.pop %v203
  %v208 = vrcp.pop %v204
  %v209 = vrcp.pop %v205
  %v210 = vmul.f32 %v206, 1.0614054
  %v211 = vmul.f32 %v207, 1.0614054
  %v212 = vmul.f32 %v208, 1.0614054
  %v213 = vmul.f32 %v209, 1.0614054
  %v214 = vsub.f32 %v210, 1.4531521
  %v215 = vsub.f32 %v211, 1.4531521
  %v216 = vsub.f32 %v212, 1.4531521
  %v217 = vsub.f32 %v213, 1.4531521
  %v218 = vmul.f32 %v214, %v206
  %v219 = vmul.f32 %v215, %v207
  %v220 = vmul.f32 %v216, %v208
  %v221 = vmul.f32 %v217, %v209
  %v222 = vadd.f32 %v218, 1.4214138
  %v223 = vadd.f32 %v219, 1.4214138
  %v224 = vadd.f32 %v220, 1.4214138
  %v225 = vadd.f32 %v221, 1.4214138
  %v226 = vmul.f32 %v222, %v206
  %v227 = vmul.f32 %v223, %v207
  %v228 = vmul.f32 %v224, %v208
  %v229 = vmul.f32 %v225, %v209
  %v230 = vsub.f32 %v226, 0.28449672
  %v231 = vsub.f32 %v227, 0.28449672
  %v232 = vsub.f32 %v228, 0.28449672
  %v233 = vsub.f32 %v229, 0.28449672
  %v234 = vmul.f32 %v230, %v206
  %v235 = vmul.f32 %v231, %v207
  %v236 = vmul.f32 %v232, %v208
  %v237 = vmul.f32 %v233, %v209
  %v238 = vadd.f32 %v234, 0.2548296
  %v239 = vadd.f32 %v235, 0.2548296
  %v240 = vadd.f32 %v236, 0.2548296
  %v241 = vadd.f32 %v237, 0.2548296
  %v242 = vmul.f32 %v238, %v206
  %v243 = vmul.f32 %v239, %v207
  %v244 = vmul.f32 %v240, %v208
  %v245 = vmul.f32 %v241, %v209
  %v246 = vsub.f32 0.0, %v194
  %v247 = vsub.f32 0.0, %v195
  %v248 = vsub.f32 0.0, %v196
  %v249 = vsub.f32 0.0, %v197
  %v250 = vmul.f32 %v246, %v194
  %v251 = vmul.f32 %v247, %v195
  %v252 = vmul.f32 %v248, %v196
  %v253 = vmul.f32 %v249, %v197
  %v254 = vmul.f32 %v250, 1.442695
  %v255 = vpow.pop %v254
  %v256 = vmul.f32 %v251, 1.442695
  %v257 = vpow.pop %v256
  %v258 = vmul.f32 %v252, 1.442695
  %v259 = vpow.pop %v258
  %v260 = vmul.f32 %v253, 1.442695
  %v261 = vpow.pop %v260
  %v262 = vmul.f32 %v242, %v255
  %v263 = vmul.f32 %v243, %v257
  %v264 = vmul.f32 %v244, %v259
  %v265 = vmul.f32 %v245, %v261
  %v266 = vsub.f32 1.0, %v262
  %v267 = vsub.f32 1.0, %v263
  %v268 = vsub.f32 1.0, %v264
  %v269 = vsub.f32 1.0, %v265
  %vm270 = vcmp.lt.f32.partialorder %v190, 0.0
  %vm271 = vcmp.lt.f32.partialorder %v191, 0.0
  %vm272 = vcmp.lt.f32.partialorder %v192, 0.0
  %vm273 = vcmp.lt.f32.partialorder %v193, 0.0
  %v274 = vsub.f32 0.0, %v266
  %v275 = vsub.f32 0.0, %v267
  %v276 = vsub.f32 0.0, %v268
  %v277 = vsub.f32 0.0, %v269
  %v278 = vsel %vm270, %v274, %v266
  %v279 = vsel %vm271, %v275, %v267
  %v280 = vsel %vm272, %v276, %v268
  %v281 = vsel %vm273, %v277, %v269
  %v282 = vmul.f32 %v176, 0.5
  %v283 = vmul.f32 %v179, 0.5
  %v284 = vmul.f32 %v184, 0.5
  %v285 = vmul.f32 %v187, 0.5
  %v286 = vadd.f32 %v278, 1.0
  %v287 = vadd.f32 %v279, 1.0
  %v288 = vadd.f32 %v280, 1.0
  %v289 = vadd.f32 %v281, 1.0
  %v290 = vmul.f32 %v282, %v286
  %v291 = vmul.f32 %v283, %v287
  %v292 = vmul.f32 %v284, %v288
  %v293 = vmul.f32 %v285, %v289
  %v294 = vpack.c.bf16 %v291, %v290
  %v295 = vpack.c.bf16 %v293, %v292
  %v298 = vunpack.c.l.b16 %v294
  %v299 = vunpack.c.h.b16 %v294
  %v300 = vunpack.c.l.b16 %v295
  %v301 = vunpack.c.h.b16 %v295
  %v302 = vpack.c.b16 %v298, %v298
  %v303 = vpack.c.b16 %v299, %v299
  %v304 = vpack.c.b16 %v300, %v300
  %v305 = vpack.c.b16 %v301, %v301
  %310 = vst [vmem:[%s5] sm:$0xf] %v302
  %311 = vst [vmem:[%s5 + $0x4] sm:$0xf] %v303
  %312 = vst [vmem:[%s5 + $0x8] sm:$0xf] %v304
  %313 = vst [vmem:[%s5 + $0xc] sm:$0xf] %v305
  // Predicated region
  $region26: #{vit_pose_forward.20} parent=0 // pred_check
    _
  $region27: #{vit_pose_forward.20} parent=0 // pred_check_branch
    %315 = sbr.rel (0) target = $region29
  $region28: #{vit_pose_forward.20} parent=0 // pred_region
    _
  $region29: #{vit_pose_forward.20} parent=0 // pred_fallthru
    _
  // Predicated region
  $region30: #{vit_pose_forward.20} parent=0 // pred_check
    _
  $region31: #{vit_pose_forward.20} parent=0 // pred_check_branch
    %317 = sbr.rel (0) target = $region33
  $region32: #{vit_pose_forward.20} parent=0 // pred_region
    _
  $region33: #{vit_pose_forward.20} parent=0 // pred_fallthru
    _

// kernel: vit_pose_forward.21
$region0: #{vit_pose_forward.21}
  #allocation0 [shape = 'u32[]', space=smem, size = 0x4, offset = 0x4, fixed_abs, tag = 'smem constant byte address 0x4 - core index']
  #allocation1 [shape = 'u32[144,128]{1,0:T(1,128)}', space=vmem, size = 0x12000, scoped, tag = 'internal scratch']
  %s0 = inlined_call_operand.vmem [shape: bf16[32,128], index: 0, kind: input, shape index: {}]
  %s1 = inlined_call_operand.vmem [shape: bf16[128,32], index: 1, kind: input, shape index: {}]
  %s2 = inlined_call_operand.vmem [shape: f32[1,32], index: 2, kind: input, shape index: {}]
  %s3 = inlined_call_operand.vmem [shape: f32[32,32], index: 3, kind: input, shape index: {}]
  %s4 = inlined_call_operand.vmem [shape: f32[32,32], index: 4, kind: output, shape index: {}]
  %s5 = sld [smem:[#allocation0]]
  $region26: #{vit_pose_forward.21} parent=0
    _
  %s7 = ssub.s32 1, %s5
  %s8 = scalar_select 0, %s7, %s5
  // Predicated region
  $region2: #{vit_pose_forward.21} parent=0 // pred_check
    _
  $region3: #{vit_pose_forward.21} parent=0 // pred_check_branch
    %10 = sbr.rel (0) target = $region5
  $region4: #{vit_pose_forward.21} parent=0 // pred_region
    _
  $region5: #{vit_pose_forward.21} parent=0 // pred_fallthru
    _
  // Predicated region
  $region6: #{vit_pose_forward.21} parent=0 // pred_check
    _
  $region7: #{vit_pose_forward.21} parent=0 // pred_check_branch
    %12 = sbr.rel (0) target = $region9
  $region8: #{vit_pose_forward.21} parent=0 // pred_region
    _
  $region9: #{vit_pose_forward.21} parent=0 // pred_fallthru
    _
  // Predicated region
  $region10: #{vit_pose_forward.21} parent=0 // pred_check
    _
  $region11: #{vit_pose_forward.21} parent=0 // pred_check_branch
    %14 = sbr.rel (0) target = $region13
  $region12: #{vit_pose_forward.21} parent=0 // pred_region
    _
  $region13: #{vit_pose_forward.21} parent=0 // pred_fallthru
    _
  // Predicated region
  $region14: #{vit_pose_forward.21} parent=0 // pred_check
    _
  $region15: #{vit_pose_forward.21} parent=0 // pred_check_branch
    %16 = sbr.rel (0) target = $region17
  $region16: #{vit_pose_forward.21} parent=0 // pred_region
    _
  $region17: #{vit_pose_forward.21} parent=0 // pred_fallthru
    _
  %v18 = vld [vmem:[%s0] sm:$0xf]
  %v19 = vld [vmem:[%s0 + $0x4] sm:$0xf]
  %v20 = vld [vmem:[%s0 + $0x8] sm:$0xf]
  %v21 = vld [vmem:[%s0 + $0xc] sm:$0xf]
  %v22 = vld [vmem:[%s1] sm:$0xf]
  %v23 = vld [vmem:[%s1 + $0x4] sm:$0xf]
  %v24 = vld [vmem:[%s1 + $0x8] sm:$0xf]
  %v25 = vld [vmem:[%s1 + $0xc] sm:$0xf]
  %v26 = vld [vmem:[%s1 + $0x10] sm:$0xf]
  %v27 = vld [vmem:[%s1 + $0x14] sm:$0xf]
  %v28 = vld [vmem:[%s1 + $0x18] sm:$0xf]
  %v29 = vld [vmem:[%s1 + $0x1c] sm:$0xf]
  %v30 = vld [vmem:[%s1 + $0x20] sm:$0xf]
  %v31 = vld [vmem:[%s1 + $0x24] sm:$0xf]
  %v32 = vld [vmem:[%s1 + $0x28] sm:$0xf]
  %v33 = vld [vmem:[%s1 + $0x2c] sm:$0xf]
  %v34 = vld [vmem:[%s1 + $0x30] sm:$0xf]
  %v35 = vld [vmem:[%s1 + $0x34] sm:$0xf]
  %v36 = vld [vmem:[%s1 + $0x38] sm:$0xf]
  %v37 = vld [vmem:[%s1 + $0x3c] sm:$0xf]
  %v38 = vld [vmem:[%s2] sm:$0x1]
  %v40 = vlaneseq
  %v41 = vshrl.u32 %v40, 7
  %v42 = vsub.s32 0, %v41
  %v43 = vrot.slane %v38, %v42
  %v49 = vunpack.c.l.b16 %v18
  %v50 = vunpack.c.l.b16 %v19
  %v51 = vunpack.c.l.b16 %v20
  %v52 = vunpack.c.l.b16 %v21
  %v53 = vpack.c.b16 %v50, %v49
  %v54 = vpack.c.b16 %v52, %v51
  %v73 = vunpack.c.l.b16 %v22
  %v74 = vunpack.c.l.b16 %v23
  %v75 = vunpack.c.l.b16 %v24
  %v76 = vunpack.c.l.b16 %v25
  %v77 = vunpack.c.l.b16 %v26
  %v78 = vunpack.c.l.b16 %v27
  %v79 = vunpack.c.l.b16 %v28
  %v80 = vunpack.c.l.b16 %v29
  %v81 = vunpack.c.l.b16 %v30
  %v82 = vunpack.c.l.b16 %v31
  %v83 = vunpack.c.l.b16 %v32
  %v84 = vunpack.c.l.b16 %v33
  %v85 = vunpack.c.l.b16 %v34
  %v86 = vunpack.c.l.b16 %v35
  %v87 = vunpack.c.l.b16 %v36
  %v88 = vunpack.c.l.b16 %v37
  %v89 = vpack.c.b16 %v74, %v73
  %v90 = vpack.c.b16 %v76, %v75
  %v91 = vpack.c.b16 %v78, %v77
  %v92 = vpack.c.b16 %v80, %v79
  %v93 = vpack.c.b16 %v82, %v81
  %v94 = vpack.c.b16 %v84, %v83
  %v95 = vpack.c.b16 %v86, %v85
  %v96 = vpack.c.b16 %v88, %v87
  %105 = vmatprep.subr.bf16.mxu0 0
  %106 = vmatpush1.bf16.msra.mxu0 %v89
  %107 = vmatprep.subr.bf16.mxu0 0
  %108 = vmatpush1.bf16.msra.mxu0 %v90
  %109 = vmatprep.subr.bf16.mxu0 0
  %110 = vmatpush1.bf16.msra.mxu0 %v91
  %111 = vmatprep.subr.bf16.mxu0 0
  %112 = vmatpush1.bf16.msra.mxu0 %v92
  %113 = vmatprep.subr.bf16.mxu0 0
  %114 = vmatpush1.bf16.msra.mxu0 %v93
  %115 = vmatprep.subr.bf16.mxu0 0
  %116 = vmatpush1.bf16.msra.mxu0 %v94
  %117 = vmatprep.subr.bf16.mxu0 0
  %118 = vmatpush1.bf16.msra.mxu0 %v95
  %119 = vmatprep.subr.bf16.mxu0 0
  %120 = vmatpush1.bf16.msra.mxu0 %v96
  %121 = vmatprep.subr.bf16.mxu0 0
  %122 = vmatpush1.bf16.msra.mxu0 0
  %123 = vmatprep.subr.bf16.mxu0 0
  %124 = vmatpush1.bf16.msra.mxu0 0
  %125 = vmatprep.subr.bf16.mxu0 0
  %126 = vmatpush1.bf16.msra.mxu0 0
  %127 = vmatprep.subr.bf16.mxu0 0
  %128 = vmatpush1.bf16.msra.mxu0 0
  %129 = vmatprep.subr.bf16.mxu0 0
  %130 = vmatpush1.bf16.msra.mxu0 0
  %131 = vmatprep.subr.bf16.mxu0 0
  %132 = vmatpush1.bf16.msra.mxu0 0
  %133 = vmatprep.subr.bf16.mxu0 0
  %134 = vmatpush1.bf16.msra.mxu0 0
  %135 = vmatprep.subr.bf16.mxu0 0
  %136 = vmatpush1.bf16.msra.mxu0 0
  %137 = vmatprep.mubr.bf16.mxu0 0
  %138 = vmatmul.mubr.bf16.gmra.mrb[0].mxu0 %v53
  %v139 = vpop.f32.mrb[0].mxu0
  %v140 = vadd.f32 %v43, %v139
  %v141 = vpop.f32.mrb[0].mxu0
  %v142 = vpop.f32.mrb[0].mxu0
  %v143 = vadd.f32 %v43, %v142
  %v144 = vpop.f32.mrb[0].mxu0
  %145 = vmatprep.mubr.bf16.mxu0 0
  %146 = vmatmul.mubr.bf16.gmra.mrb[0].mxu0 %v54
  %v147 = vpop.f32.mrb[0].mxu0
  %v148 = vadd.f32 %v43, %v147
  %v149 = vpop.f32.mrb[0].mxu0
  %v150 = vpop.f32.mrb[0].mxu0
  %v151 = vadd.f32 %v43, %v150
  %v152 = vpop.f32.mrb[0].mxu0
  %153 = vdwg.mxu0
  %v154 = vld [vmem:[%s3] sm:$0xff]
  %v155 = vld [vmem:[%s3 + $0x8] sm:$0xff]
  %v156 = vld [vmem:[%s3 + $0x10] sm:$0xff]
  %v157 = vld [vmem:[%s3 + $0x18] sm:$0xff]
  %v158 = vadd.f32 %v140, %v154
  %v159 = vadd.f32 %v143, %v155
  %v160 = vadd.f32 %v148, %v156
  %v161 = vadd.f32 %v151, %v157
  %vm162 = vcmask 261120
  %163 = vst.msk [vmem:[%s4] sm:$0xff] %vm162, %v158
  %164 = vst.msk [vmem:[%s4 + $0x8] sm:$0xff] %vm162, %v159
  %165 = vst.msk [vmem:[%s4 + $0x10] sm:$0xff] %vm162, %v160
  %166 = vst.msk [vmem:[%s4 + $0x18] sm:$0xff] %vm162, %v161
  // Predicated region
  $region18: #{vit_pose_forward.21} parent=0 // pred_check
    _
  $region19: #{vit_pose_forward.21} parent=0 // pred_check_branch
    %168 = sbr.rel (0) target = $region21
  $region20: #{vit_pose_forward.21} parent=0 // pred_region
    _
  $region21: #{vit_pose_forward.21} parent=0 // pred_fallthru
    _
  // Predicated region
  $region22: #{vit_pose_forward.21} parent=0 // pred_check
    _
  $region23: #{vit_pose_forward.21} parent=0 // pred_check_branch
    %170 = sbr.rel (0) target = $region25
  $region24: #{vit_pose_forward.21} parent=0 // pred_region
    _
  $region25: #{vit_pose_forward.21} parent=0 // pred_fallthru
    _

// kernel: vit_pose_forward.27
$region0: #{vit_pose_forward.27}
  #allocation0 [shape = 'u32[]', space=smem, size = 0x4, offset = 0x4, fixed_abs, tag = 'smem constant byte address 0x4 - core index']
  #allocation1 [shape = 'u32[144,128]{1,0:T(1,128)}', space=vmem, size = 0x12000, scoped, tag = 'internal scratch']
  #allocation2 [shape = 'bf16[32,32]{1,0:T(16,128)(2,1)}', space=vmem, size = 0x2000, scoped, tag = 'scratch operand']
  %s0 = inlined_call_operand.vmem [shape: f32[32,32], index: 0, kind: input, shape index: {}]
  %s1 = inlined_call_operand.vmem [shape: bf16[32,256], index: 1, kind: input, shape index: {}]
  %s2 = inlined_call_operand.vmem [shape: f32[1,256], index: 2, kind: input, shape index: {}]
  %s3 = inlined_call_operand.vmem [shape: f32[1,32], index: 3, kind: input, shape index: {}]
  %s4 = inlined_call_operand.vmem [shape: f32[1,32], index: 4, kind: input, shape index: {}]
  %s5 = inlined_call_operand.vmem [shape: bf16[32,256], index: 5, kind: output, shape index: {}]
  %s6 = sld [smem:[#allocation0]]
  $region34: #{vit_pose_forward.27} parent=0
    _
  %s8 = ssub.s32 1, %s6
  %s9 = scalar_select 0, %s8, %s6
  // Predicated region
  $region2: #{vit_pose_forward.27} parent=0 // pred_check
    _
  $region3: #{vit_pose_forward.27} parent=0 // pred_check_branch
    %11 = sbr.rel (0) target = $region5
  $region4: #{vit_pose_forward.27} parent=0 // pred_region
    _
  $region5: #{vit_pose_forward.27} parent=0 // pred_fallthru
    _
  // Predicated region
  $region6: #{vit_pose_forward.27} parent=0 // pred_check
    _
  $region7: #{vit_pose_forward.27} parent=0 // pred_check_branch
    %13 = sbr.rel (0) target = $region9
  $region8: #{vit_pose_forward.27} parent=0 // pred_region
    _
  $region9: #{vit_pose_forward.27} parent=0 // pred_fallthru
    _
  // Predicated region
  $region10: #{vit_pose_forward.27} parent=0 // pred_check
    _
  $region11: #{vit_pose_forward.27} parent=0 // pred_check_branch
    %15 = sbr.rel (0) target = $region13
  $region12: #{vit_pose_forward.27} parent=0 // pred_region
    _
  $region13: #{vit_pose_forward.27} parent=0 // pred_fallthru
    _
  // Predicated region
  $region14: #{vit_pose_forward.27} parent=0 // pred_check
    _
  $region15: #{vit_pose_forward.27} parent=0 // pred_check_branch
    %17 = sbr.rel (0) target = $region17
  $region16: #{vit_pose_forward.27} parent=0 // pred_region
    _
  $region17: #{vit_pose_forward.27} parent=0 // pred_fallthru
    _
  // Predicated region
  $region18: #{vit_pose_forward.27} parent=0 // pred_check
    _
  $region19: #{vit_pose_forward.27} parent=0 // pred_check_branch
    %19 = sbr.rel (0) target = $region21
  $region20: #{vit_pose_forward.27} parent=0 // pred_region
    _
  $region21: #{vit_pose_forward.27} parent=0 // pred_fallthru
    _
  %p21 = scmp.eq.s32.totalorder 0, 0
  // Predicated region
  $region22: #{vit_pose_forward.27} parent=0 // pred_check
    %p22 = pneg %p21
  $region23: #{vit_pose_forward.27} parent=0 // pred_check_branch
    %24 = sbr.rel (%p22) target = $region25
  $region24: #{vit_pose_forward.27} parent=0 // pred_region
    %v25 = vld [vmem:[%s0] sm:$0xff]
    %v26 = vld [vmem:[%s0 + $0x8] sm:$0xff]
    %v27 = vld [vmem:[%s0 + $0x10] sm:$0xff]
    %v28 = vld [vmem:[%s0 + $0x18] sm:$0xff]
    %vm29 = vcmask 261120
    %v30 = vsel %vm29, %v25, 0.0
    %31 = vadd.xlane.f32.xlu0 %v30
    %v32 = vpop.xlane.xlu0 %31
    %v33 = vsel %vm29, %v26, 0.0
    %34 = vadd.xlane.f32.xlu0 %v33
    %v35 = vpop.xlane.xlu0 %34
    %v36 = vsel %vm29, %v27, 0.0
    %37 = vadd.xlane.f32.xlu0 %v36
    %v38 = vpop.xlane.xlu0 %37
    %v39 = vsel %vm29, %v28, 0.0
    %40 = vadd.xlane.f32.xlu0 %v39
    %v41 = vpop.xlane.xlu0 %40
    %v42 = vrcp.pop 32.0
    %v43 = vmul.f32 %v32, %v42
    %v44 = vmul.f32 %v35, %v42
    %v45 = vmul.f32 %v38, %v42
    %v46 = vmul.f32 %v41, %v42
    %v47 = vsub.f32 %v25, %v43
    %v48 = vsub.f32 %v26, %v44
    %v49 = vsub.f32 %v27, %v45
    %v50 = vsub.f32 %v28, %v46
    %v51 = vmul.f32 %v47, %v47
    %v52 = vmul.f32 %v48, %v48
    %v53 = vmul.f32 %v49, %v49
    %v54 = vmul.f32 %v50, %v50
    %v55 = vsel %vm29, %v51, 0.0
    %56 = vadd.xlane.f32.xlu0 %v55
    %v57 = vpop.xlane.xlu0 %56
    %v58 = vsel %vm29, %v52, 0.0
    %59 = vadd.xlane.f32.xlu0 %v58
    %v60 = vpop.xlane.xlu0 %59
    %v61 = vsel %vm29, %v53, 0.0
    %62 = vadd.xlane.f32.xlu0 %v61
    %v63 = vpop.xlane.xlu0 %62
    %v64 = vsel %vm29, %v54, 0.0
    %65 = vadd.xlane.f32.xlu0 %v64
    %v66 = vpop.xlane.xlu0 %65
    %v67 = vmul.f32 %v57, %v42
    %v68 = vmul.f32 %v60, %v42
    %v69 = vmul.f32 %v63, %v42
    %v70 = vmul.f32 %v66, %v42
    %v71 = vadd.f32 %v67, 1e-06
    %v72 = vadd.f32 %v68, 1e-06
    %v73 = vadd.f32 %v69, 1e-06
    %v74 = vadd.f32 %v70, 1e-06
    %v75 = vrsqrt.pop %v71
    %v76 = vrsqrt.pop %v72
    %v77 = vrsqrt.pop %v73
    %v78 = vrsqrt.pop %v74
    %v79 = vmul.f32 %v47, %v75
    %v80 = vmul.f32 %v48, %v76
    %v81 = vmul.f32 %v49, %v77
    %v82 = vmul.f32 %v50, %v78
    %v83 = vld [vmem:[%s3] sm:$0x1]
    %v85 = vlaneseq
    %v86 = vshrl.u32 %v85, 7
    %v87 = vsub.s32 0, %v86
    %v88 = vrot.slane %v83, %v87
    %v90 = vmul.f32 %v79, %v88
    %v91 = vmul.f32 %v80, %v88
    %v92 = vmul.f32 %v81, %v88
    %v93 = vmul.f32 %v82, %v88
    %v94 = vld [vmem:[%s4] sm:$0x1]
    %v96 = vlaneseq
    %v97 = vshrl.u32 %v96, 7
    %v98 = vsub.s32 0, %v97
    %v99 = vrot.slane %v94, %v98
    %v101 = vadd.f32 %v90, %v99
    %v102 = vadd.f32 %v91, %v99
    %v103 = vadd.f32 %v92, %v99
    %v104 = vadd.f32 %v93, %v99
    %v105 = vpack.c.bf16 %v102, %v101
    %v106 = vpack.c.bf16 %v104, %v103
    %107 = vst.msk [vmem:[#allocation2] sm:$0xff] %vm29, %v105
    %108 = vst.msk [vmem:[#allocation2 + $0x8] sm:$0xff] %vm29, %v106
  $region25: #{vit_pose_forward.27} parent=0 // pred_fallthru
    _
  %v109 = vld [vmem:[#allocation2] sm:$0xff]
  %v110 = vld [vmem:[#allocation2 + $0x8] sm:$0xff]
  %v111 = vld [vmem:[%s1] sm:$0xff]
  %v112 = vld [vmem:[%s1 + $0x8] sm:$0xff]
  %v113 = vld [vmem:[%s1 + $0x10] sm:$0xff]
  %v114 = vld [vmem:[%s1 + $0x18] sm:$0xff]
  %v115 = vld [vmem:[%s2] sm:$0x3]
  %v117 = vlaneseq
  %v118 = vshrl.u32 %v117, 7
  %v119 = vsub.s32 0, %v118
  %v120 = vrot.slane %v115, %v119
  %v121 = vlaneseq
  %v122 = vshrl.u32 %v121, 7
  %v123 = vsub.s32 1, %v122
  %v124 = vrot.slane %v115, %v123
  %v131 = vunpack.c.l.b16 %v111
  %v132 = vunpack.c.h.b16 %v111
  %v133 = vunpack.c.l.b16 %v112
  %v134 = vunpack.c.h.b16 %v112
  %v135 = vunpack.c.l.b16 %v113
  %v136 = vunpack.c.h.b16 %v113
  %v137 = vunpack.c.l.b16 %v114
  %v138 = vunpack.c.h.b16 %v114
  %v139 = vpack.c.b16 %v133, %v131
  %v140 = vpack.c.b16 %v134, %v132
  %v141 = vpack.c.b16 %v137, %v135
  %v142 = vpack.c.b16 %v138, %v136
  %vm147 = vcmask 261120
  %v149 = vsel %vm147, %v109, 0
  %v152 = vsel %vm147, %v110, 0
  %154 = vmatprep.subr.bf16.mxu0 %v140
  %155 = vmatpush1.bf16.msra.mxu0 %v139
  %156 = vmatprep.subr.bf16.mxu0 %v142
  %157 = vmatpush1.bf16.msra.mxu0 %v141
  %158 = vmatprep.subr.bf16.mxu0 0
  %159 = vmatpush1.bf16.msra.mxu0 0
  %160 = vmatprep.subr.bf16.mxu0 0
  %161 = vmatpush1.bf16.msra.mxu0 0
  %162 = vmatprep.subr.bf16.mxu0 0
  %163 = vmatpush1.bf16.msra.mxu0 0
  %164 = vmatprep.subr.bf16.mxu0 0
  %165 = vmatpush1.bf16.msra.mxu0 0
  %166 = vmatprep.subr.bf16.mxu0 0
  %167 = vmatpush1.bf16.msra.mxu0 0
  %168 = vmatprep.subr.bf16.mxu0 0
  %169 = vmatpush1.bf16.msra.mxu0 0
  %170 = vmatprep.subr.bf16.mxu0 0
  %171 = vmatpush1.bf16.msra.mxu0 0
  %172 = vmatprep.subr.bf16.mxu0 0
  %173 = vmatpush1.bf16.msra.mxu0 0
  %174 = vmatprep.subr.bf16.mxu0 0
  %175 = vmatpush1.bf16.msra.mxu0 0
  %176 = vmatprep.subr.bf16.mxu0 0
  %177 = vmatpush1.bf16.msra.mxu0 0
  %178 = vmatprep.subr.bf16.mxu0 0
  %179 = vmatpush1.bf16.msra.mxu0 0
  %180 = vmatprep.subr.bf16.mxu0 0
  %181 = vmatpush1.bf16.msra.mxu0 0
  %182 = vmatprep.subr.bf16.mxu0 0
  %183 = vmatpush1.bf16.msra.mxu0 0
  %184 = vmatprep.subr.bf16.mxu0 0
  %185 = vmatpush1.bf16.msra.mxu0 0
  %186 = vmatprep.mubr.bf16.mxu0 0
  %187 = vmatmul.mubr.bf16.gmra.mrb[0].mxu0 %v149
  %v188 = vpop.f32.mrb[0].mxu0
  %v189 = vadd.f32 %v120, %v188
  %v190 = vpop.f32.mrb[0].mxu0
  %v191 = vadd.f32 %v124, %v190
  %v192 = vpop.f32.mrb[0].mxu0
  %v193 = vadd.f32 %v120, %v192
  %v194 = vpop.f32.mrb[0].mxu0
  %v195 = vadd.f32 %v124, %v194
  %196 = vmatprep.mubr.bf16.mxu0 0
  %197 = vmatmul.mubr.bf16.gmra.mrb[0].mxu0 %v152
  %v198 = vpop.f32.mrb[0].mxu0
  %v199 = vadd.f32 %v120, %v198
  %v200 = vpop.f32.mrb[0].mxu0
  %v201 = vadd.f32 %v124, %v200
  %v202 = vpop.f32.mrb[0].mxu0
  %v203 = vadd.f32 %v120, %v202
  %v204 = vpop.f32.mrb[0].mxu0
  %v205 = vadd.f32 %v124, %v204
  %206 = vdwg.mxu0
  %v207 = vpack.c.bf16 %v193, %v189
  %v208 = vpack.c.bf16 %v195, %v191
  %v209 = vpack.c.bf16 %v203, %v199
  %v210 = vpack.c.bf16 %v205, %v201
  %v215 = vunpack.c.l.b16 %v207
  %v216 = vunpack.c.l.b16 %v208
  %v217 = vunpack.c.h.b16 %v207
  %v218 = vunpack.c.h.b16 %v208
  %v219 = vunpack.c.l.b16 %v209
  %v220 = vunpack.c.l.b16 %v210
  %v221 = vunpack.c.h.b16 %v209
  %v222 = vunpack.c.h.b16 %v210
  %v223 = vpack.c.b16 %v216, %v215
  %v224 = vpack.c.b16 %v218, %v217
  %v225 = vpack.c.b16 %v220, %v219
  %v226 = vpack.c.b16 %v222, %v221
  %231 = vst [vmem:[%s5] sm:$0xff] %v223
  %232 = vst [vmem:[%s5 + $0x8] sm:$0xff] %v224
  %233 = vst [vmem:[%s5 + $0x10] sm:$0xff] %v225
  %234 = vst [vmem:[%s5 + $0x18] sm:$0xff] %v226
  // Predicated region
  $region26: #{vit_pose_forward.27} parent=0 // pred_check
    _
  $region27: #{vit_pose_forward.27} parent=0 // pred_check_branch
    %236 = sbr.rel (0) target = $region29
  $region28: #{vit_pose_forward.27} parent=0 // pred_region
    _
  $region29: #{vit_pose_forward.27} parent=0 // pred_fallthru
    _
  // Predicated region
  $region30: #{vit_pose_forward.27} parent=0 // pred_check
    _
  $region31: #{vit_pose_forward.27} parent=0 // pred_check_branch
    %238 = sbr.rel (0) target = $region33
  $region32: #{vit_pose_forward.27} parent=0 // pred_region
    _
  $region33: #{vit_pose_forward.27} parent=0 // pred_fallthru
    _

// kernel: vit_pose_forward.29
$region0: #{vit_pose_forward.29}
  #allocation0 [shape = 'u32[]', space=smem, size = 0x4, offset = 0x4, fixed_abs, tag = 'smem constant byte address 0x4 - core index']
  #allocation1 [shape = 'u32[144,128]{1,0:T(1,128)}', space=vmem, size = 0x12000, scoped, tag = 'internal scratch']
  %s0 = inlined_call_operand.vmem [shape: bf16[128,16], index: 0, kind: input, shape index: {}]
  %s1 = inlined_call_operand.vmem [shape: bf16[16,256], index: 1, kind: input, shape index: {}]
  %s2 = inlined_call_operand.vmem [shape: f32[1,256], index: 2, kind: input, shape index: {}]
  %s3 = inlined_call_operand.vmem [shape: bf16[128,256], index: 3, kind: output, shape index: {}]
  %s4 = sld [smem:[#allocation0]]
  $region22: #{vit_pose_forward.29} parent=0
    _
  %s6 = ssub.s32 1, %s4
  %s7 = scalar_select 0, %s6, %s4
  // Predicated region
  $region2: #{vit_pose_forward.29} parent=0 // pred_check
    _
  $region3: #{vit_pose_forward.29} parent=0 // pred_check_branch
    %9 = sbr.rel (0) target = $region5
  $region4: #{vit_pose_forward.29} parent=0 // pred_region
    _
  $region5: #{vit_pose_forward.29} parent=0 // pred_fallthru
    _
  // Predicated region
  $region6: #{vit_pose_forward.29} parent=0 // pred_check
    _
  $region7: #{vit_pose_forward.29} parent=0 // pred_check_branch
    %11 = sbr.rel (0) target = $region9
  $region8: #{vit_pose_forward.29} parent=0 // pred_region
    _
  $region9: #{vit_pose_forward.29} parent=0 // pred_fallthru
    _
  // Predicated region
  $region10: #{vit_pose_forward.29} parent=0 // pred_check
    _
  $region11: #{vit_pose_forward.29} parent=0 // pred_check_branch
    %13 = sbr.rel (0) target = $region13
  $region12: #{vit_pose_forward.29} parent=0 // pred_region
    _
  $region13: #{vit_pose_forward.29} parent=0 // pred_fallthru
    _
  %v15 = vld [vmem:[%s0] sm:$0xf]
  %v16 = vld [vmem:[%s0 + $0x4] sm:$0xf]
  %v17 = vld [vmem:[%s0 + $0x8] sm:$0xf]
  %v18 = vld [vmem:[%s0 + $0xc] sm:$0xf]
  %v19 = vld [vmem:[%s0 + $0x10] sm:$0xf]
  %v20 = vld [vmem:[%s0 + $0x14] sm:$0xf]
  %v21 = vld [vmem:[%s0 + $0x18] sm:$0xf]
  %v22 = vld [vmem:[%s0 + $0x1c] sm:$0xf]
  %v23 = vld [vmem:[%s0 + $0x20] sm:$0xf]
  %v24 = vld [vmem:[%s0 + $0x24] sm:$0xf]
  %v25 = vld [vmem:[%s0 + $0x28] sm:$0xf]
  %v26 = vld [vmem:[%s0 + $0x2c] sm:$0xf]
  %v27 = vld [vmem:[%s0 + $0x30] sm:$0xf]
  %v28 = vld [vmem:[%s0 + $0x34] sm:$0xf]
  %v29 = vld [vmem:[%s0 + $0x38] sm:$0xf]
  %v30 = vld [vmem:[%s0 + $0x3c] sm:$0xf]
  %v31 = vld [vmem:[%s1] sm:$0xff]
  %v32 = vld [vmem:[%s1 + $0x8] sm:$0xff]
  %v33 = vld [vmem:[%s2] sm:$0x3]
  %v35 = vlaneseq
  %v36 = vshrl.u32 %v35, 7
  %v37 = vsub.s32 0, %v36
  %v38 = vrot.slane %v33, %v37
  %v39 = vlaneseq
  %v40 = vshrl.u32 %v39, 7
  %v41 = vsub.s32 1, %v40
  %v42 = vrot.slane %v33, %v41
  %v61 = vunpack.c.l.b16 %v15
  %v62 = vunpack.c.l.b16 %v16
  %v63 = vunpack.c.l.b16 %v17
  %v64 = vunpack.c.l.b16 %v18
  %v65 = vunpack.c.l.b16 %v19
  %v66 = vunpack.c.l.b16 %v20
  %v67 = vunpack.c.l.b16 %v21
  %v68 = vunpack.c.l.b16 %v22
  %v69 = vunpack.c.l.b16 %v23
  %v70 = vunpack.c.l.b16 %v24
  %v71 = vunpack.c.l.b16 %v25
  %v72 = vunpack.c.l.b16 %v26
  %v73 = vunpack.c.l.b16 %v27
  %v74 = vunpack.c.l.b16 %v28
  %v75 = vunpack.c.l.b16 %v29
  %v76 = vunpack.c.l.b16 %v30
  %v77 = vpack.c.b16 %v62, %v61
  %v78 = vpack.c.b16 %v64, %v63
  %v79 = vpack.c.b16 %v66, %v65
  %v80 = vpack.c.b16 %v68, %v67
  %v81 = vpack.c.b16 %v70, %v69
  %v82 = vpack.c.b16 %v72, %v71
  %v83 = vpack.c.b16 %v74, %v73
  %v84 = vpack.c.b16 %v76, %v75
  %v87 = vunpack.c.l.b16 %v31
  %v88 = vunpack.c.h.b16 %v31
  %v89 = vunpack.c.l.b16 %v32
  %v90 = vunpack.c.h.b16 %v32
  %v91 = vpack.c.b16 %v89, %v87
  %v92 = vpack.c.b16 %v90, %v88
  %vm95 = vcmask 130048
  %v97 = vsel %vm95, %v77, 0
  %v100 = vsel %vm95, %v78, 0
  %v103 = vsel %vm95, %v79, 0
  %v106 = vsel %vm95, %v80, 0
  %v109 = vsel %vm95, %v81, 0
  %v112 = vsel %vm95, %v82, 0
  %v115 = vsel %vm95, %v83, 0
  %v118 = vsel %vm95, %v84, 0
  %120 = vmatprep.subr.bf16.mxu0 %v92
  %121 = vmatpush1.bf16.msra.mxu0 %v91
  %122 = vmatprep.subr.bf16.mxu0 0
  %123 = vmatpush1.bf16.msra.mxu0 0
  %124 = vmatprep.subr.bf16.mxu0 0
  %125 = vmatpush1.bf16.msra.mxu0 0
  %126 = vmatprep.subr.bf16.mxu0 0
  %127 = vmatpush1.bf16.msra.mxu0 0
  %128 = vmatprep.subr.bf16.mxu0 0
  %129 = vmatpush1.bf16.msra.mxu0 0
  %130 = vmatprep.subr.bf16.mxu0 0
  %131 = vmatpush1.bf16.msra.mxu0 0
  %132 = vmatprep.subr.bf16.mxu0 0
  %133 = vmatpush1.bf16.msra.mxu0 0
  %134 = vmatprep.subr.bf16.mxu0 0
  %135 = vmatpush1.bf16.msra.mxu0 0
  %136 = vmatprep.subr.bf16.mxu0 0
  %137 = vmatpush1.bf16.msra.mxu0 0
  %138 = vmatprep.subr.bf16.mxu0 0
  %139 = vmatpush1.bf16.msra.mxu0 0
  %140 = vmatprep.subr.bf16.mxu0 0
  %141 = vmatpush1.bf16.msra.mxu0 0
  %142 = vmatprep.subr.bf16.mxu0 0
  %143 = vmatpush1.bf16.msra.mxu0 0
  %144 = vmatprep.subr.bf16.mxu0 0
  %145 = vmatpush1.bf16.msra.mxu0 0
  %146 = vmatprep.subr.bf16.mxu0 0
  %147 = vmatpush1.bf16.msra.mxu0 0
  %148 = vmatprep.subr.bf16.mxu0 0
  %149 = vmatpush1.bf16.msra.mxu0 0
  %150 = vmatprep.subr.bf16.mxu0 0
  %151 = vmatpush1.bf16.msra.mxu0 0
  %152 = vmatprep.mubr.bf16.mxu0 0
  %153 = vmatmul.mubr.bf16.gmra.mrb[0].mxu0 %v97
  %v154 = vpop.f32.mrb[0].mxu0
  %v155 = vadd.f32 %v38, %v154
  %v156 = vpop.f32.mrb[0].mxu0
  %v157 = vadd.f32 %v42, %v156
  %v158 = vpop.f32.mrb[0].mxu0
  %v159 = vadd.f32 %v38, %v158
  %v160 = vpop.f32.mrb[0].mxu0
  %v161 = vadd.f32 %v42, %v160
  %162 = vmatprep.mubr.bf16.mxu0 0
  %163 = vmatmul.mubr.bf16.gmra.mrb[0].mxu0 %v100
  %v164 = vpop.f32.mrb[0].mxu0
  %v165 = vadd.f32 %v38, %v164
  %v166 = vpop.f32.mrb[0].mxu0
  %v167 = vadd.f32 %v42, %v166
  %v168 = vpop.f32.mrb[0].mxu0
  %v169 = vadd.f32 %v38, %v168
  %v170 = vpop.f32.mrb[0].mxu0
  %v171 = vadd.f32 %v42, %v170
  %172 = vmatprep.mubr.bf16.mxu0 0
  %173 = vmatmul.mubr.bf16.gmra.mrb[0].mxu0 %v103
  %v174 = vpop.f32.mrb[0].mxu0
  %v175 = vadd.f32 %v38, %v174
  %v176 = vpop.f32.mrb[0].mxu0
  %v177 = vadd.f32 %v42, %v176
  %v178 = vpop.f32.mrb[0].mxu0
  %v179 = vadd.f32 %v38, %v178
  %v180 = vpop.f32.mrb[0].mxu0
  %v181 = vadd.f32 %v42, %v180
  %182 = vmatprep.mubr.bf16.mxu0 0
  %183 = vmatmul.mubr.bf16.gmra.mrb[0].mxu0 %v106
  %v184 = vpop.f32.mrb[0].mxu0
  %v185 = vadd.f32 %v38, %v184
  %v186 = vpop.f32.mrb[0].mxu0
  %v187 = vadd.f32 %v42, %v186
  %v188 = vpop.f32.mrb[0].mxu0
  %v189 = vadd.f32 %v38, %v188
  %v190 = vpop.f32.mrb[0].mxu0
  %v191 = vadd.f32 %v42, %v190
  %192 = vmatprep.mubr.bf16.mxu0 0
  %193 = vmatmul.mubr.bf16.gmra.mrb[0].mxu0 %v109
  %v194 = vpop.f32.mrb[0].mxu0
  %v195 = vadd.f32 %v38, %v194
  %v196 = vpop.f32.mrb[0].mxu0
  %v197 = vadd.f32 %v42, %v196
  %v198 = vpop.f32.mrb[0].mxu0
  %v199 = vadd.f32 %v38, %v198
  %v200 = vpop.f32.mrb[0].mxu0
  %v201 = vadd.f32 %v42, %v200
  %202 = vmatprep.mubr.bf16.mxu0 0
  %203 = vmatmul.mubr.bf16.gmra.mrb[0].mxu0 %v112
  %v204 = vpop.f32.mrb[0].mxu0
  %v205 = vadd.f32 %v38, %v204
  %v206 = vpop.f32.mrb[0].mxu0
  %v207 = vadd.f32 %v42, %v206
  %v208 = vpop.f32.mrb[0].mxu0
  %v209 = vadd.f32 %v38, %v208
  %v210 = vpop.f32.mrb[0].mxu0
  %v211 = vadd.f32 %v42, %v210
  %212 = vmatprep.mubr.bf16.mxu0 0
  %213 = vmatmul.mubr.bf16.gmra.mrb[0].mxu0 %v115
  %v214 = vpop.f32.mrb[0].mxu0
  %v215 = vadd.f32 %v38, %v214
  %v216 = vpop.f32.mrb[0].mxu0
  %v217 = vadd.f32 %v42, %v216
  %v218 = vpop.f32.mrb[0].mxu0
  %v219 = vadd.f32 %v38, %v218
  %v220 = vpop.f32.mrb[0].mxu0
  %v221 = vadd.f32 %v42, %v220
  %222 = vmatprep.mubr.bf16.mxu0 0
  %223 = vmatmul.mubr.bf16.gmra.mrb[0].mxu0 %v118
  %v224 = vpop.f32.mrb[0].mxu0
  %v225 = vadd.f32 %v38, %v224
  %v226 = vpop.f32.mrb[0].mxu0
  %v227 = vadd.f32 %v42, %v226
  %v228 = vpop.f32.mrb[0].mxu0
  %v229 = vadd.f32 %v38, %v228
  %v230 = vpop.f32.mrb[0].mxu0
  %v231 = vadd.f32 %v42, %v230
  %232 = vdwg.mxu0
  %v233 = vpack.c.bf16 %v159, %v155
  %v234 = vpack.c.bf16 %v161, %v157
  %v235 = vpack.c.bf16 %v169, %v165
  %v236 = vpack.c.bf16 %v171, %v167
  %v237 = vpack.c.bf16 %v179, %v175
  %v238 = vpack.c.bf16 %v181, %v177
  %v239 = vpack.c.bf16 %v189, %v185
  %v240 = vpack.c.bf16 %v191, %v187
  %v241 = vpack.c.bf16 %v199, %v195
  %v242 = vpack.c.bf16 %v201, %v197
  %v243 = vpack.c.bf16 %v209, %v205
  %v244 = vpack.c.bf16 %v211, %v207
  %v245 = vpack.c.bf16 %v219, %v215
  %v246 = vpack.c.bf16 %v221, %v217
  %v247 = vpack.c.bf16 %v229, %v225
  %v248 = vpack.c.bf16 %v231, %v227
  %v265 = vunpack.c.l.b16 %v233
  %v266 = vunpack.c.l.b16 %v234
  %v267 = vunpack.c.h.b16 %v233
  %v268 = vunpack.c.h.b16 %v234
  %v269 = vunpack.c.l.b16 %v235
  %v270 = vunpack.c.l.b16 %v236
  %v271 = vunpack.c.h.b16 %v235
  %v272 = vunpack.c.h.b16 %v236
  %v273 = vunpack.c.l.b16 %v237
  %v274 = vunpack.c.l.b16 %v238
  %v275 = vunpack.c.h.b16 %v237
  %v276 = vunpack.c.h.b16 %v238
  %v277 = vunpack.c.l.b16 %v239
  %v278 = vunpack.c.l.b16 %v240
  %v279 = vunpack.c.h.b16 %v239
  %v280 = vunpack.c.h.b16 %v240
  %v281 = vunpack.c.l.b16 %v241
  %v282 = vunpack.c.l.b16 %v242
  %v283 = vunpack.c.h.b16 %v241
  %v284 = vunpack.c.h.b16 %v242
  %v285 = vunpack.c.l.b16 %v243
  %v286 = vunpack.c.l.b16 %v244
  %v287 = vunpack.c.h.b16 %v243
  %v288 = vunpack.c.h.b16 %v244
  %v289 = vunpack.c.l.b16 %v245
  %v290 = vunpack.c.l.b16 %v246
  %v291 = vunpack.c.h.b16 %v245
  %v292 = vunpack.c.h.b16 %v246
  %v293 = vunpack.c.l.b16 %v247
  %v294 = vunpack.c.l.b16 %v248
  %v295 = vunpack.c.h.b16 %v247
  %v296 = vunpack.c.h.b16 %v248
  %v297 = vpack.c.b16 %v266, %v265
  %v298 = vpack.c.b16 %v268, %v267
  %v299 = vpack.c.b16 %v270, %v269
  %v300 = vpack.c.b16 %v272, %v271
  %v301 = vpack.c.b16 %v274, %v273
  %v302 = vpack.c.b16 %v276, %v275
  %v303 = vpack.c.b16 %v278, %v277
  %v304 = vpack.c.b16 %v280, %v279
  %v305 = vpack.c.b16 %v282, %v281
  %v306 = vpack.c.b16 %v284, %v283
  %v307 = vpack.c.b16 %v286, %v285
  %v308 = vpack.c.b16 %v288, %v287
  %v309 = vpack.c.b16 %v290, %v289
  %v310 = vpack.c.b16 %v292, %v291
  %v311 = vpack.c.b16 %v294, %v293
  %v312 = vpack.c.b16 %v296, %v295
  %329 = vst [vmem:[%s3] sm:$0xff] %v297
  %330 = vst [vmem:[%s3 + $0x8] sm:$0xff] %v298
  %331 = vst [vmem:[%s3 + $0x10] sm:$0xff] %v299
  %332 = vst [vmem:[%s3 + $0x18] sm:$0xff] %v300
  %333 = vst [vmem:[%s3 + $0x20] sm:$0xff] %v301
  %334 = vst [vmem:[%s3 + $0x28] sm:$0xff] %v302
  %335 = vst [vmem:[%s3 + $0x30] sm:$0xff] %v303
  %336 = vst [vmem:[%s3 + $0x38] sm:$0xff] %v304
  %337 = vst [vmem:[%s3 + $0x40] sm:$0xff] %v305
  %338 = vst [vmem:[%s3 + $0x48] sm:$0xff] %v306
  %339 = vst [vmem:[%s3 + $0x50] sm:$0xff] %v307
  %340 = vst [vmem:[%s3 + $0x58] sm:$0xff] %v308
  %341 = vst [vmem:[%s3 + $0x60] sm:$0xff] %v309
  %342 = vst [vmem:[%s3 + $0x68] sm:$0xff] %v310
  %343 = vst [vmem:[%s3 + $0x70] sm:$0xff] %v311
  %344 = vst [vmem:[%s3 + $0x78] sm:$0xff] %v312
  // Predicated region
  $region14: #{vit_pose_forward.29} parent=0 // pred_check
    _
  $region15: #{vit_pose_forward.29} parent=0 // pred_check_branch
    %346 = sbr.rel (0) target = $region17
  $region16: #{vit_pose_forward.29} parent=0 // pred_region
    _
  $region17: #{vit_pose_forward.29} parent=0 // pred_fallthru
    _
  // Predicated region
  $region18: #{vit_pose_forward.29} parent=0 // pred_check
    _
  $region19: #{vit_pose_forward.29} parent=0 // pred_check_branch
    %348 = sbr.rel (0) target = $region21
  $region20: #{vit_pose_forward.29} parent=0 // pred_region
    _
  $region21: #{vit_pose_forward.29} parent=0 // pred_fallthru
    _

// kernel: vit_pose_forward.28
$region0: #{vit_pose_forward.28}
  #allocation0 [shape = 'u32[]', space=smem, size = 0x4, offset = 0x4, fixed_abs, tag = 'smem constant byte address 0x4 - core index']
  #allocation1 [shape = 'u32[144,128]{1,0:T(1,128)}', space=vmem, size = 0x12000, scoped, tag = 'internal scratch']
  %s0 = inlined_call_operand.vmem [shape: bf16[2,4,4,256], index: 0, kind: input, shape index: {}]
  %s1 = inlined_call_operand.vmem [shape: f32[1,16], index: 1, kind: input, shape index: {}]
  %s2 = inlined_call_operand.vmem [shape: f32[1,16], index: 2, kind: input, shape index: {}]
  %s3 = inlined_call_operand.vmem [shape: bf16[8,2,4,32], index: 3, kind: output, shape index: {}]
  %s4 = sld [smem:[#allocation0]]
  $region45: #{vit_pose_forward.28} parent=0
    _
  %s6 = ssub.s32 1, %s4
  %s7 = scalar_select 0, %s6, %s4
  loop: start=0, step=1, limit=4
  $region2: #{vit_pose_forward.28} parent=0 // loop_pre_header
    _
  $region3: #{vit_pose_forward.28} parent=0 // loop_header
    %s9 = sphi 0, %s13
    %p10 = scmp.ge.s32.totalorder %s9, 4
    %s19 = sphi 0, %s21
    %s22 = sphi 0, %s19
    %s23 = sphi 0, %s22
    %s39 = sphi 0, %s23
    %s43 = sphi 0, %s43
    %s45 = sphi 0, %s43
    %s46 = sphi 0, %s45
    %s60 = sphi 0, %s46
    %s64 = sphi 0, %s64
    %s66 = sphi 0, %s64
    %s67 = sphi 0, %s66
    %s81 = sphi 0, %s67
    %s87 = sphi 0, %s89
    %s90 = sphi 0, %s87
    %s91 = sphi 0, %s90
    %s107 = sphi 0, %s91
  $region4: #{vit_pose_forward.28} parent=0 // loop_header_branch
    %12 = sbr.rel (%p10) target = $region8
  $region5: #{vit_pose_forward.28} parent=0 // loop_body
    %s14 = ssub.s32 %s9, 1
    %s15 = ssub.s32 %s9, 2
    %s16 = sadd.s32 %s9, 1
    %s17 = ssub.s32 %s9, %s16
    %p18 = scmp.eq.s32.totalorder %s17, 0
    %s20 = sadd.s32 %s19, 1
    %s21 = scalar_select %p18, %s19, %s20
    %p24 = pneg %p18
    %p25 = scmp.eq.s32.totalorder %s9, 1
    %p26 = por %p24, %p25
    %p27 = scmp.ne.s32.totalorder %s19, %s22
    %p28 = scmp.eq.s32.totalorder %s9, 0
    %p29 = por %p27, %p28
    %p30 = scmp.ne.s32.totalorder %s19, %s22
    %p31 = scmp.eq.s32.totalorder %s14, 1
    %p32 = por %p30, %p31
    %p33 = scmp.ne.s32.totalorder %s22, %s23
    %p34 = scmp.eq.s32.totalorder %s14, 0
    %p35 = por %p33, %p34
    %p36 = scmp.ne.s32.totalorder %s22, %s23
    %p37 = scmp.eq.s32.totalorder %s15, 1
    %p38 = por %p36, %p37
    %p40 = scmp.ne.s32.totalorder %s23, %s39
    %p41 = scmp.eq.s32.totalorder %s15, 0
    %p42 = por %p40, %p41
    %s44 = sadd.s32 %s43, 1
    %p47 = scmp.eq.s32.totalorder %s9, 1
    %p48 = scmp.ne.s32.totalorder %s43, %s45
    %p49 = scmp.eq.s32.totalorder %s9, 0
    %p50 = por %p48, %p49
    %p51 = scmp.ne.s32.totalorder %s43, %s45
    %p52 = scmp.eq.s32.totalorder %s14, 1
    %p53 = por %p51, %p52
    %p54 = scmp.ne.s32.totalorder %s45, %s46
    %p55 = scmp.eq.s32.totalorder %s14, 0
    %p56 = por %p54, %p55
    %p57 = scmp.ne.s32.totalorder %s45, %s46
    %p58 = scmp.eq.s32.totalorder %s15, 1
    %p59 = por %p57, %p58
    %p61 = scmp.ne.s32.totalorder %s46, %s60
    %p62 = scmp.eq.s32.totalorder %s15, 0
    %p63 = por %p61, %p62
    %s65 = sadd.s32 %s64, 1
    %p68 = scmp.eq.s32.totalorder %s9, 1
    %p69 = scmp.ne.s32.totalorder %s64, %s66
    %p70 = scmp.eq.s32.totalorder %s9, 0
    %p71 = por %p69, %p70
    %p72 = scmp.ne.s32.totalorder %s64, %s66
    %p73 = scmp.eq.s32.totalorder %s14, 1
    %p74 = por %p72, %p73
    %p75 = scmp.ne.s32.totalorder %s66, %s67
    %p76 = scmp.eq.s32.totalorder %s14, 0
    %p77 = por %p75, %p76
    %p78 = scmp.ne.s32.totalorder %s66, %s67
    %p79 = scmp.eq.s32.totalorder %s15, 1
    %p80 = por %p78, %p79
    %p82 = scmp.ne.s32.totalorder %s67, %s81
    %p83 = scmp.eq.s32.totalorder %s15, 0
    %p84 = por %p82, %p83
    %s85 = ssub.s32 %s9, %s16
    %p86 = scmp.eq.s32.totalorder %s85, 0
    %s88 = sadd.s32 %s87, 1
    %s89 = scalar_select %p86, %s87, %s88
    %p92 = pneg %p86
    %p93 = scmp.eq.s32.totalorder %s9, 1
    %p94 = por %p92, %p93
    %p95 = scmp.ne.s32.totalorder %s87, %s90
    %p96 = scmp.eq.s32.totalorder %s9, 0
    %p97 = por %p95, %p96
    %p98 = scmp.ne.s32.totalorder %s87, %s90
    %p99 = scmp.eq.s32.totalorder %s14, 1
    %p100 = por %p98, %p99
    %p101 = scmp.ne.s32.totalorder %s90, %s91
    %p102 = scmp.eq.s32.totalorder %s14, 0
    %p103 = por %p101, %p102
    %p104 = scmp.ne.s32.totalorder %s90, %s91
    %p105 = scmp.eq.s32.totalorder %s15, 1
    %p106 = por %p104, %p105
    %p108 = scmp.ne.s32.totalorder %s91, %s107
    %p109 = scmp.eq.s32.totalorder %s15, 0
    %p110 = por %p108, %p109
    %p111 = scmp.le.s32.totalorder 1, %s9
    %p112 = scmp.lt.s32.totalorder %s9, 3
    %p113 = pnand %p111, %p112
    %p114 = pneg %p113
    // Predicated region
    $region9: #{vit_pose_forward.28} parent=5 // pred_check
      _
    $region10: #{vit_pose_forward.28} parent=5 // pred_check_branch
      %116 = sbr.rel (%p113) target = $region12
    $region11: #{vit_pose_forward.28} parent=5 // pred_region
      %s117 = ssub.s32 %s9, 1
      // Predicated region
      $region13: #{vit_pose_forward.28} parent=11 // pred_check
        %p118 = pneg %p56
      $region14: #{vit_pose_forward.28} parent=11 // pred_check_branch
        %120 = sbr.rel (%p118) target = $region16
      $region15: #{vit_pose_forward.28} parent=11 // pred_region
        _
      $region16: #{vit_pose_forward.28} parent=11 // pred_fallthru
        _
      // Predicated region
      $region17: #{vit_pose_forward.28} parent=11 // pred_check
        %p121 = pneg %p77
      $region18: #{vit_pose_forward.28} parent=11 // pred_check_branch
        %123 = sbr.rel (%p121) target = $region20
      $region19: #{vit_pose_forward.28} parent=11 // pred_region
        _
      $region20: #{vit_pose_forward.28} parent=11 // pred_fallthru
        _
    $region12: #{vit_pose_forward.28} parent=5 // pred_fallthru
      _
    %p124 = scmp.lt.s32.totalorder %s9, 2
    // Predicated region
    $region21: #{vit_pose_forward.28} parent=5 // pred_check
      %p125 = pneg %p124
    $region22: #{vit_pose_forward.28} parent=5 // pred_check_branch
      %127 = sbr.rel (%p125) target = $region24
    $region23: #{vit_pose_forward.28} parent=5 // pred_region
      // Predicated region
      $region25: #{vit_pose_forward.28} parent=23 // pred_check
        %p128 = pneg %p29
      $region26: #{vit_pose_forward.28} parent=23 // pred_check_branch
        %130 = sbr.rel (%p128) target = $region28
      $region27: #{vit_pose_forward.28} parent=23 // pred_region
        %p131 = scmp.lt.s32.totalorder %s9, 1
        %s132 = scalar_select %p131, %s9, 1
        %s133 = smul.addr %s132, 8
        %s134 = smul.addr %s133, 2
        %s135 = scalar_lea.vmem %s0, %s134
      $region28: #{vit_pose_forward.28} parent=23 // pred_fallthru
        _
    $region24: #{vit_pose_forward.28} parent=5 // pred_fallthru
      _
    %p136 = scmp.le.s32.totalorder 1, %s9
    %p137 = scmp.lt.s32.totalorder %s9, 3
    %p138 = pnand %p136, %p137
    %p139 = pneg %p138
    // Predicated region
    $region29: #{vit_pose_forward.28} parent=5 // pred_check
      _
    $region30: #{vit_pose_forward.28} parent=5 // pred_check_branch
      %141 = sbr.rel (%p138) target = $region32
    $region31: #{vit_pose_forward.28} parent=5 // pred_region
      %s142 = ssub.s32 %s9, 1
      %p143 = scmp.lt.s32.totalorder %s14, 1
      %s144 = scalar_select %p143, %s14, 1
      %s145 = smul.addr %s144, 8
      %s146 = smul.addr %s145, 2
      %s147 = scalar_lea.vmem %s0, %s146
      %p148 = pneg %p35
      %p149 = pneg %p32
      %p150 = pneg %p56
      %p151 = pneg %p53
      %p152 = pneg %p77
      %p153 = pneg %p74
      %p154 = pneg %p103
      %p155 = pneg %p100
      %s156 = smul.u32 4, %s14
      %p157 = scmp.lt.s32.totalorder %s156, 7
      %s158 = scalar_select %p157, %s156, 7
      %s159 = smul.addr %s158, 2
      %s160 = smul.addr %s159, 2
      %s161 = scalar_lea.vmem %s3, %s160
      %p162 = scmp.lt.s32.totalorder %s14, 1
      %s163 = scalar_select %p162, %s14, 1
      %s164 = smul.addr %s163, 8
      %s165 = smul.addr %s164, 2
      %s166 = scalar_lea.vmem %s0, %s165
      %s167 = smul.u32 4, %s14
      %p168 = scmp.lt.s32.totalorder %s167, 7
      %s169 = scalar_select %p168, %s167, 7
      %s170 = smul.addr %s169, 2
      %s171 = smul.addr %s170, 2
      %s172 = scalar_lea.vmem %s3, %s171
      %s173 = smul.u32 4, %s14
      %v174 = vld [vmem:[%s1] sm:$0x1]
      %v175 = vld [vmem:[%s2] sm:$0x1]
      %v176 = vld [vmem:[%s166] sm:$0x3]
      %v177 = vld [vmem:[%s166 + $0x4] sm:$0x3]
      %v178 = vld [vmem:[%s166 + $0x8] sm:$0x3]
      %v179 = vld [vmem:[%s166 + $0xc] sm:$0x3]
      %v180 = vunpack.c.l.bf16 %v176
      %v181 = vunpack.c.l.bf16 %v177
      %v182 = vunpack.c.l.bf16 %v178
      %v183 = vunpack.c.l.bf16 %v179
      %v188 = vrot.slane %v180, 7
      %v189 = vrot.slane %v181, 7
      %v190 = vrot.slane %v182, 7
      %v191 = vrot.slane %v183, 7
      %192 = vrot.lane.b32.xlu0 %v188, 16
      %v193 = vpop.permute.xlu0 %192
      %194 = vrot.lane.b32.xlu0 %v189, 16
      %v195 = vpop.permute.xlu0 %194
      %196 = vrot.lane.b32.xlu0 %v190, 16
      %v197 = vpop.permute.xlu0 %196
      %198 = vrot.lane.b32.xlu0 %v191, 16
      %v199 = vpop.permute.xlu0 %198
      %vm204 = vcmask 1040384
      %v205 = vsel %vm204, 0.0, %v193
      %v206 = vsel %vm204, 0.0, %v195
      %v207 = vsel %vm204, 0.0, %v197
      %v208 = vsel %vm204, 0.0, %v199
      %213 = vrot.lane.b32.xlu0 %v205, 80
      %v214 = vpop.permute.xlu0 %213
      %215 = vrot.lane.b32.xlu0 %v206, 80
      %v216 = vpop.permute.xlu0 %215
      %217 = vrot.lane.b32.xlu0 %v207, 80
      %v218 = vpop.permute.xlu0 %217
      %219 = vrot.lane.b32.xlu0 %v208, 80
      %v220 = vpop.permute.xlu0 %219
      %v225 = vadd.f32 %v180, %v214
      %v226 = vadd.f32 %v181, %v216
      %v227 = vadd.f32 %v182, %v218
      %v228 = vadd.f32 %v183, %v220
      %v229 = vld [vmem:[%s166 + $0x2] sm:$0x3]
      %v230 = vld [vmem:[%s166 + $0x6] sm:$0x3]
      %v231 = vld [vmem:[%s166 + $0xa] sm:$0x3]
      %v232 = vunpack.c.l.bf16 %v229
      %v233 = vunpack.c.l.bf16 %v230
      %v234 = vunpack.c.l.bf16 %v231
      %238 = vrot.lane.b32.xlu0 %v232, 48
      %v239 = vpop.permute.xlu0 %238
      %240 = vrot.lane.b32.xlu0 %v233, 48
      %v241 = vpop.permute.xlu0 %240
      %242 = vrot.lane.b32.xlu0 %v234, 48
      %v243 = vpop.permute.xlu0 %242
      %245 = vrot.lane.b32.xlu0 0.0, 80
      %v246 = vpop.permute.xlu0 %245
      %247 = vrot.lane.b32.xlu0 %v239, 80
      %v248 = vpop.permute.xlu0 %247
      %249 = vrot.lane.b32.xlu0 %v241, 80
      %v250 = vpop.permute.xlu0 %249
      %251 = vrot.lane.b32.xlu0 %v243, 80
      %v252 = vpop.permute.xlu0 %251
      %v257 = vadd.f32 %v225, %v246
      %v258 = vadd.f32 %v226, %v248
      %v259 = vadd.f32 %v227, %v250
      %v260 = vadd.f32 %v228, %v252
      %261 = vrot.lane.b32.xlu0 %v232, 16
      %v262 = vpop.permute.xlu0 %261
      %263 = vrot.lane.b32.xlu0 %v233, 16
      %v264 = vpop.permute.xlu0 %263
      %265 = vrot.lane.b32.xlu0 %v234, 16
      %v266 = vpop.permute.xlu0 %265
      %v267 = vrot.slane 0.0, 7
      %v268 = vrot.slane %v262, 7
      %v269 = vrot.slane %v264, 7
      %v270 = vrot.slane %v266, 7
      %v275 = vsel %vm204, 0.0, %v267
      %v276 = vsel %vm204, 0.0, %v268
      %v277 = vsel %vm204, 0.0, %v269
      %v278 = vsel %vm204, 0.0, %v270
      %283 = vrot.lane.b32.xlu0 %v275, 80
      %v284 = vpop.permute.xlu0 %283
      %285 = vrot.lane.b32.xlu0 %v276, 80
      %v286 = vpop.permute.xlu0 %285
      %287 = vrot.lane.b32.xlu0 %v277, 80
      %v288 = vpop.permute.xlu0 %287
      %289 = vrot.lane.b32.xlu0 %v278, 80
      %v290 = vpop.permute.xlu0 %289
      %v295 = vadd.f32 %v257, %v284
      %v296 = vadd.f32 %v258, %v286
      %v297 = vadd.f32 %v259, %v288
      %v298 = vadd.f32 %v260, %v290
      %v300 = vlaneseq
      %v301 = vshrl.u32 %v300, 7
      %v302 = vsub.s32 0, %v301
      %v303 = vrot.slane %v174, %v302
      %305 = vrot.lane.b32.xlu0 %v303, 80
      %v306 = vpop.permute.xlu0 %305
      %v308 = vmul.f32 %v295, %v306
      %v309 = vmul.f32 %v296, %v306
      %v310 = vmul.f32 %v297, %v306
      %v311 = vmul.f32 %v298, %v306
      %v313 = vlaneseq
      %v314 = vshrl.u32 %v313, 7
      %v315 = vsub.s32 0, %v314
      %v316 = vrot.slane %v175, %v315
      %318 = vrot.lane.b32.xlu0 %v316, 80
      %v319 = vpop.permute.xlu0 %318
      %v321 = vadd.f32 %v308, %v319
      %v322 = vadd.f32 %v309, %v319
      %v323 = vadd.f32 %v310, %v319
      %v324 = vadd.f32 %v311, %v319
      %v325 = vmax.f32 %v321, 0.0
      %v326 = vmax.f32 %v322, 0.0
      %v327 = vmax.f32 %v323, 0.0
      %v328 = vmax.f32 %v324, 0.0
      %v329 = vpack.c.bf16 %v325, %v325
      %v330 = vpack.c.bf16 %v326, %v326
      %v331 = vpack.c.bf16 %v327, %v327
      %v332 = vpack.c.bf16 %v328, %v328
      %v333 = vrot.slane %v180, 1
      %v334 = vrot.slane %v181, 1
      %v335 = vrot.slane %v182, 1
      %v336 = vrot.slane %v183, 1
      %vm341 = vcmask 1042432
      %v342 = vsel %vm341, %v333, 0.0
      %v343 = vsel %vm341, %v334, 0.0
      %v344 = vsel %vm341, %v335, 0.0
      %v345 = vsel %vm341, %v336, 0.0
      %346 = vrot.lane.b32.xlu0 %v180, 96
      %v347 = vpop.permute.xlu0 %346
      %348 = vrot.lane.b32.xlu0 %v181, 96
      %v349 = vpop.permute.xlu0 %348
      %350 = vrot.lane.b32.xlu0 %v182, 96
      %v351 = vpop.permute.xlu0 %350
      %352 = vrot.lane.b32.xlu0 %v183, 96
      %v353 = vpop.permute.xlu0 %352
      %v358 = vadd.f32 %v342, %v347
      %v359 = vadd.f32 %v343, %v349
      %v360 = vadd.f32 %v344, %v351
      %v361 = vadd.f32 %v345, %v353
      %362 = vrot.lane.b32.xlu0 %v232, 64
      %v363 = vpop.permute.xlu0 %362
      %364 = vrot.lane.b32.xlu0 %v233, 64
      %v365 = vpop.permute.xlu0 %364
      %366 = vrot.lane.b32.xlu0 %v234, 64
      %v367 = vpop.permute.xlu0 %366
      %v368 = vrot.slane 0.0, 1
      %v369 = vrot.slane %v363, 1
      %v370 = vrot.slane %v365, 1
      %v371 = vrot.slane %v367, 1
      %v376 = vsel %vm341, %v368, 0.0
      %v377 = vsel %vm341, %v369, 0.0
      %v378 = vsel %vm341, %v370, 0.0
      %v379 = vsel %vm341, %v371, 0.0
      %384 = vrot.lane.b32.xlu0 %v376, 64
      %v385 = vpop.permute.xlu0 %384
      %386 = vrot.lane.b32.xlu0 %v377, 64
      %v387 = vpop.permute.xlu0 %386
      %388 = vrot.lane.b32.xlu0 %v378, 64
      %v389 = vpop.permute.xlu0 %388
      %390 = vrot.lane.b32.xlu0 %v379, 64
      %v391 = vpop.permute.xlu0 %390
      %v396 = vadd.f32 %v358, %v385
      %v397 = vadd.f32 %v359, %v387
      %v398 = vadd.f32 %v360, %v389
      %v399 = vadd.f32 %v361, %v391
      %400 = vrot.lane.b32.xlu0 %v232, 32
      %v401 = vpop.permute.xlu0 %400
      %402 = vrot.lane.b32.xlu0 %v233, 32
      %v403 = vpop.permute.xlu0 %402
      %404 = vrot.lane.b32.xlu0 %v234, 32
      %v405 = vpop.permute.xlu0 %404
      %406 = vrot.lane.b32.xlu0 0.0, 64
      %v407 = vpop.permute.xlu0 %406
      %408 = vrot.lane.b32.xlu0 %v401, 64
      %v409 = vpop.permute.xlu0 %408
      %410 = vrot.lane.b32.xlu0 %v403, 64
      %v411 = vpop.permute.xlu0 %410
      %412 = vrot.lane.b32.xlu0 %v405, 64
      %v413 = vpop.permute.xlu0 %412
      %v418 = vadd.f32 %v396, %v407
      %v419 = vadd.f32 %v397, %v409
      %v420 = vadd.f32 %v398, %v411
      %v421 = vadd.f32 %v399, %v413
      %422 = vrot.lane.b32.xlu0 %v303, 64
      %v423 = vpop.permute.xlu0 %422
      %v425 = vmul.f32 %v418, %v423
      %v426 = vmul.f32 %v419, %v423
      %v427 = vmul.f32 %v420, %v423
      %v428 = vmul.f32 %v421, %v423
      %429 = vrot.lane.b32.xlu0 %v316, 64
      %v430 = vpop.permute.xlu0 %429
      %v432 = vadd.f32 %v425, %v430
      %v433 = vadd.f32 %v426, %v430
      %v434 = vadd.f32 %v427, %v430
      %v435 = vadd.f32 %v428, %v430
      %v436 = vmax.f32 %v432, 0.0
      %v437 = vmax.f32 %v433, 0.0
      %v438 = vmax.f32 %v434, 0.0
      %v439 = vmax.f32 %v435, 0.0
      %v440 = vpack.c.bf16 %v436, %v436
      %v441 = vpack.c.bf16 %v437, %v437
      %v442 = vpack.c.bf16 %v438, %v438
      %v443 = vpack.c.bf16 %v439, %v439
      %448 = vrot.lane.b32.xlu0 %v329, 48
      %v449 = vpop.permute.xlu0 %448
      %450 = vrot.lane.b32.xlu0 %v330, 48
      %v451 = vpop.permute.xlu0 %450
      %452 = vrot.lane.b32.xlu0 %v331, 48
      %v453 = vpop.permute.xlu0 %452
      %454 = vrot.lane.b32.xlu0 %v332, 48
      %v455 = vpop.permute.xlu0 %454
      %460 = vrot.lane.b32.xlu0 %v440, 80
      %v461 = vpop.permute.xlu0 %460
      %462 = vrot.lane.b32.xlu0 %v441, 80
      %v463 = vpop.permute.xlu0 %462
      %464 = vrot.lane.b32.xlu0 %v442, 80
      %v465 = vpop.permute.xlu0 %464
      %466 = vrot.lane.b32.xlu0 %v443, 80
      %v467 = vpop.permute.xlu0 %466
      %vm468 = vcmask 130048
      %v471 = vsel %vm468, %v449, %v461
      %v475 = vsel %vm468, %v451, %v463
      %v479 = vsel %vm468, %v453, %v465
      %v483 = vsel %vm468, %v455, %v467
      %485 = vrot.lane.b32.xlu0 %v189, 80
      %v486 = vpop.permute.xlu0 %485
      %487 = vrot.lane.b32.xlu0 %v190, 80
      %v488 = vpop.permute.xlu0 %487
      %489 = vrot.lane.b32.xlu0 %v191, 80
      %v490 = vpop.permute.xlu0 %489
      %491 = vrot.lane.b32.xlu0 %v267, 80
      %v492 = vpop.permute.xlu0 %491
      %v497 = vsel %vm204, 0.0, %v486
      %v498 = vsel %vm204, 0.0, %v488
      %v499 = vsel %vm204, 0.0, %v490
      %v500 = vsel %vm204, 0.0, %v492
      %505 = vrot.lane.b32.xlu0 %v497, 16
      %v506 = vpop.permute.xlu0 %505
      %507 = vrot.lane.b32.xlu0 %v498, 16
      %v508 = vpop.permute.xlu0 %507
      %509 = vrot.lane.b32.xlu0 %v499, 16
      %v510 = vpop.permute.xlu0 %509
      %511 = vrot.lane.b32.xlu0 %v500, 16
      %v512 = vpop.permute.xlu0 %511
      %v517 = vadd.f32 %v181, %v506
      %v518 = vadd.f32 %v182, %v508
      %v519 = vadd.f32 %v183, %v510
      %v520 = vadd.f32 %v512, 0.0
      %v521 = vld [vmem:[%s166 + $0xe] sm:$0x3]
      %v522 = vunpack.c.l.bf16 %v521
      %v523 = vadd.f32 %v517, %v232
      %v524 = vadd.f32 %v518, %v233
      %v525 = vadd.f32 %v519, %v234
      %v526 = vadd.f32 %v520, %v522
      %v528 = vrot.slane %v232, 7
      %v529 = vrot.slane %v233, 7
      %v530 = vrot.slane %v234, 7
      %v531 = vrot.slane %v522, 7
      %532 = vrot.lane.b32.xlu0 %v528, 80
      %v533 = vpop.permute.xlu0 %532
      %534 = vrot.lane.b32.xlu0 %v529, 80
      %v535 = vpop.permute.xlu0 %534
      %536 = vrot.lane.b32.xlu0 %v530, 80
      %v537 = vpop.permute.xlu0 %536
      %538 = vrot.lane.b32.xlu0 %v531, 80
      %v539 = vpop.permute.xlu0 %538
      %v544 = vsel %vm204, 0.0, %v533
      %v545 = vsel %vm204, 0.0, %v535
      %v546 = vsel %vm204, 0.0, %v537
      %v547 = vsel %vm204, 0.0, %v539
      %552 = vrot.lane.b32.xlu0 %v544, 16
      %v553 = vpop.permute.xlu0 %552
      %554 = vrot.lane.b32.xlu0 %v545, 16
      %v555 = vpop.permute.xlu0 %554
      %556 = vrot.lane.b32.xlu0 %v546, 16
      %v557 = vpop.permute.xlu0 %556
      %558 = vrot.lane.b32.xlu0 %v547, 16
      %v559 = vpop.permute.xlu0 %558
      %v564 = vadd.f32 %v523, %v553
      %v565 = vadd.f32 %v524, %v555
      %v566 = vadd.f32 %v525, %v557
      %v567 = vadd.f32 %v526, %v559
      %568 = vrot.lane.b32.xlu0 %v303, 16
      %v569 = vpop.permute.xlu0 %568
      %v571 = vmul.f32 %v564, %v569
      %v572 = vmul.f32 %v565, %v569
      %v573 = vmul.f32 %v566, %v569
      %v574 = vmul.f32 %v567, %v569
      %575 = vrot.lane.b32.xlu0 %v316, 16
      %v576 = vpop.permute.xlu0 %575
      %v578 = vadd.f32 %v571, %v576
      %v579 = vadd.f32 %v572, %v576
      %v580 = vadd.f32 %v573, %v576
      %v581 = vadd.f32 %v574, %v576
      %v582 = vmax.f32 %v578, 0.0
      %v583 = vmax.f32 %v579, 0.0
      %v584 = vmax.f32 %v580, 0.0
      %v585 = vmax.f32 %v581, 0.0
      %v586 = vpack.c.bf16 %v582, %v582
      %v587 = vpack.c.bf16 %v583, %v583
      %v588 = vpack.c.bf16 %v584, %v584
      %v589 = vpack.c.bf16 %v585, %v585
      %590 = vrot.lane.b32.xlu0 0.0, 96
      %v591 = vpop.permute.xlu0 %590
      %v593 = vadd.f32 %v376, %v591
      %v594 = vrot.slane %v232, 1
      %v595 = vrot.slane %v233, 1
      %v596 = vrot.slane %v234, 1
      %v597 = vrot.slane %v522, 1
      %v602 = vsel %vm341, %v594, 0.0
      %v603 = vsel %vm341, %v595, 0.0
      %v604 = vsel %vm341, %v596, 0.0
      %v605 = vsel %vm341, %v597, 0.0
      %v606 = vadd.f32 %v359, %v602
      %v607 = vadd.f32 %v360, %v603
      %v608 = vadd.f32 %v361, %v604
      %v609 = vadd.f32 %v593, %v605
      %610 = vrot.lane.b32.xlu0 %v232, 96
      %v611 = vpop.permute.xlu0 %610
      %612 = vrot.lane.b32.xlu0 %v233, 96
      %v613 = vpop.permute.xlu0 %612
      %614 = vrot.lane.b32.xlu0 %v234, 96
      %v615 = vpop.permute.xlu0 %614
      %616 = vrot.lane.b32.xlu0 %v522, 96
      %v617 = vpop.permute.xlu0 %616
      %v622 = vadd.f32 %v606, %v611
      %v623 = vadd.f32 %v607, %v613
      %v624 = vadd.f32 %v608, %v615
      %v625 = vadd.f32 %v609, %v617
      %v626 = vmul.f32 %v622, %v303
      %v627 = vmul.f32 %v623, %v303
      %v628 = vmul.f32 %v624, %v303
      %v629 = vmul.f32 %v625, %v303
      %v630 = vadd.f32 %v626, %v316
      %v631 = vadd.f32 %v627, %v316
      %v632 = vadd.f32 %v628, %v316
      %v633 = vadd.f32 %v629, %v316
      %v634 = vmax.f32 %v630, 0.0
      %v635 = vmax.f32 %v631, 0.0
      %v636 = vmax.f32 %v632, 0.0
      %v637 = vmax.f32 %v633, 0.0
      %v638 = vpack.c.bf16 %v634, %v634
      %v639 = vpack.c.bf16 %v635, %v635
      %v640 = vpack.c.bf16 %v636, %v636
      %v641 = vpack.c.bf16 %v637, %v637
      %646 = vrot.lane.b32.xlu0 %v586, 112
      %v647 = vpop.permute.xlu0 %646
      %648 = vrot.lane.b32.xlu0 %v587, 112
      %v649 = vpop.permute.xlu0 %648
      %650 = vrot.lane.b32.xlu0 %v588, 112
      %v651 = vpop.permute.xlu0 %650
      %652 = vrot.lane.b32.xlu0 %v589, 112
      %v653 = vpop.permute.xlu0 %652
      %658 = vrot.lane.b32.xlu0 %v638, 16
      %v659 = vpop.permute.xlu0 %658
      %660 = vrot.lane.b32.xlu0 %v639, 16
      %v661 = vpop.permute.xlu0 %660
      %662 = vrot.lane.b32.xlu0 %v640, 16
      %v663 = vpop.permute.xlu0 %662
      %664 = vrot.lane.b32.xlu0 %v641, 16
      %v665 = vpop.permute.xlu0 %664
      %v668 = vsel %vm468, %v647, %v659
      %v672 = vsel %vm468, %v649, %v661
      %v676 = vsel %vm468, %v651, %v663
      %v680 = vsel %vm468, %v653, %v665
      %vm682 = vcmask 254976
      %683 = vst.msk [vmem:[%s172] sm:$0x3] %vm682, %v471
      %684 = vst.msk [vmem:[%s172 + $0x2] sm:$0x3] %vm682, %v668
      %685 = vst.msk [vmem:[%s172 + $0x4] sm:$0x3] %vm682, %v475
      %686 = vst.msk [vmem:[%s172 + $0x6] sm:$0x3] %vm682, %v672
      %687 = vst.msk [vmem:[%s172 + $0x8] sm:$0x3] %vm682, %v479
      %688 = vst.msk [vmem:[%s172 + $0xa] sm:$0x3] %vm682, %v676
      %689 = vst.msk [vmem:[%s172 + $0xc] sm:$0x3] %vm682, %v483
      %690 = vst.msk [vmem:[%s172 + $0xe] sm:$0x3] %vm682, %v680
      %s691 = smul.u32 4, %s14
      %p692 = scmp.lt.s32.totalorder %s691, 7
      %s693 = scalar_select %p692, %s691, 7
      %s694 = smul.addr %s693, 2
      %s695 = smul.addr %s694, 2
      %s696 = scalar_lea.vmem %s3, %s695
      // Predicated region
      $region33: #{vit_pose_forward.28} parent=31 // pred_check
        %p697 = pneg %p100
      $region34: #{vit_pose_forward.28} parent=31 // pred_check_branch
        %699 = sbr.rel (%p697) target = $region36
      $region35: #{vit_pose_forward.28} parent=31 // pred_region
        %s700 = smul.u32 4, %s14
      $region36: #{vit_pose_forward.28} parent=31 // pred_fallthru
        _
    $region32: #{vit_pose_forward.28} parent=5 // pred_fallthru
      _
    %p701 = scmp.le.s32.totalorder 2, %s9
    // Predicated region
    $region37: #{vit_pose_forward.28} parent=5 // pred_check
      %p702 = pneg %p701
    $region38: #{vit_pose_forward.28} parent=5 // pred_check_branch
      %704 = sbr.rel (%p702) target = $region40
    $region39: #{vit_pose_forward.28} parent=5 // pred_region
      %s705 = ssub.s32 %s9, 2
      // Predicated region
      $region41: #{vit_pose_forward.28} parent=39 // pred_check
        %p706 = pneg %p106
      $region42: #{vit_pose_forward.28} parent=39 // pred_check_branch
        %708 = sbr.rel (%p706) target = $region44
      $region43: #{vit_pose_forward.28} parent=39 // pred_region
        %s709 = smul.u32 4, %s15
        %p710 = scmp.lt.s32.totalorder %s709, 7
        %s711 = scalar_select %p710, %s709, 7
        %s712 = smul.addr %s711, 2
        %s713 = smul.addr %s712, 2
        %s714 = scalar_lea.vmem %s3, %s713
      $region44: #{vit_pose_forward.28} parent=39 // pred_fallthru
        _
    $region40: #{vit_pose_forward.28} parent=5 // pred_fallthru
      _
  $region6: #{vit_pose_forward.28} parent=0 // loop_footer
    %s13 = sadd.s32 1, %s9
  $region7: #{vit_pose_forward.28} parent=0 // loop_footer_branch
    %8 = sbr.rel target = $region3
  $region8: #{vit_pose_forward.28} parent=0 // loop_exit
    _

// kernel: vit_pose_forward.30
$region0: #{vit_pose_forward.30}
  #allocation0 [shape = 'u32[]', space=smem, size = 0x4, offset = 0x4, fixed_abs, tag = 'smem constant byte address 0x4 - core index']
  #allocation1 [shape = 'u32[144,128]{1,0:T(1,128)}', space=vmem, size = 0x12000, scoped, tag = 'internal scratch']
  %s0 = inlined_call_operand.vmem [shape: bf16[2,8,8,256], index: 0, kind: input, shape index: {}]
  %s1 = inlined_call_operand.vmem [shape: f32[1,16], index: 1, kind: input, shape index: {}]
  %s2 = inlined_call_operand.vmem [shape: f32[1,16], index: 2, kind: input, shape index: {}]
  %s3 = inlined_call_operand.vmem [shape: bf16[16,2,8,32], index: 3, kind: output, shape index: {}]
  %s4 = sld [smem:[#allocation0]]
  $region45: #{vit_pose_forward.30} parent=0
    _
  %s6 = ssub.s32 1, %s4
  %s7 = scalar_select 0, %s6, %s4
  loop: start=0, step=1, limit=4
  $region2: #{vit_pose_forward.30} parent=0 // loop_pre_header
    _
  $region3: #{vit_pose_forward.30} parent=0 // loop_header
    %s9 = sphi 0, %s13
    %p10 = scmp.ge.s32.totalorder %s9, 4
    %s19 = sphi 0, %s21
    %s22 = sphi 0, %s19
    %s23 = sphi 0, %s22
    %s39 = sphi 0, %s23
    %s43 = sphi 0, %s43
    %s45 = sphi 0, %s43
    %s46 = sphi 0, %s45
    %s60 = sphi 0, %s46
    %s64 = sphi 0, %s64
    %s66 = sphi 0, %s64
    %s67 = sphi 0, %s66
    %s81 = sphi 0, %s67
    %s87 = sphi 0, %s89
    %s90 = sphi 0, %s87
    %s91 = sphi 0, %s90
    %s107 = sphi 0, %s91
  $region4: #{vit_pose_forward.30} parent=0 // loop_header_branch
    %12 = sbr.rel (%p10) target = $region8
  $region5: #{vit_pose_forward.30} parent=0 // loop_body
    %s14 = ssub.s32 %s9, 1
    %s15 = ssub.s32 %s9, 2
    %s16 = sadd.s32 %s9, 1
    %s17 = ssub.s32 %s9, %s16
    %p18 = scmp.eq.s32.totalorder %s17, 0
    %s20 = sadd.s32 %s19, 1
    %s21 = scalar_select %p18, %s19, %s20
    %p24 = pneg %p18
    %p25 = scmp.eq.s32.totalorder %s9, 1
    %p26 = por %p24, %p25
    %p27 = scmp.ne.s32.totalorder %s19, %s22
    %p28 = scmp.eq.s32.totalorder %s9, 0
    %p29 = por %p27, %p28
    %p30 = scmp.ne.s32.totalorder %s19, %s22
    %p31 = scmp.eq.s32.totalorder %s14, 1
    %p32 = por %p30, %p31
    %p33 = scmp.ne.s32.totalorder %s22, %s23
    %p34 = scmp.eq.s32.totalorder %s14, 0
    %p35 = por %p33, %p34
    %p36 = scmp.ne.s32.totalorder %s22, %s23
    %p37 = scmp.eq.s32.totalorder %s15, 1
    %p38 = por %p36, %p37
    %p40 = scmp.ne.s32.totalorder %s23, %s39
    %p41 = scmp.eq.s32.totalorder %s15, 0
    %p42 = por %p40, %p41
    %s44 = sadd.s32 %s43, 1
    %p47 = scmp.eq.s32.totalorder %s9, 1
    %p48 = scmp.ne.s32.totalorder %s43, %s45
    %p49 = scmp.eq.s32.totalorder %s9, 0
    %p50 = por %p48, %p49
    %p51 = scmp.ne.s32.totalorder %s43, %s45
    %p52 = scmp.eq.s32.totalorder %s14, 1
    %p53 = por %p51, %p52
    %p54 = scmp.ne.s32.totalorder %s45, %s46
    %p55 = scmp.eq.s32.totalorder %s14, 0
    %p56 = por %p54, %p55
    %p57 = scmp.ne.s32.totalorder %s45, %s46
    %p58 = scmp.eq.s32.totalorder %s15, 1
    %p59 = por %p57, %p58
    %p61 = scmp.ne.s32.totalorder %s46, %s60
    %p62 = scmp.eq.s32.totalorder %s15, 0
    %p63 = por %p61, %p62
    %s65 = sadd.s32 %s64, 1
    %p68 = scmp.eq.s32.totalorder %s9, 1
    %p69 = scmp.ne.s32.totalorder %s64, %s66
    %p70 = scmp.eq.s32.totalorder %s9, 0
    %p71 = por %p69, %p70
    %p72 = scmp.ne.s32.totalorder %s64, %s66
    %p73 = scmp.eq.s32.totalorder %s14, 1
    %p74 = por %p72, %p73
    %p75 = scmp.ne.s32.totalorder %s66, %s67
    %p76 = scmp.eq.s32.totalorder %s14, 0
    %p77 = por %p75, %p76
    %p78 = scmp.ne.s32.totalorder %s66, %s67
    %p79 = scmp.eq.s32.totalorder %s15, 1
    %p80 = por %p78, %p79
    %p82 = scmp.ne.s32.totalorder %s67, %s81
    %p83 = scmp.eq.s32.totalorder %s15, 0
    %p84 = por %p82, %p83
    %s85 = ssub.s32 %s9, %s16
    %p86 = scmp.eq.s32.totalorder %s85, 0
    %s88 = sadd.s32 %s87, 1
    %s89 = scalar_select %p86, %s87, %s88
    %p92 = pneg %p86
    %p93 = scmp.eq.s32.totalorder %s9, 1
    %p94 = por %p92, %p93
    %p95 = scmp.ne.s32.totalorder %s87, %s90
    %p96 = scmp.eq.s32.totalorder %s9, 0
    %p97 = por %p95, %p96
    %p98 = scmp.ne.s32.totalorder %s87, %s90
    %p99 = scmp.eq.s32.totalorder %s14, 1
    %p100 = por %p98, %p99
    %p101 = scmp.ne.s32.totalorder %s90, %s91
    %p102 = scmp.eq.s32.totalorder %s14, 0
    %p103 = por %p101, %p102
    %p104 = scmp.ne.s32.totalorder %s90, %s91
    %p105 = scmp.eq.s32.totalorder %s15, 1
    %p106 = por %p104, %p105
    %p108 = scmp.ne.s32.totalorder %s91, %s107
    %p109 = scmp.eq.s32.totalorder %s15, 0
    %p110 = por %p108, %p109
    %p111 = scmp.le.s32.totalorder 1, %s9
    %p112 = scmp.lt.s32.totalorder %s9, 3
    %p113 = pnand %p111, %p112
    %p114 = pneg %p113
    // Predicated region
    $region9: #{vit_pose_forward.30} parent=5 // pred_check
      _
    $region10: #{vit_pose_forward.30} parent=5 // pred_check_branch
      %116 = sbr.rel (%p113) target = $region12
    $region11: #{vit_pose_forward.30} parent=5 // pred_region
      %s117 = ssub.s32 %s9, 1
      // Predicated region
      $region13: #{vit_pose_forward.30} parent=11 // pred_check
        %p118 = pneg %p56
      $region14: #{vit_pose_forward.30} parent=11 // pred_check_branch
        %120 = sbr.rel (%p118) target = $region16
      $region15: #{vit_pose_forward.30} parent=11 // pred_region
        _
      $region16: #{vit_pose_forward.30} parent=11 // pred_fallthru
        _
      // Predicated region
      $region17: #{vit_pose_forward.30} parent=11 // pred_check
        %p121 = pneg %p77
      $region18: #{vit_pose_forward.30} parent=11 // pred_check_branch
        %123 = sbr.rel (%p121) target = $region20
      $region19: #{vit_pose_forward.30} parent=11 // pred_region
        _
      $region20: #{vit_pose_forward.30} parent=11 // pred_fallthru
        _
    $region12: #{vit_pose_forward.30} parent=5 // pred_fallthru
      _
    %p124 = scmp.lt.s32.totalorder %s9, 2
    // Predicated region
    $region21: #{vit_pose_forward.30} parent=5 // pred_check
      %p125 = pneg %p124
    $region22: #{vit_pose_forward.30} parent=5 // pred_check_branch
      %127 = sbr.rel (%p125) target = $region24
    $region23: #{vit_pose_forward.30} parent=5 // pred_region
      // Predicated region
      $region25: #{vit_pose_forward.30} parent=23 // pred_check
        %p128 = pneg %p29
      $region26: #{vit_pose_forward.30} parent=23 // pred_check_branch
        %130 = sbr.rel (%p128) target = $region28
      $region27: #{vit_pose_forward.30} parent=23 // pred_region
        %p131 = scmp.lt.s32.totalorder %s9, 1
        %s132 = scalar_select %p131, %s9, 1
        %s133 = smul.addr %s132, 16
        %s134 = smul.addr %s133, 4
        %s135 = scalar_lea.vmem %s0, %s134
      $region28: #{vit_pose_forward.30} parent=23 // pred_fallthru
        _
    $region24: #{vit_pose_forward.30} parent=5 // pred_fallthru
      _
    %p136 = scmp.le.s32.totalorder 1, %s9
    %p137 = scmp.lt.s32.totalorder %s9, 3
    %p138 = pnand %p136, %p137
    %p139 = pneg %p138
    // Predicated region
    $region29: #{vit_pose_forward.30} parent=5 // pred_check
      _
    $region30: #{vit_pose_forward.30} parent=5 // pred_check_branch
      %141 = sbr.rel (%p138) target = $region32
    $region31: #{vit_pose_forward.30} parent=5 // pred_region
      %s142 = ssub.s32 %s9, 1
      %p143 = scmp.lt.s32.totalorder %s14, 1
      %s144 = scalar_select %p143, %s14, 1
      %s145 = smul.addr %s144, 16
      %s146 = smul.addr %s145, 4
      %s147 = scalar_lea.vmem %s0, %s146
      %p148 = pneg %p35
      %p149 = pneg %p32
      %p150 = pneg %p56
      %p151 = pneg %p53
      %p152 = pneg %p77
      %p153 = pneg %p74
      %p154 = pneg %p103
      %p155 = pneg %p100
      %s156 = smul.u32 8, %s14
      %p157 = scmp.lt.s32.totalorder %s156, 15
      %s158 = scalar_select %p157, %s156, 15
      %s159 = smul.addr %s158, 2
      %s160 = smul.addr %s159, 4
      %s161 = scalar_lea.vmem %s3, %s160
      %p162 = scmp.lt.s32.totalorder %s14, 1
      %s163 = scalar_select %p162, %s14, 1
      %s164 = smul.addr %s163, 16
      %s165 = smul.addr %s164, 4
      %s166 = scalar_lea.vmem %s0, %s165
      %s167 = smul.u32 8, %s14
      %p168 = scmp.lt.s32.totalorder %s167, 15
      %s169 = scalar_select %p168, %s167, 15
      %s170 = smul.addr %s169, 2
      %s171 = smul.addr %s170, 4
      %s172 = scalar_lea.vmem %s3, %s171
      %s173 = smul.u32 8, %s14
      %v174 = vld [vmem:[%s1] sm:$0x1]
      %v175 = vld [vmem:[%s2] sm:$0x1]
      %v176 = vld [vmem:[%s166] sm:$0xf]
      %v177 = vld [vmem:[%s166 + $0x8] sm:$0xf]
      %v178 = vld [vmem:[%s166 + $0x10] sm:$0xf]
      %v179 = vld [vmem:[%s166 + $0x18] sm:$0xf]
      %v180 = vld [vmem:[%s166 + $0x20] sm:$0xf]
      %v181 = vld [vmem:[%s166 + $0x28] sm:$0xf]
      %v182 = vld [vmem:[%s166 + $0x30] sm:$0xf]
      %v183 = vld [vmem:[%s166 + $0x38] sm:$0xf]
      %v184 = vunpack.c.l.bf16 %v176
      %v185 = vunpack.c.l.bf16 %v177
      %v186 = vunpack.c.l.bf16 %v178
      %v187 = vunpack.c.l.bf16 %v179
      %v188 = vunpack.c.l.bf16 %v180
      %v189 = vunpack.c.l.bf16 %v181
      %v190 = vunpack.c.l.bf16 %v182
      %v191 = vunpack.c.l.bf16 %v183
      %v200 = vrot.slane %v184, 7
      %v201 = vrot.slane %v185, 7
      %v202 = vrot.slane %v186, 7
      %v203 = vrot.slane %v187, 7
      %v204 = vrot.slane %v188, 7
      %v205 = vrot.slane %v189, 7
      %v206 = vrot.slane %v190, 7
      %v207 = vrot.slane %v191, 7
      %208 = vrot.lane.b32.xlu0 %v200, 16
      %v209 = vpop.permute.xlu0 %208
      %210 = vrot.lane.b32.xlu0 %v201, 16
      %v211 = vpop.permute.xlu0 %210
      %212 = vrot.lane.b32.xlu0 %v202, 16
      %v213 = vpop.permute.xlu0 %212
      %214 = vrot.lane.b32.xlu0 %v203, 16
      %v215 = vpop.permute.xlu0 %214
      %216 = vrot.lane.b32.xlu0 %v204, 16
      %v217 = vpop.permute.xlu0 %216
      %218 = vrot.lane.b32.xlu0 %v205, 16
      %v219 = vpop.permute.xlu0 %218
      %220 = vrot.lane.b32.xlu0 %v206, 16
      %v221 = vpop.permute.xlu0 %220
      %222 = vrot.lane.b32.xlu0 %v207, 16
      %v223 = vpop.permute.xlu0 %222
      %vm232 = vcmask 1040384
      %v233 = vsel %vm232, 0.0, %v209
      %v234 = vsel %vm232, 0.0, %v211
      %v235 = vsel %vm232, 0.0, %v213
      %v236 = vsel %vm232, 0.0, %v215
      %v237 = vsel %vm232, 0.0, %v217
      %v238 = vsel %vm232, 0.0, %v219
      %v239 = vsel %vm232, 0.0, %v221
      %v240 = vsel %vm232, 0.0, %v223
      %249 = vrot.lane.b32.xlu0 %v233, 80
      %v250 = vpop.permute.xlu0 %249
      %251 = vrot.lane.b32.xlu0 %v234, 80
      %v252 = vpop.permute.xlu0 %251
      %253 = vrot.lane.b32.xlu0 %v235, 80
      %v254 = vpop.permute.xlu0 %253
      %255 = vrot.lane.b32.xlu0 %v236, 80
      %v256 = vpop.permute.xlu0 %255
      %257 = vrot.lane.b32.xlu0 %v237, 80
      %v258 = vpop.permute.xlu0 %257
      %259 = vrot.lane.b32.xlu0 %v238, 80
      %v260 = vpop.permute.xlu0 %259
      %261 = vrot.lane.b32.xlu0 %v239, 80
      %v262 = vpop.permute.xlu0 %261
      %263 = vrot.lane.b32.xlu0 %v240, 80
      %v264 = vpop.permute.xlu0 %263
      %v273 = vadd.f32 %v184, %v250
      %v274 = vadd.f32 %v185, %v252
      %v275 = vadd.f32 %v186, %v254
      %v276 = vadd.f32 %v187, %v256
      %v277 = vadd.f32 %v188, %v258
      %v278 = vadd.f32 %v189, %v260
      %v279 = vadd.f32 %v190, %v262
      %v280 = vadd.f32 %v191, %v264
      %v281 = vld [vmem:[%s166 + $0x4] sm:$0xf]
      %v282 = vld [vmem:[%s166 + $0xc] sm:$0xf]
      %v283 = vld [vmem:[%s166 + $0x14] sm:$0xf]
      %v284 = vld [vmem:[%s166 + $0x1c] sm:$0xf]
      %v285 = vld [vmem:[%s166 + $0x24] sm:$0xf]
      %v286 = vld [vmem:[%s166 + $0x2c] sm:$0xf]
      %v287 = vld [vmem:[%s166 + $0x34] sm:$0xf]
      %v288 = vunpack.c.l.bf16 %v281
      %v289 = vunpack.c.l.bf16 %v282
      %v290 = vunpack.c.l.bf16 %v283
      %v291 = vunpack.c.l.bf16 %v284
      %v292 = vunpack.c.l.bf16 %v285
      %v293 = vunpack.c.l.bf16 %v286
      %v294 = vunpack.c.l.bf16 %v287
      %302 = vrot.lane.b32.xlu0 %v288, 48
      %v303 = vpop.permute.xlu0 %302
      %304 = vrot.lane.b32.xlu0 %v289, 48
      %v305 = vpop.permute.xlu0 %304
      %306 = vrot.lane.b32.xlu0 %v290, 48
      %v307 = vpop.permute.xlu0 %306
      %308 = vrot.lane.b32.xlu0 %v291, 48
      %v309 = vpop.permute.xlu0 %308
      %310 = vrot.lane.b32.xlu0 %v292, 48
      %v311 = vpop.permute.xlu0 %310
      %312 = vrot.lane.b32.xlu0 %v293, 48
      %v313 = vpop.permute.xlu0 %312
      %314 = vrot.lane.b32.xlu0 %v294, 48
      %v315 = vpop.permute.xlu0 %314
      %317 = vrot.lane.b32.xlu0 0.0, 80
      %v318 = vpop.permute.xlu0 %317
      %319 = vrot.lane.b32.xlu0 %v303, 80
      %v320 = vpop.permute.xlu0 %319
      %321 = vrot.lane.b32.xlu0 %v305, 80
      %v322 = vpop.permute.xlu0 %321
      %323 = vrot.lane.b32.xlu0 %v307, 80
      %v324 = vpop.permute.xlu0 %323
      %325 = vrot.lane.b32.xlu0 %v309, 80
      %v326 = vpop.permute.xlu0 %325
      %327 = vrot.lane.b32.xlu0 %v311, 80
      %v328 = vpop.permute.xlu0 %327
      %329 = vrot.lane.b32.xlu0 %v313, 80
      %v330 = vpop.permute.xlu0 %329
      %331 = vrot.lane.b32.xlu0 %v315, 80
      %v332 = vpop.permute.xlu0 %331
      %v341 = vadd.f32 %v273, %v318
      %v342 = vadd.f32 %v274, %v320
      %v343 = vadd.f32 %v275, %v322
      %v344 = vadd.f32 %v276, %v324
      %v345 = vadd.f32 %v277, %v326
      %v346 = vadd.f32 %v278, %v328
      %v347 = vadd.f32 %v279, %v330
      %v348 = vadd.f32 %v280, %v332
      %349 = vrot.lane.b32.xlu0 %v288, 16
      %v350 = vpop.permute.xlu0 %349
      %351 = vrot.lane.b32.xlu0 %v289, 16
      %v352 = vpop.permute.xlu0 %351
      %353 = vrot.lane.b32.xlu0 %v290, 16
      %v354 = vpop.permute.xlu0 %353
      %355 = vrot.lane.b32.xlu0 %v291, 16
      %v356 = vpop.permute.xlu0 %355
      %357 = vrot.lane.b32.xlu0 %v292, 16
      %v358 = vpop.permute.xlu0 %357
      %359 = vrot.lane.b32.xlu0 %v293, 16
      %v360 = vpop.permute.xlu0 %359
      %361 = vrot.lane.b32.xlu0 %v294, 16
      %v362 = vpop.permute.xlu0 %361
      %v363 = vrot.slane 0.0, 7
      %v364 = vrot.slane %v350, 7
      %v365 = vrot.slane %v352, 7
      %v366 = vrot.slane %v354, 7
      %v367 = vrot.slane %v356, 7
      %v368 = vrot.slane %v358, 7
      %v369 = vrot.slane %v360, 7
      %v370 = vrot.slane %v362, 7
      %v379 = vsel %vm232, 0.0, %v363
      %v380 = vsel %vm232, 0.0, %v364
      %v381 = vsel %vm232, 0.0, %v365
      %v382 = vsel %vm232, 0.0, %v366
      %v383 = vsel %vm232, 0.0, %v367
      %v384 = vsel %vm232, 0.0, %v368
      %v385 = vsel %vm232, 0.0, %v369
      %v386 = vsel %vm232, 0.0, %v370
      %395 = vrot.lane.b32.xlu0 %v379, 80
      %v396 = vpop.permute.xlu0 %395
      %397 = vrot.lane.b32.xlu0 %v380, 80
      %v398 = vpop.permute.xlu0 %397
      %399 = vrot.lane.b32.xlu0 %v381, 80
      %v400 = vpop.permute.xlu0 %399
      %401 = vrot.lane.b32.xlu0 %v382, 80
      %v402 = vpop.permute.xlu0 %401
      %403 = vrot.lane.b32.xlu0 %v383, 80
      %v404 = vpop.permute.xlu0 %403
      %405 = vrot.lane.b32.xlu0 %v384, 80
      %v406 = vpop.permute.xlu0 %405
      %407 = vrot.lane.b32.xlu0 %v385, 80
      %v408 = vpop.permute.xlu0 %407
      %409 = vrot.lane.b32.xlu0 %v386, 80
      %v410 = vpop.permute.xlu0 %409
      %v419 = vadd.f32 %v341, %v396
      %v420 = vadd.f32 %v342, %v398
      %v421 = vadd.f32 %v343, %v400
      %v422 = vadd.f32 %v344, %v402
      %v423 = vadd.f32 %v345, %v404
      %v424 = vadd.f32 %v346, %v406
      %v425 = vadd.f32 %v347, %v408
      %v426 = vadd.f32 %v348, %v410
      %v428 = vlaneseq
      %v429 = vshrl.u32 %v428, 7
      %v430 = vsub.s32 0, %v429
      %v431 = vrot.slane %v174, %v430
      %433 = vrot.lane.b32.xlu0 %v431, 80
      %v434 = vpop.permute.xlu0 %433
      %v436 = vmul.f32 %v419, %v434
      %v437 = vmul.f32 %v420, %v434
      %v438 = vmul.f32 %v421, %v434
      %v439 = vmul.f32 %v422, %v434
      %v440 = vmul.f32 %v423, %v434
      %v441 = vmul.f32 %v424, %v434
      %v442 = vmul.f32 %v425, %v434
      %v443 = vmul.f32 %v426, %v434
      %v445 = vlaneseq
      %v446 = vshrl.u32 %v445, 7
      %v447 = vsub.s32 0, %v446
      %v448 = vrot.slane %v175, %v447
      %450 = vrot.lane.b32.xlu0 %v448, 80
      %v451 = vpop.permute.xlu0 %450
      %v453 = vadd.f32 %v436, %v451
      %v454 = vadd.f32 %v437, %v451
      %v455 = vadd.f32 %v438, %v451
      %v456 = vadd.f32 %v439, %v451
      %v457 = vadd.f32 %v440, %v451
      %v458 = vadd.f32 %v441, %v451
      %v459 = vadd.f32 %v442, %v451
      %v460 = vadd.f32 %v443, %v451
      %v461 = vmax.f32 %v453, 0.0
      %v462 = vmax.f32 %v454, 0.0
      %v463 = vmax.f32 %v455, 0.0
      %v464 = vmax.f32 %v456, 0.0
      %v465 = vmax.f32 %v457, 0.0
      %v466 = vmax.f32 %v458, 0.0
      %v467 = vmax.f32 %v459, 0.0
      %v468 = vmax.f32 %v460, 0.0
      %v469 = vpack.c.bf16 %v461, %v461
      %v470 = vpack.c.bf16 %v462, %v462
      %v471 = vpack.c.bf16 %v463, %v463
      %v472 = vpack.c.bf16 %v464, %v464
      %v473 = vpack.c.bf16 %v465, %v465
      %v474 = vpack.c.bf16 %v466, %v466
      %v475 = vpack.c.bf16 %v467, %v467
      %v476 = vpack.c.bf16 %v468, %v468
      %v477 = vrot.slane %v184, 1
      %v478 = vrot.slane %v185, 1
      %v479 = vrot.slane %v186, 1
      %v480 = vrot.slane %v187, 1
      %v481 = vrot.slane %v188, 1
      %v482 = vrot.slane %v189, 1
      %v483 = vrot.slane %v190, 1
      %v484 = vrot.slane %v191, 1
      %vm493 = vcmask 1046528
      %v494 = vsel %vm493, %v477, 0.0
      %v495 = vsel %vm493, %v478, 0.0
      %v496 = vsel %vm493, %v479, 0.0
      %v497 = vsel %vm493, %v480, 0.0
      %v498 = vsel %vm493, %v481, 0.0
      %v499 = vsel %vm493, %v482, 0.0
      %v500 = vsel %vm493, %v483, 0.0
      %v501 = vsel %vm493, %v484, 0.0
      %502 = vrot.lane.b32.xlu0 %v184, 96
      %v503 = vpop.permute.xlu0 %502
      %504 = vrot.lane.b32.xlu0 %v185, 96
      %v505 = vpop.permute.xlu0 %504
      %506 = vrot.lane.b32.xlu0 %v186, 96
      %v507 = vpop.permute.xlu0 %506
      %508 = vrot.lane.b32.xlu0 %v187, 96
      %v509 = vpop.permute.xlu0 %508
      %510 = vrot.lane.b32.xlu0 %v188, 96
      %v511 = vpop.permute.xlu0 %510
      %512 = vrot.lane.b32.xlu0 %v189, 96
      %v513 = vpop.permute.xlu0 %512
      %514 = vrot.lane.b32.xlu0 %v190, 96
      %v515 = vpop.permute.xlu0 %514
      %516 = vrot.lane.b32.xlu0 %v191, 96
      %v517 = vpop.permute.xlu0 %516
      %v526 = vadd.f32 %v494, %v503
      %v527 = vadd.f32 %v495, %v505
      %v528 = vadd.f32 %v496, %v507
      %v529 = vadd.f32 %v497, %v509
      %v530 = vadd.f32 %v498, %v511
      %v531 = vadd.f32 %v499, %v513
      %v532 = vadd.f32 %v500, %v515
      %v533 = vadd.f32 %v501, %v517
      %534 = vrot.lane.b32.xlu0 %v288, 64
      %v535 = vpop.permute.xlu0 %534
      %536 = vrot.lane.b32.xlu0 %v289, 64
      %v537 = vpop.permute.xlu0 %536
      %538 = vrot.lane.b32.xlu0 %v290, 64
      %v539 = vpop.permute.xlu0 %538
      %540 = vrot.lane.b32.xlu0 %v291, 64
      %v541 = vpop.permute.xlu0 %540
      %542 = vrot.lane.b32.xlu0 %v292, 64
      %v543 = vpop.permute.xlu0 %542
      %544 = vrot.lane.b32.xlu0 %v293, 64
      %v545 = vpop.permute.xlu0 %544
      %546 = vrot.lane.b32.xlu0 %v294, 64
      %v547 = vpop.permute.xlu0 %546
      %v548 = vrot.slane 0.0, 1
      %v549 = vrot.slane %v535, 1
      %v550 = vrot.slane %v537, 1
      %v551 = vrot.slane %v539, 1
      %v552 = vrot.slane %v541, 1
      %v553 = vrot.slane %v543, 1
      %v554 = vrot.slane %v545, 1
      %v555 = vrot.slane %v547, 1
      %v564 = vsel %vm493, %v548, 0.0
      %v565 = vsel %vm493, %v549, 0.0
      %v566 = vsel %vm493, %v550, 0.0
      %v567 = vsel %vm493, %v551, 0.0
      %v568 = vsel %vm493, %v552, 0.0
      %v569 = vsel %vm493, %v553, 0.0
      %v570 = vsel %vm493, %v554, 0.0
      %v571 = vsel %vm493, %v555, 0.0
      %580 = vrot.lane.b32.xlu0 %v564, 64
      %v581 = vpop.permute.xlu0 %580
      %582 = vrot.lane.b32.xlu0 %v565, 64
      %v583 = vpop.permute.xlu0 %582
      %584 = vrot.lane.b32.xlu0 %v566, 64
      %v585 = vpop.permute.xlu0 %584
      %586 = vrot.lane.b32.xlu0 %v567, 64
      %v587 = vpop.permute.xlu0 %586
      %588 = vrot.lane.b32.xlu0 %v568, 64
      %v589 = vpop.permute.xlu0 %588
      %590 = vrot.lane.b32.xlu0 %v569, 64
      %v591 = vpop.permute.xlu0 %590
      %592 = vrot.lane.b32.xlu0 %v570, 64
      %v593 = vpop.permute.xlu0 %592
      %594 = vrot.lane.b32.xlu0 %v571, 64
      %v595 = vpop.permute.xlu0 %594
      %v604 = vadd.f32 %v526, %v581
      %v605 = vadd.f32 %v527, %v583
      %v606 = vadd.f32 %v528, %v585
      %v607 = vadd.f32 %v529, %v587
      %v608 = vadd.f32 %v530, %v589
      %v609 = vadd.f32 %v531, %v591
      %v610 = vadd.f32 %v532, %v593
      %v611 = vadd.f32 %v533, %v595
      %612 = vrot.lane.b32.xlu0 %v288, 32
      %v613 = vpop.permute.xlu0 %612
      %614 = vrot.lane.b32.xlu0 %v289, 32
      %v615 = vpop.permute.xlu0 %614
      %616 = vrot.lane.b32.xlu0 %v290, 32
      %v617 = vpop.permute.xlu0 %616
      %618 = vrot.lane.b32.xlu0 %v291, 32
      %v619 = vpop.permute.xlu0 %618
      %620 = vrot.lane.b32.xlu0 %v292, 32
      %v621 = vpop.permute.xlu0 %620
      %622 = vrot.lane.b32.xlu0 %v293, 32
      %v623 = vpop.permute.xlu0 %622
      %624 = vrot.lane.b32.xlu0 %v294, 32
      %v625 = vpop.permute.xlu0 %624
      %626 = vrot.lane.b32.xlu0 0.0, 64
      %v627 = vpop.permute.xlu0 %626
      %628 = vrot.lane.b32.xlu0 %v613, 64
      %v629 = vpop.permute.xlu0 %628
      %630 = vrot.lane.b32.xlu0 %v615, 64
      %v631 = vpop.permute.xlu0 %630
      %632 = vrot.lane.b32.xlu0 %v617, 64
      %v633 = vpop.permute.xlu0 %632
      %634 = vrot.lane.b32.xlu0 %v619, 64
      %v635 = vpop.permute.xlu0 %634
      %636 = vrot.lane.b32.xlu0 %v621, 64
      %v637 = vpop.permute.xlu0 %636
      %638 = vrot.lane.b32.xlu0 %v623, 64
      %v639 = vpop.permute.xlu0 %638
      %640 = vrot.lane.b32.xlu0 %v625, 64
      %v641 = vpop.permute.xlu0 %640
      %v650 = vadd.f32 %v604, %v627
      %v651 = vadd.f32 %v605, %v629
      %v652 = vadd.f32 %v606, %v631
      %v653 = vadd.f32 %v607, %v633
      %v654 = vadd.f32 %v608, %v635
      %v655 = vadd.f32 %v609, %v637
      %v656 = vadd.f32 %v610, %v639
      %v657 = vadd.f32 %v611, %v641
      %658 = vrot.lane.b32.xlu0 %v431, 64
      %v659 = vpop.permute.xlu0 %658
      %v661 = vmul.f32 %v650, %v659
      %v662 = vmul.f32 %v651, %v659
      %v663 = vmul.f32 %v652, %v659
      %v664 = vmul.f32 %v653, %v659
      %v665 = vmul.f32 %v654, %v659
      %v666 = vmul.f32 %v655, %v659
      %v667 = vmul.f32 %v656, %v659
      %v668 = vmul.f32 %v657, %v659
      %669 = vrot.lane.b32.xlu0 %v448, 64
      %v670 = vpop.permute.xlu0 %669
      %v672 = vadd.f32 %v661, %v670
      %v673 = vadd.f32 %v662, %v670
      %v674 = vadd.f32 %v663, %v670
      %v675 = vadd.f32 %v664, %v670
      %v676 = vadd.f32 %v665, %v670
      %v677 = vadd.f32 %v666, %v670
      %v678 = vadd.f32 %v667, %v670
      %v679 = vadd.f32 %v668, %v670
      %v680 = vmax.f32 %v672, 0.0
      %v681 = vmax.f32 %v673, 0.0
      %v682 = vmax.f32 %v674, 0.0
      %v683 = vmax.f32 %v675, 0.0
      %v684 = vmax.f32 %v676, 0.0
      %v685 = vmax.f32 %v677, 0.0
      %v686 = vmax.f32 %v678, 0.0
      %v687 = vmax.f32 %v679, 0.0
      %v688 = vpack.c.bf16 %v680, %v680
      %v689 = vpack.c.bf16 %v681, %v681
      %v690 = vpack.c.bf16 %v682, %v682
      %v691 = vpack.c.bf16 %v683, %v683
      %v692 = vpack.c.bf16 %v684, %v684
      %v693 = vpack.c.bf16 %v685, %v685
      %v694 = vpack.c.bf16 %v686, %v686
      %v695 = vpack.c.bf16 %v687, %v687
      %704 = vrot.lane.b32.xlu0 %v469, 48
      %v705 = vpop.permute.xlu0 %704
      %706 = vrot.lane.b32.xlu0 %v470, 48
      %v707 = vpop.permute.xlu0 %706
      %708 = vrot.lane.b32.xlu0 %v471, 48
      %v709 = vpop.permute.xlu0 %708
      %710 = vrot.lane.b32.xlu0 %v472, 48
      %v711 = vpop.permute.xlu0 %710
      %712 = vrot.lane.b32.xlu0 %v473, 48
      %v713 = vpop.permute.xlu0 %712
      %714 = vrot.lane.b32.xlu0 %v474, 48
      %v715 = vpop.permute.xlu0 %714
      %716 = vrot.lane.b32.xlu0 %v475, 48
      %v717 = vpop.permute.xlu0 %716
      %718 = vrot.lane.b32.xlu0 %v476, 48
      %v719 = vpop.permute.xlu0 %718
      %728 = vrot.lane.b32.xlu0 %v688, 80
      %v729 = vpop.permute.xlu0 %728
      %730 = vrot.lane.b32.xlu0 %v689, 80
      %v731 = vpop.permute.xlu0 %730
      %732 = vrot.lane.b32.xlu0 %v690, 80
      %v733 = vpop.permute.xlu0 %732
      %734 = vrot.lane.b32.xlu0 %v691, 80
      %v735 = vpop.permute.xlu0 %734
      %736 = vrot.lane.b32.xlu0 %v692, 80
      %v737 = vpop.permute.xlu0 %736
      %738 = vrot.lane.b32.xlu0 %v693, 80
      %v739 = vpop.permute.xlu0 %738
      %740 = vrot.lane.b32.xlu0 %v694, 80
      %v741 = vpop.permute.xlu0 %740
      %742 = vrot.lane.b32.xlu0 %v695, 80
      %v743 = vpop.permute.xlu0 %742
      %vm744 = vcmask 130048
      %v747 = vsel %vm744, %v705, %v729
      %v751 = vsel %vm744, %v707, %v731
      %v755 = vsel %vm744, %v709, %v733
      %v759 = vsel %vm744, %v711, %v735
      %v763 = vsel %vm744, %v713, %v737
      %v767 = vsel %vm744, %v715, %v739
      %v771 = vsel %vm744, %v717, %v741
      %v775 = vsel %vm744, %v719, %v743
      %777 = vrot.lane.b32.xlu0 %v201, 80
      %v778 = vpop.permute.xlu0 %777
      %779 = vrot.lane.b32.xlu0 %v202, 80
      %v780 = vpop.permute.xlu0 %779
      %781 = vrot.lane.b32.xlu0 %v203, 80
      %v782 = vpop.permute.xlu0 %781
      %783 = vrot.lane.b32.xlu0 %v204, 80
      %v784 = vpop.permute.xlu0 %783
      %785 = vrot.lane.b32.xlu0 %v205, 80
      %v786 = vpop.permute.xlu0 %785
      %787 = vrot.lane.b32.xlu0 %v206, 80
      %v788 = vpop.permute.xlu0 %787
      %789 = vrot.lane.b32.xlu0 %v207, 80
      %v790 = vpop.permute.xlu0 %789
      %791 = vrot.lane.b32.xlu0 %v363, 80
      %v792 = vpop.permute.xlu0 %791
      %v801 = vsel %vm232, 0.0, %v778
      %v802 = vsel %vm232, 0.0, %v780
      %v803 = vsel %vm232, 0.0, %v782
      %v804 = vsel %vm232, 0.0, %v784
      %v805 = vsel %vm232, 0.0, %v786
      %v806 = vsel %vm232, 0.0, %v788
      %v807 = vsel %vm232, 0.0, %v790
      %v808 = vsel %vm232, 0.0, %v792
      %817 = vrot.lane.b32.xlu0 %v801, 16
      %v818 = vpop.permute.xlu0 %817
      %819 = vrot.lane.b32.xlu0 %v802, 16
      %v820 = vpop.permute.xlu0 %819
      %821 = vrot.lane.b32.xlu0 %v803, 16
      %v822 = vpop.permute.xlu0 %821
      %823 = vrot.lane.b32.xlu0 %v804, 16
      %v824 = vpop.permute.xlu0 %823
      %825 = vrot.lane.b32.xlu0 %v805, 16
      %v826 = vpop.permute.xlu0 %825
      %827 = vrot.lane.b32.xlu0 %v806, 16
      %v828 = vpop.permute.xlu0 %827
      %829 = vrot.lane.b32.xlu0 %v807, 16
      %v830 = vpop.permute.xlu0 %829
      %831 = vrot.lane.b32.xlu0 %v808, 16
      %v832 = vpop.permute.xlu0 %831
      %v841 = vadd.f32 %v185, %v818
      %v842 = vadd.f32 %v186, %v820
      %v843 = vadd.f32 %v187, %v822
      %v844 = vadd.f32 %v188, %v824
      %v845 = vadd.f32 %v189, %v826
      %v846 = vadd.f32 %v190, %v828
      %v847 = vadd.f32 %v191, %v830
      %v848 = vadd.f32 %v832, 0.0
      %v849 = vld [vmem:[%s166 + $0x3c] sm:$0xf]
      %v850 = vunpack.c.l.bf16 %v849
      %v851 = vadd.f32 %v841, %v288
      %v852 = vadd.f32 %v842, %v289
      %v853 = vadd.f32 %v843, %v290
      %v854 = vadd.f32 %v844, %v291
      %v855 = vadd.f32 %v845, %v292
      %v856 = vadd.f32 %v846, %v293
      %v857 = vadd.f32 %v847, %v294
      %v858 = vadd.f32 %v848, %v850
      %v860 = vrot.slane %v288, 7
      %v861 = vrot.slane %v289, 7
      %v862 = vrot.slane %v290, 7
      %v863 = vrot.slane %v291, 7
      %v864 = vrot.slane %v292, 7
      %v865 = vrot.slane %v293, 7
      %v866 = vrot.slane %v294, 7
      %v867 = vrot.slane %v850, 7
      %868 = vrot.lane.b32.xlu0 %v860, 80
      %v869 = vpop.permute.xlu0 %868
      %870 = vrot.lane.b32.xlu0 %v861, 80
      %v871 = vpop.permute.xlu0 %870
      %872 = vrot.lane.b32.xlu0 %v862, 80
      %v873 = vpop.permute.xlu0 %872
      %874 = vrot.lane.b32.xlu0 %v863, 80
      %v875 = vpop.permute.xlu0 %874
      %876 = vrot.lane.b32.xlu0 %v864, 80
      %v877 = vpop.permute.xlu0 %876
      %878 = vrot.lane.b32.xlu0 %v865, 80
      %v879 = vpop.permute.xlu0 %878
      %880 = vrot.lane.b32.xlu0 %v866, 80
      %v881 = vpop.permute.xlu0 %880
      %882 = vrot.lane.b32.xlu0 %v867, 80
      %v883 = vpop.permute.xlu0 %882
      %v892 = vsel %vm232, 0.0, %v869
      %v893 = vsel %vm232, 0.0, %v871
      %v894 = vsel %vm232, 0.0, %v873
      %v895 = vsel %vm232, 0.0, %v875
      %v896 = vsel %vm232, 0.0, %v877
      %v897 = vsel %vm232, 0.0, %v879
      %v898 = vsel %vm232, 0.0, %v881
      %v899 = vsel %vm232, 0.0, %v883
      %908 = vrot.lane.b32.xlu0 %v892, 16
      %v909 = vpop.permute.xlu0 %908
      %910 = vrot.lane.b32.xlu0 %v893, 16
      %v911 = vpop.permute.xlu0 %910
      %912 = vrot.lane.b32.xlu0 %v894, 16
      %v913 = vpop.permute.xlu0 %912
      %914 = vrot.lane.b32.xlu0 %v895, 16
      %v915 = vpop.permute.xlu0 %914
      %916 = vrot.lane.b32.xlu0 %v896, 16
      %v917 = vpop.permute.xlu0 %916
      %918 = vrot.lane.b32.xlu0 %v897, 16
      %v919 = vpop.permute.xlu0 %918
      %920 = vrot.lane.b32.xlu0 %v898, 16
      %v921 = vpop.permute.xlu0 %920
      %922 = vrot.lane.b32.xlu0 %v899, 16
      %v923 = vpop.permute.xlu0 %922
      %v932 = vadd.f32 %v851, %v909
      %v933 = vadd.f32 %v852, %v911
      %v934 = vadd.f32 %v853, %v913
      %v935 = vadd.f32 %v854, %v915
      %v936 = vadd.f32 %v855, %v917
      %v937 = vadd.f32 %v856, %v919
      %v938 = vadd.f32 %v857, %v921
      %v939 = vadd.f32 %v858, %v923
      %940 = vrot.lane.b32.xlu0 %v431, 16
      %v941 = vpop.permute.xlu0 %940
      %v943 = vmul.f32 %v932, %v941
      %v944 = vmul.f32 %v933, %v941
      %v945 = vmul.f32 %v934, %v941
      %v946 = vmul.f32 %v935, %v941
      %v947 = vmul.f32 %v936, %v941
      %v948 = vmul.f32 %v937, %v941
      %v949 = vmul.f32 %v938, %v941
      %v950 = vmul.f32 %v939, %v941
      %951 = vrot.lane.b32.xlu0 %v448, 16
      %v952 = vpop.permute.xlu0 %951
      %v954 = vadd.f32 %v943, %v952
      %v955 = vadd.f32 %v944, %v952
      %v956 = vadd.f32 %v945, %v952
      %v957 = vadd.f32 %v946, %v952
      %v958 = vadd.f32 %v947, %v952
      %v959 = vadd.f32 %v948, %v952
      %v960 = vadd.f32 %v949, %v952
      %v961 = vadd.f32 %v950, %v952
      %v962 = vmax.f32 %v954, 0.0
      %v963 = vmax.f32 %v955, 0.0
      %v964 = vmax.f32 %v956, 0.0
      %v965 = vmax.f32 %v957, 0.0
      %v966 = vmax.f32 %v958, 0.0
      %v967 = vmax.f32 %v959, 0.0
      %v968 = vmax.f32 %v960, 0.0
      %v969 = vmax.f32 %v961, 0.0
      %v970 = vpack.c.bf16 %v962, %v962
      %v971 = vpack.c.bf16 %v963, %v963
      %v972 = vpack.c.bf16 %v964, %v964
      %v973 = vpack.c.bf16 %v965, %v965
      %v974 = vpack.c.bf16 %v966, %v966
      %v975 = vpack.c.bf16 %v967, %v967
      %v976 = vpack.c.bf16 %v968, %v968
      %v977 = vpack.c.bf16 %v969, %v969
      %978 = vrot.lane.b32.xlu0 0.0, 96
      %v979 = vpop.permute.xlu0 %978
      %v981 = vadd.f32 %v564, %v979
      %v982 = vrot.slane %v288, 1
      %v983 = vrot.slane %v289, 1
      %v984 = vrot.slane %v290, 1
      %v985 = vrot.slane %v291, 1
      %v986 = vrot.slane %v292, 1
      %v987 = vrot.slane %v293, 1
      %v988 = vrot.slane %v294, 1
      %v989 = vrot.slane %v850, 1
      %v998 = vsel %vm493, %v982, 0.0
      %v999 = vsel %vm493, %v983, 0.0
      %v1000 = vsel %vm493, %v984, 0.0
      %v1001 = vsel %vm493, %v985, 0.0
      %v1002 = vsel %vm493, %v986, 0.0
      %v1003 = vsel %vm493, %v987, 0.0
      %v1004 = vsel %vm493, %v988, 0.0
      %v1005 = vsel %vm493, %v989, 0.0
      %v1006 = vadd.f32 %v527, %v998
      %v1007 = vadd.f32 %v528, %v999
      %v1008 = vadd.f32 %v529, %v1000
      %v1009 = vadd.f32 %v530, %v1001
      %v1010 = vadd.f32 %v531, %v1002
      %v1011 = vadd.f32 %v532, %v1003
      %v1012 = vadd.f32 %v533, %v1004
      %v1013 = vadd.f32 %v981, %v1005
      %1014 = vrot.lane.b32.xlu0 %v288, 96
      %v1015 = vpop.permute.xlu0 %1014
      %1016 = vrot.lane.b32.xlu0 %v289, 96
      %v1017 = vpop.permute.xlu0 %1016
      %1018 = vrot.lane.b32.xlu0 %v290, 96
      %v1019 = vpop.permute.xlu0 %1018
      %1020 = vrot.lane.b32.xlu0 %v291, 96
      %v1021 = vpop.permute.xlu0 %1020
      %1022 = vrot.lane.b32.xlu0 %v292, 96
      %v1023 = vpop.permute.xlu0 %1022
      %1024 = vrot.lane.b32.xlu0 %v293, 96
      %v1025 = vpop.permute.xlu0 %1024
      %1026 = vrot.lane.b32.xlu0 %v294, 96
      %v1027 = vpop.permute.xlu0 %1026
      %1028 = vrot.lane.b32.xlu0 %v850, 96
      %v1029 = vpop.permute.xlu0 %1028
      %v1038 = vadd.f32 %v1006, %v1015
      %v1039 = vadd.f32 %v1007, %v1017
      %v1040 = vadd.f32 %v1008, %v1019
      %v1041 = vadd.f32 %v1009, %v1021
      %v1042 = vadd.f32 %v1010, %v1023
      %v1043 = vadd.f32 %v1011, %v1025
      %v1044 = vadd.f32 %v1012, %v1027
      %v1045 = vadd.f32 %v1013, %v1029
      %v1046 = vmul.f32 %v1038, %v431
      %v1047 = vmul.f32 %v1039, %v431
      %v1048 = vmul.f32 %v1040, %v431
      %v1049 = vmul.f32 %v1041, %v431
      %v1050 = vmul.f32 %v1042, %v431
      %v1051 = vmul.f32 %v1043, %v431
      %v1052 = vmul.f32 %v1044, %v431
      %v1053 = vmul.f32 %v1045, %v431
      %v1054 = vadd.f32 %v1046, %v448
      %v1055 = vadd.f32 %v1047, %v448
      %v1056 = vadd.f32 %v1048, %v448
      %v1057 = vadd.f32 %v1049, %v448
      %v1058 = vadd.f32 %v1050, %v448
      %v1059 = vadd.f32 %v1051, %v448
      %v1060 = vadd.f32 %v1052, %v448
      %v1061 = vadd.f32 %v1053, %v448
      %v1062 = vmax.f32 %v1054, 0.0
      %v1063 = vmax.f32 %v1055, 0.0
      %v1064 = vmax.f32 %v1056, 0.0
      %v1065 = vmax.f32 %v1057, 0.0
      %v1066 = vmax.f32 %v1058, 0.0
      %v1067 = vmax.f32 %v1059, 0.0
      %v1068 = vmax.f32 %v1060, 0.0
      %v1069 = vmax.f32 %v1061, 0.0
      %v1070 = vpack.c.bf16 %v1062, %v1062
      %v1071 = vpack.c.bf16 %v1063, %v1063
      %v1072 = vpack.c.bf16 %v1064, %v1064
      %v1073 = vpack.c.bf16 %v1065, %v1065
      %v1074 = vpack.c.bf16 %v1066, %v1066
      %v1075 = vpack.c.bf16 %v1067, %v1067
      %v1076 = vpack.c.bf16 %v1068, %v1068
      %v1077 = vpack.c.bf16 %v1069, %v1069
      %1086 = vrot.lane.b32.xlu0 %v970, 112
      %v1087 = vpop.permute.xlu0 %1086
      %1088 = vrot.lane.b32.xlu0 %v971, 112
      %v1089 = vpop.permute.xlu0 %1088
      %1090 = vrot.lane.b32.xlu0 %v972, 112
      %v1091 = vpop.permute.xlu0 %1090
      %1092 = vrot.lane.b32.xlu0 %v973, 112
      %v1093 = vpop.permute.xlu0 %1092
      %1094 = vrot.lane.b32.xlu0 %v974, 112
      %v1095 = vpop.permute.xlu0 %1094
      %1096 = vrot.lane.b32.xlu0 %v975, 112
      %v1097 = vpop.permute.xlu0 %1096
      %1098 = vrot.lane.b32.xlu0 %v976, 112
      %v1099 = vpop.permute.xlu0 %1098
      %1100 = vrot.lane.b32.xlu0 %v977, 112
      %v1101 = vpop.permute.xlu0 %1100
      %1110 = vrot.lane.b32.xlu0 %v1070, 16
      %v1111 = vpop.permute.xlu0 %1110
      %1112 = vrot.lane.b32.xlu0 %v1071, 16
      %v1113 = vpop.permute.xlu0 %1112
      %1114 = vrot.lane.b32.xlu0 %v1072, 16
      %v1115 = vpop.permute.xlu0 %1114
      %1116 = vrot.lane.b32.xlu0 %v1073, 16
      %v1117 = vpop.permute.xlu0 %1116
      %1118 = vrot.lane.b32.xlu0 %v1074, 16
      %v1119 = vpop.permute.xlu0 %1118
      %1120 = vrot.lane.b32.xlu0 %v1075, 16
      %v1121 = vpop.permute.xlu0 %1120
      %1122 = vrot.lane.b32.xlu0 %v1076, 16
      %v1123 = vpop.permute.xlu0 %1122
      %1124 = vrot.lane.b32.xlu0 %v1077, 16
      %v1125 = vpop.permute.xlu0 %1124
      %v1128 = vsel %vm744, %v1087, %v1111
      %v1132 = vsel %vm744, %v1089, %v1113
      %v1136 = vsel %vm744, %v1091, %v1115
      %v1140 = vsel %vm744, %v1093, %v1117
      %v1144 = vsel %vm744, %v1095, %v1119
      %v1148 = vsel %vm744, %v1097, %v1121
      %v1152 = vsel %vm744, %v1099, %v1123
      %v1156 = vsel %vm744, %v1101, %v1125
      %vm1158 = vcmask 257024
      %1159 = vst.msk [vmem:[%s172] sm:$0xf] %vm1158, %v747
      %1160 = vst.msk [vmem:[%s172 + $0x4] sm:$0xf] %vm1158, %v1128
      %1161 = vst.msk [vmem:[%s172 + $0x8] sm:$0xf] %vm1158, %v751
      %1162 = vst.msk [vmem:[%s172 + $0xc] sm:$0xf] %vm1158, %v1132
      %1163 = vst.msk [vmem:[%s172 + $0x10] sm:$0xf] %vm1158, %v755
      %1164 = vst.msk [vmem:[%s172 + $0x14] sm:$0xf] %vm1158, %v1136
      %1165 = vst.msk [vmem:[%s172 + $0x18] sm:$0xf] %vm1158, %v759
      %1166 = vst.msk [vmem:[%s172 + $0x1c] sm:$0xf] %vm1158, %v1140
      %1167 = vst.msk [vmem:[%s172 + $0x20] sm:$0xf] %vm1158, %v763
      %1168 = vst.msk [vmem:[%s172 + $0x24] sm:$0xf] %vm1158, %v1144
      %1169 = vst.msk [vmem:[%s172 + $0x28] sm:$0xf] %vm1158, %v767
      %1170 = vst.msk [vmem:[%s172 + $0x2c] sm:$0xf] %vm1158, %v1148
      %1171 = vst.msk [vmem:[%s172 + $0x30] sm:$0xf] %vm1158, %v771
      %1172 = vst.msk [vmem:[%s172 + $0x34] sm:$0xf] %vm1158, %v1152
      %1173 = vst.msk [vmem:[%s172 + $0x38] sm:$0xf] %vm1158, %v775
      %1174 = vst.msk [vmem:[%s172 + $0x3c] sm:$0xf] %vm1158, %v1156
      %s1175 = smul.u32 8, %s14
      %p1176 = scmp.lt.s32.totalorder %s1175, 15
      %s1177 = scalar_select %p1176, %s1175, 15
      %s1178 = smul.addr %s1177, 2
      %s1179 = smul.addr %s1178, 4
      %s1180 = scalar_lea.vmem %s3, %s1179
      // Predicated region
      $region33: #{vit_pose_forward.30} parent=31 // pred_check
        %p1181 = pneg %p100
      $region34: #{vit_pose_forward.30} parent=31 // pred_check_branch
        %1183 = sbr.rel (%p1181) target = $region36
      $region35: #{vit_pose_forward.30} parent=31 // pred_region
        %s1184 = smul.u32 8, %s14
      $region36: #{vit_pose_forward.30} parent=31 // pred_fallthru
        _
    $region32: #{vit_pose_forward.30} parent=5 // pred_fallthru
      _
    %p1185 = scmp.le.s32.totalorder 2, %s9
    // Predicated region
    $region37: #{vit_pose_forward.30} parent=5 // pred_check
      %p1186 = pneg %p1185
    $region38: #{vit_pose_forward.30} parent=5 // pred_check_branch
      %1188 = sbr.rel (%p1186) target = $region40
    $region39: #{vit_pose_forward.30} parent=5 // pred_region
      %s1189 = ssub.s32 %s9, 2
      // Predicated region
      $region41: #{vit_pose_forward.30} parent=39 // pred_check
        %p1190 = pneg %p106
      $region42: #{vit_pose_forward.30} parent=39 // pred_check_branch
        %1192 = sbr.rel (%p1190) target = $region44
      $region43: #{vit_pose_forward.30} parent=39 // pred_region
        %s1193 = smul.u32 8, %s15
        %p1194 = scmp.lt.s32.totalorder %s1193, 15
        %s1195 = scalar_select %p1194, %s1193, 15
        %s1196 = smul.addr %s1195, 2
        %s1197 = smul.addr %s1196, 4
        %s1198 = scalar_lea.vmem %s3, %s1197
      $region44: #{vit_pose_forward.30} parent=39 // pred_fallthru
        _
    $region40: #{vit_pose_forward.30} parent=5 // pred_fallthru
      _
  $region6: #{vit_pose_forward.30} parent=0 // loop_footer
    %s13 = sadd.s32 1, %s9
  $region7: #{vit_pose_forward.30} parent=0 // loop_footer_branch
    %8 = sbr.rel target = $region3
  $region8: #{vit_pose_forward.30} parent=0 // loop_exit
    _

// kernel: vit_pose_forward.31
$region0: #{vit_pose_forward.31}
  #allocation0 [shape = 'u32[]', space=smem, size = 0x4, offset = 0x4, fixed_abs, tag = 'smem constant byte address 0x4 - core index']
  #allocation1 [shape = 'u32[144,128]{1,0:T(1,128)}', space=vmem, size = 0x12000, scoped, tag = 'internal scratch']
  %s0 = inlined_call_operand.vmem [shape: bf16[512,16], index: 0, kind: input, shape index: {}]
  %s1 = inlined_call_operand.vmem [shape: bf16[16,128], index: 1, kind: input, shape index: {}]
  %s2 = inlined_call_operand.vmem [shape: f32[1,128], index: 2, kind: input, shape index: {}]
  %s3 = inlined_call_operand.vmem [shape: f32[512,128], index: 3, kind: output, shape index: {}]
  %s4 = sld [smem:[#allocation0]]
  $region22: #{vit_pose_forward.31} parent=0
    _
  %s6 = ssub.s32 1, %s4
  %s7 = scalar_select 0, %s6, %s4
  // Predicated region
  $region2: #{vit_pose_forward.31} parent=0 // pred_check
    _
  $region3: #{vit_pose_forward.31} parent=0 // pred_check_branch
    %9 = sbr.rel (0) target = $region5
  $region4: #{vit_pose_forward.31} parent=0 // pred_region
    _
  $region5: #{vit_pose_forward.31} parent=0 // pred_fallthru
    _
  // Predicated region
  $region6: #{vit_pose_forward.31} parent=0 // pred_check
    _
  $region7: #{vit_pose_forward.31} parent=0 // pred_check_branch
    %11 = sbr.rel (0) target = $region9
  $region8: #{vit_pose_forward.31} parent=0 // pred_region
    _
  $region9: #{vit_pose_forward.31} parent=0 // pred_fallthru
    _
  // Predicated region
  $region10: #{vit_pose_forward.31} parent=0 // pred_check
    _
  $region11: #{vit_pose_forward.31} parent=0 // pred_check_branch
    %13 = sbr.rel (0) target = $region13
  $region12: #{vit_pose_forward.31} parent=0 // pred_region
    _
  $region13: #{vit_pose_forward.31} parent=0 // pred_fallthru
    _
  %v15 = vld [vmem:[%s0] sm:$0xf]
  %v16 = vld [vmem:[%s0 + $0x4] sm:$0xf]
  %v17 = vld [vmem:[%s0 + $0x8] sm:$0xf]
  %v18 = vld [vmem:[%s0 + $0xc] sm:$0xf]
  %v19 = vld [vmem:[%s0 + $0x10] sm:$0xf]
  %v20 = vld [vmem:[%s0 + $0x14] sm:$0xf]
  %v21 = vld [vmem:[%s0 + $0x18] sm:$0xf]
  %v22 = vld [vmem:[%s0 + $0x1c] sm:$0xf]
  %v23 = vld [vmem:[%s0 + $0x20] sm:$0xf]
  %v24 = vld [vmem:[%s0 + $0x24] sm:$0xf]
  %v25 = vld [vmem:[%s0 + $0x28] sm:$0xf]
  %v26 = vld [vmem:[%s0 + $0x2c] sm:$0xf]
  %v27 = vld [vmem:[%s0 + $0x30] sm:$0xf]
  %v28 = vld [vmem:[%s0 + $0x34] sm:$0xf]
  %v29 = vld [vmem:[%s0 + $0x38] sm:$0xf]
  %v30 = vld [vmem:[%s0 + $0x3c] sm:$0xf]
  %v31 = vld [vmem:[%s0 + $0x40] sm:$0xf]
  %v32 = vld [vmem:[%s0 + $0x44] sm:$0xf]
  %v33 = vld [vmem:[%s0 + $0x48] sm:$0xf]
  %v34 = vld [vmem:[%s0 + $0x4c] sm:$0xf]
  %v35 = vld [vmem:[%s0 + $0x50] sm:$0xf]
  %v36 = vld [vmem:[%s0 + $0x54] sm:$0xf]
  %v37 = vld [vmem:[%s0 + $0x58] sm:$0xf]
  %v38 = vld [vmem:[%s0 + $0x5c] sm:$0xf]
  %v39 = vld [vmem:[%s0 + $0x60] sm:$0xf]
  %v40 = vld [vmem:[%s0 + $0x64] sm:$0xf]
  %v41 = vld [vmem:[%s0 + $0x68] sm:$0xf]
  %v42 = vld [vmem:[%s0 + $0x6c] sm:$0xf]
  %v43 = vld [vmem:[%s0 + $0x70] sm:$0xf]
  %v44 = vld [vmem:[%s0 + $0x74] sm:$0xf]
  %v45 = vld [vmem:[%s0 + $0x78] sm:$0xf]
  %v46 = vld [vmem:[%s0 + $0x7c] sm:$0xf]
  %v47 = vld [vmem:[%s0 + $0x80] sm:$0xf]
  %v48 = vld [vmem:[%s0 + $0x84] sm:$0xf]
  %v49 = vld [vmem:[%s0 + $0x88] sm:$0xf]
  %v50 = vld [vmem:[%s0 + $0x8c] sm:$0xf]
  %v51 = vld [vmem:[%s0 + $0x90] sm:$0xf]
  %v52 = vld [vmem:[%s0 + $0x94] sm:$0xf]
  %v53 = vld [vmem:[%s0 + $0x98] sm:$0xf]
  %v54 = vld [vmem:[%s0 + $0x9c] sm:$0xf]
  %v55 = vld [vmem:[%s0 + $0xa0] sm:$0xf]
  %v56 = vld [vmem:[%s0 + $0xa4] sm:$0xf]
  %v57 = vld [vmem:[%s0 + $0xa8] sm:$0xf]
  %v58 = vld [vmem:[%s0 + $0xac] sm:$0xf]
  %v59 = vld [vmem:[%s0 + $0xb0] sm:$0xf]
  %v60 = vld [vmem:[%s0 + $0xb4] sm:$0xf]
  %v61 = vld [vmem:[%s0 + $0xb8] sm:$0xf]
  %v62 = vld [vmem:[%s0 + $0xbc] sm:$0xf]
  %v63 = vld [vmem:[%s0 + $0xc0] sm:$0xf]
  %v64 = vld [vmem:[%s0 + $0xc4] sm:$0xf]
  %v65 = vld [vmem:[%s0 + $0xc8] sm:$0xf]
  %v66 = vld [vmem:[%s0 + $0xcc] sm:$0xf]
  %v67 = vld [vmem:[%s0 + $0xd0] sm:$0xf]
  %v68 = vld [vmem:[%s0 + $0xd4] sm:$0xf]
  %v69 = vld [vmem:[%s0 + $0xd8] sm:$0xf]
  %v70 = vld [vmem:[%s0 + $0xdc] sm:$0xf]
  %v71 = vld [vmem:[%s0 + $0xe0] sm:$0xf]
  %v72 = vld [vmem:[%s0 + $0xe4] sm:$0xf]
  %v73 = vld [vmem:[%s0 + $0xe8] sm:$0xf]
  %v74 = vld [vmem:[%s0 + $0xec] sm:$0xf]
  %v75 = vld [vmem:[%s0 + $0xf0] sm:$0xf]
  %v76 = vld [vmem:[%s0 + $0xf4] sm:$0xf]
  %v77 = vld [vmem:[%s0 + $0xf8] sm:$0xf]
  %v78 = vld [vmem:[%s0 + $0xfc] sm:$0xf]
  %v79 = vld [vmem:[%s1] sm:$0xf]
  %v80 = vld [vmem:[%s1 + $0x4] sm:$0xf]
  %v81 = vld [vmem:[%s2] sm:$0x1]
  %v83 = vlaneseq
  %v84 = vshrl.u32 %v83, 7
  %v85 = vsub.s32 0, %v84
  %v86 = vrot.slane %v81, %v85
  %v152 = vunpack.c.l.b16 %v15
  %v153 = vunpack.c.l.b16 %v16
  %v154 = vunpack.c.l.b16 %v17
  %v155 = vunpack.c.l.b16 %v18
  %v156 = vunpack.c.l.b16 %v19
  %v157 = vunpack.c.l.b16 %v20
  %v158 = vunpack.c.l.b16 %v21
  %v159 = vunpack.c.l.b16 %v22
  %v160 = vunpack.c.l.b16 %v23
  %v161 = vunpack.c.l.b16 %v24
  %v162 = vunpack.c.l.b16 %v25
  %v163 = vunpack.c.l.b16 %v26
  %v164 = vunpack.c.l.b16 %v27
  %v165 = vunpack.c.l.b16 %v28
  %v166 = vunpack.c.l.b16 %v29
  %v167 = vunpack.c.l.b16 %v30
  %v168 = vunpack.c.l.b16 %v31
  %v169 = vunpack.c.l.b16 %v32
  %v170 = vunpack.c.l.b16 %v33
  %v171 = vunpack.c.l.b16 %v34
  %v172 = vunpack.c.l.b16 %v35
  %v173 = vunpack.c.l.b16 %v36
  %v174 = vunpack.c.l.b16 %v37
  %v175 = vunpack.c.l.b16 %v38
  %v176 = vunpack.c.l.b16 %v39
  %v177 = vunpack.c.l.b16 %v40
  %v178 = vunpack.c.l.b16 %v41
  %v179 = vunpack.c.l.b16 %v42
  %v180 = vunpack.c.l.b16 %v43
  %v181 = vunpack.c.l.b16 %v44
  %v182 = vunpack.c.l.b16 %v45
  %v183 = vunpack.c.l.b16 %v46
  %v184 = vunpack.c.l.b16 %v47
  %v185 = vunpack.c.l.b16 %v48
  %v186 = vunpack.c.l.b16 %v49
  %v187 = vunpack.c.l.b16 %v50
  %v188 = vunpack.c.l.b16 %v51
  %v189 = vunpack.c.l.b16 %v52
  %v190 = vunpack.c.l.b16 %v53
  %v191 = vunpack.c.l.b16 %v54
  %v192 = vunpack.c.l.b16 %v55
  %v193 = vunpack.c.l.b16 %v56
  %v194 = vunpack.c.l.b16 %v57
  %v195 = vunpack.c.l.b16 %v58
  %v196 = vunpack.c.l.b16 %v59
  %v197 = vunpack.c.l.b16 %v60
  %v198 = vunpack.c.l.b16 %v61
  %v199 = vunpack.c.l.b16 %v62
  %v200 = vunpack.c.l.b16 %v63
  %v201 = vunpack.c.l.b16 %v64
  %v202 = vunpack.c.l.b16 %v65
  %v203 = vunpack.c.l.b16 %v66
  %v204 = vunpack.c.l.b16 %v67
  %v205 = vunpack.c.l.b16 %v68
  %v206 = vunpack.c.l.b16 %v69
  %v207 = vunpack.c.l.b16 %v70
  %v208 = vunpack.c.l.b16 %v71
  %v209 = vunpack.c.l.b16 %v72
  %v210 = vunpack.c.l.b16 %v73
  %v211 = vunpack.c.l.b16 %v74
  %v212 = vunpack.c.l.b16 %v75
  %v213 = vunpack.c.l.b16 %v76
  %v214 = vunpack.c.l.b16 %v77
  %v215 = vunpack.c.l.b16 %v78
  %v216 = vpack.c.b16 %v153, %v152
  %v217 = vpack.c.b16 %v155, %v154
  %v218 = vpack.c.b16 %v157, %v156
  %v219 = vpack.c.b16 %v159, %v158
  %v220 = vpack.c.b16 %v161, %v160
  %v221 = vpack.c.b16 %v163, %v162
  %v222 = vpack.c.b16 %v165, %v164
  %v223 = vpack.c.b16 %v167, %v166
  %v224 = vpack.c.b16 %v169, %v168
  %v225 = vpack.c.b16 %v171, %v170
  %v226 = vpack.c.b16 %v173, %v172
  %v227 = vpack.c.b16 %v175, %v174
  %v228 = vpack.c.b16 %v177, %v176
  %v229 = vpack.c.b16 %v179, %v178
  %v230 = vpack.c.b16 %v181, %v180
  %v231 = vpack.c.b16 %v183, %v182
  %v232 = vpack.c.b16 %v185, %v184
  %v233 = vpack.c.b16 %v187, %v186
  %v234 = vpack.c.b16 %v189, %v188
  %v235 = vpack.c.b16 %v191, %v190
  %v236 = vpack.c.b16 %v193, %v192
  %v237 = vpack.c.b16 %v195, %v194
  %v238 = vpack.c.b16 %v197, %v196
  %v239 = vpack.c.b16 %v199, %v198
  %v240 = vpack.c.b16 %v201, %v200
  %v241 = vpack.c.b16 %v203, %v202
  %v242 = vpack.c.b16 %v205, %v204
  %v243 = vpack.c.b16 %v207, %v206
  %v244 = vpack.c.b16 %v209, %v208
  %v245 = vpack.c.b16 %v211, %v210
  %v246 = vpack.c.b16 %v213, %v212
  %v247 = vpack.c.b16 %v215, %v214
  %v250 = vunpack.c.l.b16 %v79
  %v251 = vunpack.c.l.b16 %v80
  %v252 = vpack.c.b16 %v251, %v250
  %vm254 = vcmask 130048
  %v256 = vsel %vm254, %v216, 0
  %v259 = vsel %vm254, %v217, 0
  %v262 = vsel %vm254, %v218, 0
  %v265 = vsel %vm254, %v219, 0
  %v268 = vsel %vm254, %v220, 0
  %v271 = vsel %vm254, %v221, 0
  %v274 = vsel %vm254, %v222, 0
  %v277 = vsel %vm254, %v223, 0
  %v280 = vsel %vm254, %v224, 0
  %v283 = vsel %vm254, %v225, 0
  %v286 = vsel %vm254, %v226, 0
  %v289 = vsel %vm254, %v227, 0
  %v292 = vsel %vm254, %v228, 0
  %v295 = vsel %vm254, %v229, 0
  %v298 = vsel %vm254, %v230, 0
  %v301 = vsel %vm254, %v231, 0
  %v304 = vsel %vm254, %v232, 0
  %v307 = vsel %vm254, %v233, 0
  %v310 = vsel %vm254, %v234, 0
  %v313 = vsel %vm254, %v235, 0
  %v316 = vsel %vm254, %v236, 0
  %v319 = vsel %vm254, %v237, 0
  %v322 = vsel %vm254, %v238, 0
  %v325 = vsel %vm254, %v239, 0
  %v328 = vsel %vm254, %v240, 0
  %v331 = vsel %vm254, %v241, 0
  %v334 = vsel %vm254, %v242, 0
  %v337 = vsel %vm254, %v243, 0
  %v340 = vsel %vm254, %v244, 0
  %v343 = vsel %vm254, %v245, 0
  %v346 = vsel %vm254, %v246, 0
  %v349 = vsel %vm254, %v247, 0
  %351 = vmatprep.subr.bf16.mxu0 0
  %352 = vmatpush1.bf16.msra.mxu0 %v252
  %353 = vmatprep.subr.bf16.mxu0 0
  %354 = vmatpush1.bf16.msra.mxu0 0
  %355 = vmatprep.subr.bf16.mxu0 0
  %356 = vmatpush1.bf16.msra.mxu0 0
  %357 = vmatprep.subr.bf16.mxu0 0
  %358 = vmatpush1.bf16.msra.mxu0 0
  %359 = vmatprep.subr.bf16.mxu0 0
  %360 = vmatpush1.bf16.msra.mxu0 0
  %361 = vmatprep.subr.bf16.mxu0 0
  %362 = vmatpush1.bf16.msra.mxu0 0
  %363 = vmatprep.subr.bf16.mxu0 0
  %364 = vmatpush1.bf16.msra.mxu0 0
  %365 = vmatprep.subr.bf16.mxu0 0
  %366 = vmatpush1.bf16.msra.mxu0 0
  %367 = vmatprep.subr.bf16.mxu0 0
  %368 = vmatpush1.bf16.msra.mxu0 0
  %369 = vmatprep.subr.bf16.mxu0 0
  %370 = vmatpush1.bf16.msra.mxu0 0
  %371 = vmatprep.subr.bf16.mxu0 0
  %372 = vmatpush1.bf16.msra.mxu0 0
  %373 = vmatprep.subr.bf16.mxu0 0
  %374 = vmatpush1.bf16.msra.mxu0 0
  %375 = vmatprep.subr.bf16.mxu0 0
  %376 = vmatpush1.bf16.msra.mxu0 0
  %377 = vmatprep.subr.bf16.mxu0 0
  %378 = vmatpush1.bf16.msra.mxu0 0
  %379 = vmatprep.subr.bf16.mxu0 0
  %380 = vmatpush1.bf16.msra.mxu0 0
  %381 = vmatprep.subr.bf16.mxu0 0
  %382 = vmatpush1.bf16.msra.mxu0 0
  %383 = vmatprep.mubr.bf16.mxu0 0
  %384 = vmatmul.mubr.bf16.gmra.mrb[0].mxu0 %v256
  %v385 = vpop.f32.mrb[0].mxu0
  %v386 = vadd.f32 %v86, %v385
  %v387 = vpop.f32.mrb[0].mxu0
  %v388 = vpop.f32.mrb[0].mxu0
  %v389 = vadd.f32 %v86, %v388
  %v390 = vpop.f32.mrb[0].mxu0
  %391 = vmatprep.mubr.bf16.mxu0 0
  %392 = vmatmul.mubr.bf16.gmra.mrb[0].mxu0 %v259
  %v393 = vpop.f32.mrb[0].mxu0
  %v394 = vadd.f32 %v86, %v393
  %v395 = vpop.f32.mrb[0].mxu0
  %v396 = vpop.f32.mrb[0].mxu0
  %v397 = vadd.f32 %v86, %v396
  %v398 = vpop.f32.mrb[0].mxu0
  %399 = vmatprep.mubr.bf16.mxu0 0
  %400 = vmatmul.mubr.bf16.gmra.mrb[0].mxu0 %v262
  %v401 = vpop.f32.mrb[0].mxu0
  %v402 = vadd.f32 %v86, %v401
  %v403 = vpop.f32.mrb[0].mxu0
  %v404 = vpop.f32.mrb[0].mxu0
  %v405 = vadd.f32 %v86, %v404
  %v406 = vpop.f32.mrb[0].mxu0
  %407 = vmatprep.mubr.bf16.mxu0 0
  %408 = vmatmul.mubr.bf16.gmra.mrb[0].mxu0 %v265
  %v409 = vpop.f32.mrb[0].mxu0
  %v410 = vadd.f32 %v86, %v409
  %v411 = vpop.f32.mrb[0].mxu0
  %v412 = vpop.f32.mrb[0].mxu0
  %v413 = vadd.f32 %v86, %v412
  %v414 = vpop.f32.mrb[0].mxu0
  %415 = vmatprep.mubr.bf16.mxu0 0
  %416 = vmatmul.mubr.bf16.gmra.mrb[0].mxu0 %v268
  %v417 = vpop.f32.mrb[0].mxu0
  %v418 = vadd.f32 %v86, %v417
  %v419 = vpop.f32.mrb[0].mxu0
  %v420 = vpop.f32.mrb[0].mxu0
  %v421 = vadd.f32 %v86, %v420
  %v422 = vpop.f32.mrb[0].mxu0
  %423 = vmatprep.mubr.bf16.mxu0 0
  %424 = vmatmul.mubr.bf16.gmra.mrb[0].mxu0 %v271
  %v425 = vpop.f32.mrb[0].mxu0
  %v426 = vadd.f32 %v86, %v425
  %v427 = vpop.f32.mrb[0].mxu0
  %v428 = vpop.f32.mrb[0].mxu0
  %v429 = vadd.f32 %v86, %v428
  %v430 = vpop.f32.mrb[0].mxu0
  %431 = vmatprep.mubr.bf16.mxu0 0
  %432 = vmatmul.mubr.bf16.gmra.mrb[0].mxu0 %v274
  %v433 = vpop.f32.mrb[0].mxu0
  %v434 = vadd.f32 %v86, %v433
  %v435 = vpop.f32.mrb[0].mxu0
  %v436 = vpop.f32.mrb[0].mxu0
  %v437 = vadd.f32 %v86, %v436
  %v438 = vpop.f32.mrb[0].mxu0
  %439 = vmatprep.mubr.bf16.mxu0 0
  %440 = vmatmul.mubr.bf16.gmra.mrb[0].mxu0 %v277
  %v441 = vpop.f32.mrb[0].mxu0
  %v442 = vadd.f32 %v86, %v441
  %v443 = vpop.f32.mrb[0].mxu0
  %v444 = vpop.f32.mrb[0].mxu0
  %v445 = vadd.f32 %v86, %v444
  %v446 = vpop.f32.mrb[0].mxu0
  %447 = vmatprep.mubr.bf16.mxu0 0
  %448 = vmatmul.mubr.bf16.gmra.mrb[0].mxu0 %v280
  %v449 = vpop.f32.mrb[0].mxu0
  %v450 = vadd.f32 %v86, %v449
  %v451 = vpop.f32.mrb[0].mxu0
  %v452 = vpop.f32.mrb[0].mxu0
  %v453 = vadd.f32 %v86, %v452
  %v454 = vpop.f32.mrb[0].mxu0
  %455 = vmatprep.mubr.bf16.mxu0 0
  %456 = vmatmul.mubr.bf16.gmra.mrb[0].mxu0 %v283
  %v457 = vpop.f32.mrb[0].mxu0
  %v458 = vadd.f32 %v86, %v457
  %v459 = vpop.f32.mrb[0].mxu0
  %v460 = vpop.f32.mrb[0].mxu0
  %v461 = vadd.f32 %v86, %v460
  %v462 = vpop.f32.mrb[0].mxu0
  %463 = vmatprep.mubr.bf16.mxu0 0
  %464 = vmatmul.mubr.bf16.gmra.mrb[0].mxu0 %v286
  %v465 = vpop.f32.mrb[0].mxu0
  %v466 = vadd.f32 %v86, %v465
  %v467 = vpop.f32.mrb[0].mxu0
  %v468 = vpop.f32.mrb[0].mxu0
  %v469 = vadd.f32 %v86, %v468
  %v470 = vpop.f32.mrb[0].mxu0
  %471 = vmatprep.mubr.bf16.mxu0 0
  %472 = vmatmul.mubr.bf16.gmra.mrb[0].mxu0 %v289
  %v473 = vpop.f32.mrb[0].mxu0
  %v474 = vadd.f32 %v86, %v473
  %v475 = vpop.f32.mrb[0].mxu0
  %v476 = vpop.f32.mrb[0].mxu0
  %v477 = vadd.f32 %v86, %v476
  %v478 = vpop.f32.mrb[0].mxu0
  %479 = vmatprep.mubr.bf16.mxu0 0
  %480 = vmatmul.mubr.bf16.gmra.mrb[0].mxu0 %v292
  %v481 = vpop.f32.mrb[0].mxu0
  %v482 = vadd.f32 %v86, %v481
  %v483 = vpop.f32.mrb[0].mxu0
  %v484 = vpop.f32.mrb[0].mxu0
  %v485 = vadd.f32 %v86, %v484
  %v486 = vpop.f32.mrb[0].mxu0
  %487 = vmatprep.mubr.bf16.mxu0 0
  %488 = vmatmul.mubr.bf16.gmra.mrb[0].mxu0 %v295
  %v489 = vpop.f32.mrb[0].mxu0
  %v490 = vadd.f32 %v86, %v489
  %v491 = vpop.f32.mrb[0].mxu0
  %v492 = vpop.f32.mrb[0].mxu0
  %v493 = vadd.f32 %v86, %v492
  %v494 = vpop.f32.mrb[0].mxu0
  %495 = vmatprep.mubr.bf16.mxu0 0
  %496 = vmatmul.mubr.bf16.gmra.mrb[0].mxu0 %v298
  %v497 = vpop.f32.mrb[0].mxu0
  %v498 = vadd.f32 %v86, %v497
  %v499 = vpop.f32.mrb[0].mxu0
  %v500 = vpop.f32.mrb[0].mxu0
  %v501 = vadd.f32 %v86, %v500
  %v502 = vpop.f32.mrb[0].mxu0
  %503 = vmatprep.mubr.bf16.mxu0 0
  %504 = vmatmul.mubr.bf16.gmra.mrb[0].mxu0 %v301
  %v505 = vpop.f32.mrb[0].mxu0
  %v506 = vadd.f32 %v86, %v505
  %v507 = vpop.f32.mrb[0].mxu0
  %v508 = vpop.f32.mrb[0].mxu0
  %v509 = vadd.f32 %v86, %v508
  %v510 = vpop.f32.mrb[0].mxu0
  %511 = vmatprep.mubr.bf16.mxu0 0
  %512 = vmatmul.mubr.bf16.gmra.mrb[0].mxu0 %v304
  %v513 = vpop.f32.mrb[0].mxu0
  %v514 = vadd.f32 %v86, %v513
  %v515 = vpop.f32.mrb[0].mxu0
  %v516 = vpop.f32.mrb[0].mxu0
  %v517 = vadd.f32 %v86, %v516
  %v518 = vpop.f32.mrb[0].mxu0
  %519 = vmatprep.mubr.bf16.mxu0 0
  %520 = vmatmul.mubr.bf16.gmra.mrb[0].mxu0 %v307
  %v521 = vpop.f32.mrb[0].mxu0
  %v522 = vadd.f32 %v86, %v521
  %v523 = vpop.f32.mrb[0].mxu0
  %v524 = vpop.f32.mrb[0].mxu0
  %v525 = vadd.f32 %v86, %v524
  %v526 = vpop.f32.mrb[0].mxu0
  %527 = vmatprep.mubr.bf16.mxu0 0
  %528 = vmatmul.mubr.bf16.gmra.mrb[0].mxu0 %v310
  %v529 = vpop.f32.mrb[0].mxu0
  %v530 = vadd.f32 %v86, %v529
  %v531 = vpop.f32.mrb[0].mxu0
  %v532 = vpop.f32.mrb[0].mxu0
  %v533 = vadd.f32 %v86, %v532
  %v534 = vpop.f32.mrb[0].mxu0
  %535 = vmatprep.mubr.bf16.mxu0 0
  %536 = vmatmul.mubr.bf16.gmra.mrb[0].mxu0 %v313
  %v537 = vpop.f32.mrb[0].mxu0
  %v538 = vadd.f32 %v86, %v537
  %v539 = vpop.f32.mrb[0].mxu0
  %v540 = vpop.f32.mrb[0].mxu0
  %v541 = vadd.f32 %v86, %v540
  %v542 = vpop.f32.mrb[0].mxu0
  %543 = vmatprep.mubr.bf16.mxu0 0
  %544 = vmatmul.mubr.bf16.gmra.mrb[0].mxu0 %v316
  %v545 = vpop.f32.mrb[0].mxu0
  %v546 = vadd.f32 %v86, %v545
  %v547 = vpop.f32.mrb[0].mxu0
  %v548 = vpop.f32.mrb[0].mxu0
  %v549 = vadd.f32 %v86, %v548
  %v550 = vpop.f32.mrb[0].mxu0
  %551 = vmatprep.mubr.bf16.mxu0 0
  %552 = vmatmul.mubr.bf16.gmra.mrb[0].mxu0 %v319
  %v553 = vpop.f32.mrb[0].mxu0
  %v554 = vadd.f32 %v86, %v553
  %v555 = vpop.f32.mrb[0].mxu0
  %v556 = vpop.f32.mrb[0].mxu0
  %v557 = vadd.f32 %v86, %v556
  %v558 = vpop.f32.mrb[0].mxu0
  %559 = vmatprep.mubr.bf16.mxu0 0
  %560 = vmatmul.mubr.bf16.gmra.mrb[0].mxu0 %v322
  %v561 = vpop.f32.mrb[0].mxu0
  %v562 = vadd.f32 %v86, %v561
  %v563 = vpop.f32.mrb[0].mxu0
  %v564 = vpop.f32.mrb[0].mxu0
  %v565 = vadd.f32 %v86, %v564
  %v566 = vpop.f32.mrb[0].mxu0
  %567 = vmatprep.mubr.bf16.mxu0 0
  %568 = vmatmul.mubr.bf16.gmra.mrb[0].mxu0 %v325
  %v569 = vpop.f32.mrb[0].mxu0
  %v570 = vadd.f32 %v86, %v569
  %v571 = vpop.f32.mrb[0].mxu0
  %v572 = vpop.f32.mrb[0].mxu0
  %v573 = vadd.f32 %v86, %v572
  %v574 = vpop.f32.mrb[0].mxu0
  %575 = vmatprep.mubr.bf16.mxu0 0
  %576 = vmatmul.mubr.bf16.gmra.mrb[0].mxu0 %v328
  %v577 = vpop.f32.mrb[0].mxu0
  %v578 = vadd.f32 %v86, %v577
  %v579 = vpop.f32.mrb[0].mxu0
  %v580 = vpop.f32.mrb[0].mxu0
  %v581 = vadd.f32 %v86, %v580
  %v582 = vpop.f32.mrb[0].mxu0
  %583 = vmatprep.mubr.bf16.mxu0 0
  %584 = vmatmul.mubr.bf16.gmra.mrb[0].mxu0 %v331
  %v585 = vpop.f32.mrb[0].mxu0
  %v586 = vadd.f32 %v86, %v585
  %v587 = vpop.f32.mrb[0].mxu0
  %v588 = vpop.f32.mrb[0].mxu0
  %v589 = vadd.f32 %v86, %v588
  %v590 = vpop.f32.mrb[0].mxu0
  %591 = vmatprep.mubr.bf16.mxu0 0
  %592 = vmatmul.mubr.bf16.gmra.mrb[0].mxu0 %v334
  %v593 = vpop.f32.mrb[0].mxu0
  %v594 = vadd.f32 %v86, %v593
  %v595 = vpop.f32.mrb[0].mxu0
  %v596 = vpop.f32.mrb[0].mxu0
  %v597 = vadd.f32 %v86, %v596
  %v598 = vpop.f32.mrb[0].mxu0
  %599 = vmatprep.mubr.bf16.mxu0 0
  %600 = vmatmul.mubr.bf16.gmra.mrb[0].mxu0 %v337
  %v601 = vpop.f32.mrb[0].mxu0
  %v602 = vadd.f32 %v86, %v601
  %v603 = vpop.f32.mrb[0].mxu0
  %v604 = vpop.f32.mrb[0].mxu0
  %v605 = vadd.f32 %v86, %v604
  %v606 = vpop.f32.mrb[0].mxu0
  %607 = vmatprep.mubr.bf16.mxu0 0
  %608 = vmatmul.mubr.bf16.gmra.mrb[0].mxu0 %v340
  %v609 = vpop.f32.mrb[0].mxu0
  %v610 = vadd.f32 %v86, %v609
  %v611 = vpop.f32.mrb[0].mxu0
  %v612 = vpop.f32.mrb[0].mxu0
  %v613 = vadd.f32 %v86, %v612
  %v614 = vpop.f32.mrb[0].mxu0
  %615 = vmatprep.mubr.bf16.mxu0 0
  %616 = vmatmul.mubr.bf16.gmra.mrb[0].mxu0 %v343
  %v617 = vpop.f32.mrb[0].mxu0
  %v618 = vadd.f32 %v86, %v617
  %v619 = vpop.f32.mrb[0].mxu0
  %v620 = vpop.f32.mrb[0].mxu0
  %v621 = vadd.f32 %v86, %v620
  %v622 = vpop.f32.mrb[0].mxu0
  %623 = vmatprep.mubr.bf16.mxu0 0
  %624 = vmatmul.mubr.bf16.gmra.mrb[0].mxu0 %v346
  %v625 = vpop.f32.mrb[0].mxu0
  %v626 = vadd.f32 %v86, %v625
  %v627 = vpop.f32.mrb[0].mxu0
  %v628 = vpop.f32.mrb[0].mxu0
  %v629 = vadd.f32 %v86, %v628
  %v630 = vpop.f32.mrb[0].mxu0
  %631 = vmatprep.mubr.bf16.mxu0 0
  %632 = vmatmul.mubr.bf16.gmra.mrb[0].mxu0 %v349
  %v633 = vpop.f32.mrb[0].mxu0
  %v634 = vadd.f32 %v86, %v633
  %v635 = vpop.f32.mrb[0].mxu0
  %v636 = vpop.f32.mrb[0].mxu0
  %v637 = vadd.f32 %v86, %v636
  %v638 = vpop.f32.mrb[0].mxu0
  %639 = vdwg.mxu0
  %640 = vst [vmem:[%s3] sm:$0xff] %v386
  %641 = vst [vmem:[%s3 + $0x8] sm:$0xff] %v389
  %642 = vst [vmem:[%s3 + $0x10] sm:$0xff] %v394
  %643 = vst [vmem:[%s3 + $0x18] sm:$0xff] %v397
  %644 = vst [vmem:[%s3 + $0x20] sm:$0xff] %v402
  %645 = vst [vmem:[%s3 + $0x28] sm:$0xff] %v405
  %646 = vst [vmem:[%s3 + $0x30] sm:$0xff] %v410
  %647 = vst [vmem:[%s3 + $0x38] sm:$0xff] %v413
  %648 = vst [vmem:[%s3 + $0x40] sm:$0xff] %v418
  %649 = vst [vmem:[%s3 + $0x48] sm:$0xff] %v421
  %650 = vst [vmem:[%s3 + $0x50] sm:$0xff] %v426
  %651 = vst [vmem:[%s3 + $0x58] sm:$0xff] %v429
  %652 = vst [vmem:[%s3 + $0x60] sm:$0xff] %v434
  %653 = vst [vmem:[%s3 + $0x68] sm:$0xff] %v437
  %654 = vst [vmem:[%s3 + $0x70] sm:$0xff] %v442
  %655 = vst [vmem:[%s3 + $0x78] sm:$0xff] %v445
  %656 = vst [vmem:[%s3 + $0x80] sm:$0xff] %v450
  %657 = vst [vmem:[%s3 + $0x88] sm:$0xff] %v453
  %658 = vst [vmem:[%s3 + $0x90] sm:$0xff] %v458
  %659 = vst [vmem:[%s3 + $0x98] sm:$0xff] %v461
  %660 = vst [vmem:[%s3 + $0xa0] sm:$0xff] %v466
  %661 = vst [vmem:[%s3 + $0xa8] sm:$0xff] %v469
  %662 = vst [vmem:[%s3 + $0xb0] sm:$0xff] %v474
  %663 = vst [vmem:[%s3 + $0xb8] sm:$0xff] %v477
  %664 = vst [vmem:[%s3 + $0xc0] sm:$0xff] %v482
  %665 = vst [vmem:[%s3 + $0xc8] sm:$0xff] %v485
  %666 = vst [vmem:[%s3 + $0xd0] sm:$0xff] %v490
  %667 = vst [vmem:[%s3 + $0xd8] sm:$0xff] %v493
  %668 = vst [vmem:[%s3 + $0xe0] sm:$0xff] %v498
  %669 = vst [vmem:[%s3 + $0xe8] sm:$0xff] %v501
  %670 = vst [vmem:[%s3 + $0xf0] sm:$0xff] %v506
  %671 = vst [vmem:[%s3 + $0xf8] sm:$0xff] %v509
  %672 = vst [vmem:[%s3 + $0x100] sm:$0xff] %v514
  %673 = vst [vmem:[%s3 + $0x108] sm:$0xff] %v517
  %674 = vst [vmem:[%s3 + $0x110] sm:$0xff] %v522
  %675 = vst [vmem:[%s3 + $0x118] sm:$0xff] %v525
  %676 = vst [vmem:[%s3 + $0x120] sm:$0xff] %v530
  %677 = vst [vmem:[%s3 + $0x128] sm:$0xff] %v533
  %678 = vst [vmem:[%s3 + $0x130] sm:$0xff] %v538
  %679 = vst [vmem:[%s3 + $0x138] sm:$0xff] %v541
  %680 = vst [vmem:[%s3 + $0x140] sm:$0xff] %v546
  %681 = vst [vmem:[%s3 + $0x148] sm:$0xff] %v549
  %682 = vst [vmem:[%s3 + $0x150] sm:$0xff] %v554
  %683 = vst [vmem:[%s3 + $0x158] sm:$0xff] %v557
  %684 = vst [vmem:[%s3 + $0x160] sm:$0xff] %v562
  %685 = vst [vmem:[%s3 + $0x168] sm:$0xff] %v565
  %686 = vst [vmem:[%s3 + $0x170] sm:$0xff] %v570
  %687 = vst [vmem:[%s3 + $0x178] sm:$0xff] %v573
  %688 = vst [vmem:[%s3 + $0x180] sm:$0xff] %v578
  %689 = vst [vmem:[%s3 + $0x188] sm:$0xff] %v581
  %690 = vst [vmem:[%s3 + $0x190] sm:$0xff] %v586
  %691 = vst [vmem:[%s3 + $0x198] sm:$0xff] %v589
  %692 = vst [vmem:[%s3 + $0x1a0] sm:$0xff] %v594
  %693 = vst [vmem:[%s3 + $0x1a8] sm:$0xff] %v597
  %694 = vst [vmem:[%s3 + $0x1b0] sm:$0xff] %v602
  %695 = vst [vmem:[%s3 + $0x1b8] sm:$0xff] %v605
  %696 = vst [vmem:[%s3 + $0x1c0] sm:$0xff] %v610
  %697 = vst [vmem:[%s3 + $0x1c8] sm:$0xff] %v613
  %698 = vst [vmem:[%s3 + $0x1d0] sm:$0xff] %v618
  %699 = vst [vmem:[%s3 + $0x1d8] sm:$0xff] %v621
  %700 = vst [vmem:[%s3 + $0x1e0] sm:$0xff] %v626
  %701 = vst [vmem:[%s3 + $0x1e8] sm:$0xff] %v629
  %702 = vst [vmem:[%s3 + $0x1f0] sm:$0xff] %v634
  %703 = vst [vmem:[%s3 + $0x1f8] sm:$0xff] %v637
  // Predicated region
  $region14: #{vit_pose_forward.31} parent=0 // pred_check
    _
  $region15: #{vit_pose_forward.31} parent=0 // pred_check_branch
    %705 = sbr.rel (0) target = $region17
  $region16: #{vit_pose_forward.31} parent=0 // pred_region
    _
  $region17: #{vit_pose_forward.31} parent=0 // pred_fallthru
    _
  // Predicated region
  $region18: #{vit_pose_forward.31} parent=0 // pred_check
    _
  $region19: #{vit_pose_forward.31} parent=0 // pred_check_branch
    %707 = sbr.rel (0) target = $region21
  $region20: #{vit_pose_forward.31} parent=0 // pred_region
    _
  $region21: #{vit_pose_forward.31} parent=0 // pred_fallthru
    _

</llo_original>
